<compile_context>
chip_gen: v6e
topology: v6e:2x2x1
jax: 0.10.0
libtpu: 0.0.40
codegen_flags: <defaults>
</compile_context>

<pallas_src>
import jax
import jax.numpy as jnp
from jax.experimental import pallas as pl
from jax.experimental.pallas import tpu as pltpu


def _conv3x3_group_kernel(x_ref, w_ref, o_ref):
    """3x3 same-conv (no bias) for one image and one PixelShuffle group.

    x_ref: (1, Cin, H, W)    input image (VMEM), NCHW block
    w_ref: (Cout*Cin*9,)     flat OIHW conv weights (SMEM, resident scalars)
    o_ref: (1, 4, H, W)      conv output channels [4*g, 4*g+4) of this image
    """
    _, cin, h, w = x_ref.shape
    grp = pl.program_id(1)          # which group of 4 conv output channels

    x = x_ref[0].astype(jnp.float32)                       # (Cin, H, W)

    # Build the zero halo in VMEM (no padded HBM copy).
    #  - lane (W) direction: 1-column zero borders.
    #  - sublane (H) direction: 8-row zero borders so every concat piece is
    #    sublane-aligned; the image then lives at rows [8, 8+H) and cols [1, 1+W).
    zc = jnp.zeros((cin, h, 1), jnp.float32)
    xp = jnp.concatenate([zc, x, zc], axis=2)              # (Cin, H, W+2)
    zr = jnp.zeros((cin, 8, w + 2), jnp.float32)
    xp = jnp.concatenate([zr, xp, zr], axis=1)             # (Cin, H+16, W+2)

    # VPU broadcast-scalar FMA conv: acc[r] += w[oc,ic,ky,kx] * shifted slab.
    accs = [jnp.zeros((h, w), jnp.float32) for _ in range(4)]
    for ic in range(cin):
        for ky in range(3):
            for kx in range(3):
                # tap (ky, kx): image-relative rows (ky-1 .. ky-2+H) sit at
                # buffer rows (7+ky ..), cols (kx-1 ..) at buffer cols (kx ..).
                slab = xp[ic, 7 + ky:7 + ky + h, kx:kx + w]        # (H, W)
                for r in range(4):
                    oc = grp * 4 + r
                    wv = w_ref[(oc * cin + ic) * 9 + ky * 3 + kx]  # SMEM scalar
                    accs[r] = accs[r] + wv * slab

    for r in range(4):
        o_ref[0, r] = accs[r].astype(o_ref.dtype)


def upsample_forward(x_nchw, weight_oihw):
    """Matches Upsample.forward.

    x_nchw:      (N, n_feat, H, W)       NCHW, like PyTorch.
    weight_oihw: (2*n_feat, n_feat, 3, 3) PyTorch Conv2d weight layout.
    Returns      (N, n_feat // 2, 2H, 2W).
    """
    _, _, h, w = x_nchw.shape
    # F.pad(x, [0,0,1,0]) pads h on top; F.pad(x, [1,0,0,0]) pads w on left.
    if h % 2 != 0:
        x_nchw = jnp.pad(x_nchw, ((0, 0), (0, 0), (1, 0), (0, 0)))
    if w % 2 != 0:
        x_nchw = jnp.pad(x_nchw, ((0, 0), (0, 0), (0, 0), (1, 0)))

    N, Cin, H, W = x_nchw.shape
    Cout = weight_oihw.shape[0]
    assert Cout % 4 == 0, "PixelShuffle(2) requires Cout % 4 == 0"
    n_groups = Cout // 4

    # Flat OIHW weight table -> SMEM (one DMA, stays resident across the grid).
    w_flat = weight_oihw.astype(jnp.float32).reshape(-1)

    conv = pl.pallas_call(
        _conv3x3_group_kernel,
        out_shape=jax.ShapeDtypeStruct((N, Cout, H, W), x_nchw.dtype),
        grid=(N, n_groups),
        in_specs=[
            pl.BlockSpec((1, Cin, H, W), lambda b, g: (b, 0, 0, 0)),
            pl.BlockSpec(memory_space=pltpu.MemorySpace.SMEM),
        ],
        out_specs=pl.BlockSpec((1, 4, H, W), lambda b, g: (b, g, 0, 0)),
        compiler_params=pltpu.CompilerParams(
            dimension_semantics=("parallel", "parallel")),
    )(x_nchw, w_flat)

    # PixelShuffle(2): single transpose pass; both reshapes are free
    # (adjacent-dimension merges/splits in row-major layout).
    r = 2
    C = Cout // (r * r)
    y = conv.reshape(N, C, r, r, H, W)
    y = jnp.transpose(y, (0, 1, 4, 2, 5, 3))      # (N, C, H, r, W, r)
    return y.reshape(N, C, H * r, W * r)


if __name__ == "__main__":
    key = jax.random.PRNGKey(0)
    k_x, k_w = jax.random.split(key)

    n_feat = 4
    batch, H, W = 2, 16, 16

    x = jax.random.normal(k_x, (batch, n_feat, H, W), dtype=jnp.float32)
    # Deterministic synthetic Conv2d weight (PyTorch OIHW layout).
    fan_in = n_feat * 3 * 3
    bound = 1.0 / (fan_in ** 0.5)
    weight = jax.random.uniform(k_w, (2 * n_feat, n_feat, 3, 3),
                                dtype=jnp.float32, minval=-bound, maxval=bound)

    out = jax.jit(upsample_forward)(x, weight)
    out = jax.block_until_ready(out)
    assert out.shape == (batch, n_feat // 2, 2 * H, 2 * W), out.shape

    # Cross-check conv + pixel-shuffle against XLA's reference implementation.
    ref_conv = jax.lax.conv_general_dilated(
        x, weight, window_strides=(1, 1), padding="SAME",
        dimension_numbers=("NCHW", "OIHW", "NCHW"))
    r = 2
    C = (2 * n_feat) // (r * r)
    ref = ref_conv.reshape(batch, C, r, r, H, W)
    ref = jnp.transpose(ref, (0, 1, 4, 2, 5, 3)).reshape(batch, C, H * r, W * r)
    assert jnp.allclose(out, ref, atol=1e-4, rtol=1e-4)

    print("KERNEL_OK")
</pallas_src>

<mosaic_0001>
module attributes {stable_mosaic.version = 11 : i64} {
  func.func @_conv3x3_group_kernel(%arg0: i32, %arg1: i32, %arg2: memref<1x4x16x16xf32, #tpu.memory_space<vmem>>, %arg3: memref<288xf32, #tpu.memory_space<smem>>, %arg4: memref<1x4x16x16xf32, #tpu.memory_space<vmem>>) attributes {dimension_semantics = [#tpu.dimension_semantics<parallel>, #tpu.dimension_semantics<parallel>], iteration_bounds = array<i64: 2, 2>, scalar_prefetch = 0 : i64, scratch_operands = 0 : i64, tpu.core_type = #tpu.core_type<tc>, window_params = [{transform_indices = @transform_0, window_bounds = array<i64: 1, 4, 16, 16>}, {transform_indices = @transform_1, window_bounds = array<i64: 288>}, {transform_indices = @transform_2, window_bounds = array<i64: 1, 4, 16, 16>}]} {
    %c0 = arith.constant 0 : index
    %c0_0 = arith.constant 0 : index
    %c0_1 = arith.constant 0 : index
    %c0_2 = arith.constant 0 : index
    %0 = vector.load %arg2[%c0, %c0_0, %c0_1, %c0_2] : memref<1x4x16x16xf32, #tpu.memory_space<vmem>>, vector<1x4x16x16xf32>
    %1 = vector.shape_cast %0 : vector<1x4x16x16xf32> to vector<4x16x16xf32>
    %cst = arith.constant 0.000000e+00 : f32
    %2 = vector.broadcast %cst : f32 to vector<4x16x1xf32>
    %3 = tpu.concatenate %2, %1, %2 in 2 : vector<4x16x1xf32>, vector<4x16x16xf32>, vector<4x16x1xf32> -> vector<4x16x18xf32>
    %cst_3 = arith.constant 0.000000e+00 : f32
    %4 = vector.broadcast %cst_3 : f32 to vector<4x8x18xf32>
    %5 = tpu.concatenate %4, %3, %4 in 1 : vector<4x8x18xf32>, vector<4x16x18xf32>, vector<4x8x18xf32> -> vector<4x32x18xf32>
    %cst_4 = arith.constant 0.000000e+00 : f32
    %6 = vector.broadcast %cst_4 : f32 to vector<16x16xf32>
    %cst_5 = arith.constant 0.000000e+00 : f32
    %7 = vector.broadcast %cst_5 : f32 to vector<16x16xf32>
    %cst_6 = arith.constant 0.000000e+00 : f32
    %8 = vector.broadcast %cst_6 : f32 to vector<16x16xf32>
    %cst_7 = arith.constant 0.000000e+00 : f32
    %9 = vector.broadcast %cst_7 : f32 to vector<16x16xf32>
    %10 = vector.extract_strided_slice %5 {offsets = [0, 7, 0], sizes = [1, 16, 16], strides = [1, 1, 1]} : vector<4x32x18xf32> to vector<1x16x16xf32>
    %11 = vector.shape_cast %10 : vector<1x16x16xf32> to vector<16x16xf32>
    %c4_i32 = arith.constant 4 : i32
    %12 = arith.muli %arg1, %c4_i32 : i32
    %c0_i32 = arith.constant 0 : i32
    %13 = arith.addi %12, %c0_i32 : i32
    %c4_i32_8 = arith.constant 4 : i32
    %14 = arith.muli %13, %c4_i32_8 : i32
    %c0_i32_9 = arith.constant 0 : i32
    %15 = arith.addi %14, %c0_i32_9 : i32
    %c9_i32 = arith.constant 9 : i32
    %16 = arith.muli %15, %c9_i32 : i32
    %c0_i32_10 = arith.constant 0 : i32
    %17 = arith.addi %16, %c0_i32_10 : i32
    %c0_i32_11 = arith.constant 0 : i32
    %18 = arith.addi %17, %c0_i32_11 : i32
    %19 = arith.index_cast %18 : i32 to index
    %20 = memref.load %arg3[%19] : memref<288xf32, #tpu.memory_space<smem>>
    %21 = vector.broadcast %20 : f32 to vector<16x16xf32>
    %22 = arith.mulf %21, %11 : vector<16x16xf32>
    %23 = arith.addf %6, %22 : vector<16x16xf32>
    %c4_i32_12 = arith.constant 4 : i32
    %24 = arith.muli %arg1, %c4_i32_12 : i32
    %c1_i32 = arith.constant 1 : i32
    %25 = arith.addi %24, %c1_i32 : i32
    %c4_i32_13 = arith.constant 4 : i32
    %26 = arith.muli %25, %c4_i32_13 : i32
    %c0_i32_14 = arith.constant 0 : i32
    %27 = arith.addi %26, %c0_i32_14 : i32
    %c9_i32_15 = arith.constant 9 : i32
    %28 = arith.muli %27, %c9_i32_15 : i32
    %c0_i32_16 = arith.constant 0 : i32
    %29 = arith.addi %28, %c0_i32_16 : i32
    %c0_i32_17 = arith.constant 0 : i32
    %30 = arith.addi %29, %c0_i32_17 : i32
    %31 = arith.index_cast %30 : i32 to index
    %32 = memref.load %arg3[%31] : memref<288xf32, #tpu.memory_space<smem>>
    %33 = vector.broadcast %32 : f32 to vector<16x16xf32>
    %34 = arith.mulf %33, %11 : vector<16x16xf32>
    %35 = arith.addf %7, %34 : vector<16x16xf32>
    %c4_i32_18 = arith.constant 4 : i32
    %36 = arith.muli %arg1, %c4_i32_18 : i32
    %c2_i32 = arith.constant 2 : i32
    %37 = arith.addi %36, %c2_i32 : i32
    %c4_i32_19 = arith.constant 4 : i32
    %38 = arith.muli %37, %c4_i32_19 : i32
    %c0_i32_20 = arith.constant 0 : i32
    %39 = arith.addi %38, %c0_i32_20 : i32
    %c9_i32_21 = arith.constant 9 : i32
    %40 = arith.muli %39, %c9_i32_21 : i32
    %c0_i32_22 = arith.constant 0 : i32
    %41 = arith.addi %40, %c0_i32_22 : i32
    %c0_i32_23 = arith.constant 0 : i32
    %42 = arith.addi %41, %c0_i32_23 : i32
    %43 = arith.index_cast %42 : i32 to index
    %44 = memref.load %arg3[%43] : memref<288xf32, #tpu.memory_space<smem>>
    %45 = vector.broadcast %44 : f32 to vector<16x16xf32>
    %46 = arith.mulf %45, %11 : vector<16x16xf32>
    %47 = arith.addf %8, %46 : vector<16x16xf32>
    %c4_i32_24 = arith.constant 4 : i32
    %48 = arith.muli %arg1, %c4_i32_24 : i32
    %c3_i32 = arith.constant 3 : i32
    %49 = arith.addi %48, %c3_i32 : i32
    %c4_i32_25 = arith.constant 4 : i32
    %50 = arith.muli %49, %c4_i32_25 : i32
    %c0_i32_26 = arith.constant 0 : i32
    %51 = arith.addi %50, %c0_i32_26 : i32
    %c9_i32_27 = arith.constant 9 : i32
    %52 = arith.muli %51, %c9_i32_27 : i32
    %c0_i32_28 = arith.constant 0 : i32
    %53 = arith.addi %52, %c0_i32_28 : i32
    %c0_i32_29 = arith.constant 0 : i32
    %54 = arith.addi %53, %c0_i32_29 : i32
    %55 = arith.index_cast %54 : i32 to index
    %56 = memref.load %arg3[%55] : memref<288xf32, #tpu.memory_space<smem>>
    %57 = vector.broadcast %56 : f32 to vector<16x16xf32>
    %58 = arith.mulf %57, %11 : vector<16x16xf32>
    %59 = arith.addf %9, %58 : vector<16x16xf32>
    %60 = vector.extract_strided_slice %5 {offsets = [0, 7, 1], sizes = [1, 16, 16], strides = [1, 1, 1]} : vector<4x32x18xf32> to vector<1x16x16xf32>
    %61 = vector.shape_cast %60 : vector<1x16x16xf32> to vector<16x16xf32>
    %c4_i32_30 = arith.constant 4 : i32
    %62 = arith.muli %arg1, %c4_i32_30 : i32
    %c0_i32_31 = arith.constant 0 : i32
    %63 = arith.addi %62, %c0_i32_31 : i32
    %c4_i32_32 = arith.constant 4 : i32
    %64 = arith.muli %63, %c4_i32_32 : i32
    %c0_i32_33 = arith.constant 0 : i32
    %65 = arith.addi %64, %c0_i32_33 : i32
    %c9_i32_34 = arith.constant 9 : i32
    %66 = arith.muli %65, %c9_i32_34 : i32
    %c0_i32_35 = arith.constant 0 : i32
    %67 = arith.addi %66, %c0_i32_35 : i32
    %c1_i32_36 = arith.constant 1 : i32
    %68 = arith.addi %67, %c1_i32_36 : i32
    %69 = arith.index_cast %68 : i32 to index
    %70 = memref.load %arg3[%69] : memref<288xf32, #tpu.memory_space<smem>>
    %71 = vector.broadcast %70 : f32 to vector<16x16xf32>
    %72 = arith.mulf %71, %61 : vector<16x16xf32>
    %73 = arith.addf %23, %72 : vector<16x16xf32>
    %c4_i32_37 = arith.constant 4 : i32
    %74 = arith.muli %arg1, %c4_i32_37 : i32
    %c1_i32_38 = arith.constant 1 : i32
    %75 = arith.addi %74, %c1_i32_38 : i32
    %c4_i32_39 = arith.constant 4 : i32
    %76 = arith.muli %75, %c4_i32_39 : i32
    %c0_i32_40 = arith.constant 0 : i32
    %77 = arith.addi %76, %c0_i32_40 : i32
    %c9_i32_41 = arith.constant 9 : i32
    %78 = arith.muli %77, %c9_i32_41 : i32
    %c0_i32_42 = arith.constant 0 : i32
    %79 = arith.addi %78, %c0_i32_42 : i32
    %c1_i32_43 = arith.constant 1 : i32
    %80 = arith.addi %79, %c1_i32_43 : i32
    %81 = arith.index_cast %80 : i32 to index
    %82 = memref.load %arg3[%81] : memref<288xf32, #tpu.memory_space<smem>>
    %83 = vector.broadcast %82 : f32 to vector<16x16xf32>
    %84 = arith.mulf %83, %61 : vector<16x16xf32>
    %85 = arith.addf %35, %84 : vector<16x16xf32>
    %c4_i32_44 = arith.constant 4 : i32
    %86 = arith.muli %arg1, %c4_i32_44 : i32
    %c2_i32_45 = arith.constant 2 : i32
    %87 = arith.addi %86, %c2_i32_45 : i32
    %c4_i32_46 = arith.constant 4 : i32
    %88 = arith.muli %87, %c4_i32_46 : i32
    %c0_i32_47 = arith.constant 0 : i32
    %89 = arith.addi %88, %c0_i32_47 : i32
    %c9_i32_48 = arith.constant 9 : i32
    %90 = arith.muli %89, %c9_i32_48 : i32
    %c0_i32_49 = arith.constant 0 : i32
    %91 = arith.addi %90, %c0_i32_49 : i32
    %c1_i32_50 = arith.constant 1 : i32
    %92 = arith.addi %91, %c1_i32_50 : i32
    %93 = arith.index_cast %92 : i32 to index
    %94 = memref.load %arg3[%93] : memref<288xf32, #tpu.memory_space<smem>>
    %95 = vector.broadcast %94 : f32 to vector<16x16xf32>
    %96 = arith.mulf %95, %61 : vector<16x16xf32>
    %97 = arith.addf %47, %96 : vector<16x16xf32>
    %c4_i32_51 = arith.constant 4 : i32
    %98 = arith.muli %arg1, %c4_i32_51 : i32
    %c3_i32_52 = arith.constant 3 : i32
    %99 = arith.addi %98, %c3_i32_52 : i32
    %c4_i32_53 = arith.constant 4 : i32
    %100 = arith.muli %99, %c4_i32_53 : i32
    %c0_i32_54 = arith.constant 0 : i32
    %101 = arith.addi %100, %c0_i32_54 : i32
    %c9_i32_55 = arith.constant 9 : i32
    %102 = arith.muli %101, %c9_i32_55 : i32
    %c0_i32_56 = arith.constant 0 : i32
    %103 = arith.addi %102, %c0_i32_56 : i32
    %c1_i32_57 = arith.constant 1 : i32
    %104 = arith.addi %103, %c1_i32_57 : i32
    %105 = arith.index_cast %104 : i32 to index
    %106 = memref.load %arg3[%105] : memref<288xf32, #tpu.memory_space<smem>>
    %107 = vector.broadcast %106 : f32 to vector<16x16xf32>
    %108 = arith.mulf %107, %61 : vector<16x16xf32>
    %109 = arith.addf %59, %108 : vector<16x16xf32>
    %110 = vector.extract_strided_slice %5 {offsets = [0, 7, 2], sizes = [1, 16, 16], strides = [1, 1, 1]} : vector<4x32x18xf32> to vector<1x16x16xf32>
    %111 = vector.shape_cast %110 : vector<1x16x16xf32> to vector<16x16xf32>
    %c4_i32_58 = arith.constant 4 : i32
    %112 = arith.muli %arg1, %c4_i32_58 : i32
    %c0_i32_59 = arith.constant 0 : i32
    %113 = arith.addi %112, %c0_i32_59 : i32
    %c4_i32_60 = arith.constant 4 : i32
    %114 = arith.muli %113, %c4_i32_60 : i32
    %c0_i32_61 = arith.constant 0 : i32
    %115 = arith.addi %114, %c0_i32_61 : i32
    %c9_i32_62 = arith.constant 9 : i32
    %116 = arith.muli %115, %c9_i32_62 : i32
    %c0_i32_63 = arith.constant 0 : i32
    %117 = arith.addi %116, %c0_i32_63 : i32
    %c2_i32_64 = arith.constant 2 : i32
    %118 = arith.addi %117, %c2_i32_64 : i32
    %119 = arith.index_cast %118 : i32 to index
    %120 = memref.load %arg3[%119] : memref<288xf32, #tpu.memory_space<smem>>
    %121 = vector.broadcast %120 : f32 to vector<16x16xf32>
    %122 = arith.mulf %121, %111 : vector<16x16xf32>
    %123 = arith.addf %73, %122 : vector<16x16xf32>
    %c4_i32_65 = arith.constant 4 : i32
    %124 = arith.muli %arg1, %c4_i32_65 : i32
    %c1_i32_66 = arith.constant 1 : i32
    %125 = arith.addi %124, %c1_i32_66 : i32
    %c4_i32_67 = arith.constant 4 : i32
    %126 = arith.muli %125, %c4_i32_67 : i32
    %c0_i32_68 = arith.constant 0 : i32
    %127 = arith.addi %126, %c0_i32_68 : i32
    %c9_i32_69 = arith.constant 9 : i32
    %128 = arith.muli %127, %c9_i32_69 : i32
    %c0_i32_70 = arith.constant 0 : i32
    %129 = arith.addi %128, %c0_i32_70 : i32
    %c2_i32_71 = arith.constant 2 : i32
    %130 = arith.addi %129, %c2_i32_71 : i32
    %131 = arith.index_cast %130 : i32 to index
    %132 = memref.load %arg3[%131] : memref<288xf32, #tpu.memory_space<smem>>
    %133 = vector.broadcast %132 : f32 to vector<16x16xf32>
    %134 = arith.mulf %133, %111 : vector<16x16xf32>
    %135 = arith.addf %85, %134 : vector<16x16xf32>
    %c4_i32_72 = arith.constant 4 : i32
    %136 = arith.muli %arg1, %c4_i32_72 : i32
    %c2_i32_73 = arith.constant 2 : i32
    %137 = arith.addi %136, %c2_i32_73 : i32
    %c4_i32_74 = arith.constant 4 : i32
    %138 = arith.muli %137, %c4_i32_74 : i32
    %c0_i32_75 = arith.constant 0 : i32
    %139 = arith.addi %138, %c0_i32_75 : i32
    %c9_i32_76 = arith.constant 9 : i32
    %140 = arith.muli %139, %c9_i32_76 : i32
    %c0_i32_77 = arith.constant 0 : i32
    %141 = arith.addi %140, %c0_i32_77 : i32
    %c2_i32_78 = arith.constant 2 : i32
    %142 = arith.addi %141, %c2_i32_78 : i32
    %143 = arith.index_cast %142 : i32 to index
    %144 = memref.load %arg3[%143] : memref<288xf32, #tpu.memory_space<smem>>
    %145 = vector.broadcast %144 : f32 to vector<16x16xf32>
    %146 = arith.mulf %145, %111 : vector<16x16xf32>
    %147 = arith.addf %97, %146 : vector<16x16xf32>
    %c4_i32_79 = arith.constant 4 : i32
    %148 = arith.muli %arg1, %c4_i32_79 : i32
    %c3_i32_80 = arith.constant 3 : i32
    %149 = arith.addi %148, %c3_i32_80 : i32
    %c4_i32_81 = arith.constant 4 : i32
    %150 = arith.muli %149, %c4_i32_81 : i32
    %c0_i32_82 = arith.constant 0 : i32
    %151 = arith.addi %150, %c0_i32_82 : i32
    %c9_i32_83 = arith.constant 9 : i32
    %152 = arith.muli %151, %c9_i32_83 : i32
    %c0_i32_84 = arith.constant 0 : i32
    %153 = arith.addi %152, %c0_i32_84 : i32
    %c2_i32_85 = arith.constant 2 : i32
    %154 = arith.addi %153, %c2_i32_85 : i32
    %155 = arith.index_cast %154 : i32 to index
    %156 = memref.load %arg3[%155] : memref<288xf32, #tpu.memory_space<smem>>
    %157 = vector.broadcast %156 : f32 to vector<16x16xf32>
    %158 = arith.mulf %157, %111 : vector<16x16xf32>
    %159 = arith.addf %109, %158 : vector<16x16xf32>
    %160 = vector.extract_strided_slice %5 {offsets = [0, 8, 0], sizes = [1, 16, 16], strides = [1, 1, 1]} : vector<4x32x18xf32> to vector<1x16x16xf32>
    %161 = vector.shape_cast %160 : vector<1x16x16xf32> to vector<16x16xf32>
    %c4_i32_86 = arith.constant 4 : i32
    %162 = arith.muli %arg1, %c4_i32_86 : i32
    %c0_i32_87 = arith.constant 0 : i32
    %163 = arith.addi %162, %c0_i32_87 : i32
    %c4_i32_88 = arith.constant 4 : i32
    %164 = arith.muli %163, %c4_i32_88 : i32
    %c0_i32_89 = arith.constant 0 : i32
    %165 = arith.addi %164, %c0_i32_89 : i32
    %c9_i32_90 = arith.constant 9 : i32
    %166 = arith.muli %165, %c9_i32_90 : i32
    %c3_i32_91 = arith.constant 3 : i32
    %167 = arith.addi %166, %c3_i32_91 : i32
    %c0_i32_92 = arith.constant 0 : i32
    %168 = arith.addi %167, %c0_i32_92 : i32
    %169 = arith.index_cast %168 : i32 to index
    %170 = memref.load %arg3[%169] : memref<288xf32, #tpu.memory_space<smem>>
    %171 = vector.broadcast %170 : f32 to vector<16x16xf32>
    %172 = arith.mulf %171, %161 : vector<16x16xf32>
    %173 = arith.addf %123, %172 : vector<16x16xf32>
    %c4_i32_93 = arith.constant 4 : i32
    %174 = arith.muli %arg1, %c4_i32_93 : i32
    %c1_i32_94 = arith.constant 1 : i32
    %175 = arith.addi %174, %c1_i32_94 : i32
    %c4_i32_95 = arith.constant 4 : i32
    %176 = arith.muli %175, %c4_i32_95 : i32
    %c0_i32_96 = arith.constant 0 : i32
    %177 = arith.addi %176, %c0_i32_96 : i32
    %c9_i32_97 = arith.constant 9 : i32
    %178 = arith.muli %177, %c9_i32_97 : i32
    %c3_i32_98 = arith.constant 3 : i32
    %179 = arith.addi %178, %c3_i32_98 : i32
    %c0_i32_99 = arith.constant 0 : i32
    %180 = arith.addi %179, %c0_i32_99 : i32
    %181 = arith.index_cast %180 : i32 to index
    %182 = memref.load %arg3[%181] : memref<288xf32, #tpu.memory_space<smem>>
    %183 = vector.broadcast %182 : f32 to vector<16x16xf32>
    %184 = arith.mulf %183, %161 : vector<16x16xf32>
    %185 = arith.addf %135, %184 : vector<16x16xf32>
    %c4_i32_100 = arith.constant 4 : i32
    %186 = arith.muli %arg1, %c4_i32_100 : i32
    %c2_i32_101 = arith.constant 2 : i32
    %187 = arith.addi %186, %c2_i32_101 : i32
    %c4_i32_102 = arith.constant 4 : i32
    %188 = arith.muli %187, %c4_i32_102 : i32
    %c0_i32_103 = arith.constant 0 : i32
    %189 = arith.addi %188, %c0_i32_103 : i32
    %c9_i32_104 = arith.constant 9 : i32
    %190 = arith.muli %189, %c9_i32_104 : i32
    %c3_i32_105 = arith.constant 3 : i32
    %191 = arith.addi %190, %c3_i32_105 : i32
    %c0_i32_106 = arith.constant 0 : i32
    %192 = arith.addi %191, %c0_i32_106 : i32
    %193 = arith.index_cast %192 : i32 to index
    %194 = memref.load %arg3[%193] : memref<288xf32, #tpu.memory_space<smem>>
    %195 = vector.broadcast %194 : f32 to vector<16x16xf32>
    %196 = arith.mulf %195, %161 : vector<16x16xf32>
    %197 = arith.addf %147, %196 : vector<16x16xf32>
    %c4_i32_107 = arith.constant 4 : i32
    %198 = arith.muli %arg1, %c4_i32_107 : i32
    %c3_i32_108 = arith.constant 3 : i32
    %199 = arith.addi %198, %c3_i32_108 : i32
    %c4_i32_109 = arith.constant 4 : i32
    %200 = arith.muli %199, %c4_i32_109 : i32
    %c0_i32_110 = arith.constant 0 : i32
    %201 = arith.addi %200, %c0_i32_110 : i32
    %c9_i32_111 = arith.constant 9 : i32
    %202 = arith.muli %201, %c9_i32_111 : i32
    %c3_i32_112 = arith.constant 3 : i32
    %203 = arith.addi %202, %c3_i32_112 : i32
    %c0_i32_113 = arith.constant 0 : i32
    %204 = arith.addi %203, %c0_i32_113 : i32
    %205 = arith.index_cast %204 : i32 to index
    %206 = memref.load %arg3[%205] : memref<288xf32, #tpu.memory_space<smem>>
    %207 = vector.broadcast %206 : f32 to vector<16x16xf32>
    %208 = arith.mulf %207, %161 : vector<16x16xf32>
    %209 = arith.addf %159, %208 : vector<16x16xf32>
    %210 = vector.extract_strided_slice %5 {offsets = [0, 8, 1], sizes = [1, 16, 16], strides = [1, 1, 1]} : vector<4x32x18xf32> to vector<1x16x16xf32>
    %211 = vector.shape_cast %210 : vector<1x16x16xf32> to vector<16x16xf32>
    %c4_i32_114 = arith.constant 4 : i32
    %212 = arith.muli %arg1, %c4_i32_114 : i32
    %c0_i32_115 = arith.constant 0 : i32
    %213 = arith.addi %212, %c0_i32_115 : i32
    %c4_i32_116 = arith.constant 4 : i32
    %214 = arith.muli %213, %c4_i32_116 : i32
    %c0_i32_117 = arith.constant 0 : i32
    %215 = arith.addi %214, %c0_i32_117 : i32
    %c9_i32_118 = arith.constant 9 : i32
    %216 = arith.muli %215, %c9_i32_118 : i32
    %c3_i32_119 = arith.constant 3 : i32
    %217 = arith.addi %216, %c3_i32_119 : i32
    %c1_i32_120 = arith.constant 1 : i32
    %218 = arith.addi %217, %c1_i32_120 : i32
    %219 = arith.index_cast %218 : i32 to index
    %220 = memref.load %arg3[%219] : memref<288xf32, #tpu.memory_space<smem>>
    %221 = vector.broadcast %220 : f32 to vector<16x16xf32>
    %222 = arith.mulf %221, %211 : vector<16x16xf32>
    %223 = arith.addf %173, %222 : vector<16x16xf32>
    %c4_i32_121 = arith.constant 4 : i32
    %224 = arith.muli %arg1, %c4_i32_121 : i32
    %c1_i32_122 = arith.constant 1 : i32
    %225 = arith.addi %224, %c1_i32_122 : i32
    %c4_i32_123 = arith.constant 4 : i32
    %226 = arith.muli %225, %c4_i32_123 : i32
    %c0_i32_124 = arith.constant 0 : i32
    %227 = arith.addi %226, %c0_i32_124 : i32
    %c9_i32_125 = arith.constant 9 : i32
    %228 = arith.muli %227, %c9_i32_125 : i32
    %c3_i32_126 = arith.constant 3 : i32
    %229 = arith.addi %228, %c3_i32_126 : i32
    %c1_i32_127 = arith.constant 1 : i32
    %230 = arith.addi %229, %c1_i32_127 : i32
    %231 = arith.index_cast %230 : i32 to index
    %232 = memref.load %arg3[%231] : memref<288xf32, #tpu.memory_space<smem>>
    %233 = vector.broadcast %232 : f32 to vector<16x16xf32>
    %234 = arith.mulf %233, %211 : vector<16x16xf32>
    %235 = arith.addf %185, %234 : vector<16x16xf32>
    %c4_i32_128 = arith.constant 4 : i32
    %236 = arith.muli %arg1, %c4_i32_128 : i32
    %c2_i32_129 = arith.constant 2 : i32
    %237 = arith.addi %236, %c2_i32_129 : i32
    %c4_i32_130 = arith.constant 4 : i32
    %238 = arith.muli %237, %c4_i32_130 : i32
    %c0_i32_131 = arith.constant 0 : i32
    %239 = arith.addi %238, %c0_i32_131 : i32
    %c9_i32_132 = arith.constant 9 : i32
    %240 = arith.muli %239, %c9_i32_132 : i32
    %c3_i32_133 = arith.constant 3 : i32
    %241 = arith.addi %240, %c3_i32_133 : i32
    %c1_i32_134 = arith.constant 1 : i32
    %242 = arith.addi %241, %c1_i32_134 : i32
    %243 = arith.index_cast %242 : i32 to index
    %244 = memref.load %arg3[%243] : memref<288xf32, #tpu.memory_space<smem>>
    %245 = vector.broadcast %244 : f32 to vector<16x16xf32>
    %246 = arith.mulf %245, %211 : vector<16x16xf32>
    %247 = arith.addf %197, %246 : vector<16x16xf32>
    %c4_i32_135 = arith.constant 4 : i32
    %248 = arith.muli %arg1, %c4_i32_135 : i32
    %c3_i32_136 = arith.constant 3 : i32
    %249 = arith.addi %248, %c3_i32_136 : i32
    %c4_i32_137 = arith.constant 4 : i32
    %250 = arith.muli %249, %c4_i32_137 : i32
    %c0_i32_138 = arith.constant 0 : i32
    %251 = arith.addi %250, %c0_i32_138 : i32
    %c9_i32_139 = arith.constant 9 : i32
    %252 = arith.muli %251, %c9_i32_139 : i32
    %c3_i32_140 = arith.constant 3 : i32
    %253 = arith.addi %252, %c3_i32_140 : i32
    %c1_i32_141 = arith.constant 1 : i32
    %254 = arith.addi %253, %c1_i32_141 : i32
    %255 = arith.index_cast %254 : i32 to index
    %256 = memref.load %arg3[%255] : memref<288xf32, #tpu.memory_space<smem>>
    %257 = vector.broadcast %256 : f32 to vector<16x16xf32>
    %258 = arith.mulf %257, %211 : vector<16x16xf32>
    %259 = arith.addf %209, %258 : vector<16x16xf32>
    %260 = vector.extract_strided_slice %5 {offsets = [0, 8, 2], sizes = [1, 16, 16], strides = [1, 1, 1]} : vector<4x32x18xf32> to vector<1x16x16xf32>
    %261 = vector.shape_cast %260 : vector<1x16x16xf32> to vector<16x16xf32>
    %c4_i32_142 = arith.constant 4 : i32
    %262 = arith.muli %arg1, %c4_i32_142 : i32
    %c0_i32_143 = arith.constant 0 : i32
    %263 = arith.addi %262, %c0_i32_143 : i32
    %c4_i32_144 = arith.constant 4 : i32
    %264 = arith.muli %263, %c4_i32_144 : i32
    %c0_i32_145 = arith.constant 0 : i32
    %265 = arith.addi %264, %c0_i32_145 : i32
    %c9_i32_146 = arith.constant 9 : i32
    %266 = arith.muli %265, %c9_i32_146 : i32
    %c3_i32_147 = arith.constant 3 : i32
    %267 = arith.addi %266, %c3_i32_147 : i32
    %c2_i32_148 = arith.constant 2 : i32
    %268 = arith.addi %267, %c2_i32_148 : i32
    %269 = arith.index_cast %268 : i32 to index
    %270 = memref.load %arg3[%269] : memref<288xf32, #tpu.memory_space<smem>>
    %271 = vector.broadcast %270 : f32 to vector<16x16xf32>
    %272 = arith.mulf %271, %261 : vector<16x16xf32>
    %273 = arith.addf %223, %272 : vector<16x16xf32>
    %c4_i32_149 = arith.constant 4 : i32
    %274 = arith.muli %arg1, %c4_i32_149 : i32
    %c1_i32_150 = arith.constant 1 : i32
    %275 = arith.addi %274, %c1_i32_150 : i32
    %c4_i32_151 = arith.constant 4 : i32
    %276 = arith.muli %275, %c4_i32_151 : i32
    %c0_i32_152 = arith.constant 0 : i32
    %277 = arith.addi %276, %c0_i32_152 : i32
    %c9_i32_153 = arith.constant 9 : i32
    %278 = arith.muli %277, %c9_i32_153 : i32
    %c3_i32_154 = arith.constant 3 : i32
    %279 = arith.addi %278, %c3_i32_154 : i32
    %c2_i32_155 = arith.constant 2 : i32
    %280 = arith.addi %279, %c2_i32_155 : i32
    %281 = arith.index_cast %280 : i32 to index
    %282 = memref.load %arg3[%281] : memref<288xf32, #tpu.memory_space<smem>>
    %283 = vector.broadcast %282 : f32 to vector<16x16xf32>
    %284 = arith.mulf %283, %261 : vector<16x16xf32>
    %285 = arith.addf %235, %284 : vector<16x16xf32>
    %c4_i32_156 = arith.constant 4 : i32
    %286 = arith.muli %arg1, %c4_i32_156 : i32
    %c2_i32_157 = arith.constant 2 : i32
    %287 = arith.addi %286, %c2_i32_157 : i32
    %c4_i32_158 = arith.constant 4 : i32
    %288 = arith.muli %287, %c4_i32_158 : i32
    %c0_i32_159 = arith.constant 0 : i32
    %289 = arith.addi %288, %c0_i32_159 : i32
    %c9_i32_160 = arith.constant 9 : i32
    %290 = arith.muli %289, %c9_i32_160 : i32
    %c3_i32_161 = arith.constant 3 : i32
    %291 = arith.addi %290, %c3_i32_161 : i32
    %c2_i32_162 = arith.constant 2 : i32
    %292 = arith.addi %291, %c2_i32_162 : i32
    %293 = arith.index_cast %292 : i32 to index
    %294 = memref.load %arg3[%293] : memref<288xf32, #tpu.memory_space<smem>>
    %295 = vector.broadcast %294 : f32 to vector<16x16xf32>
    %296 = arith.mulf %295, %261 : vector<16x16xf32>
    %297 = arith.addf %247, %296 : vector<16x16xf32>
    %c4_i32_163 = arith.constant 4 : i32
    %298 = arith.muli %arg1, %c4_i32_163 : i32
    %c3_i32_164 = arith.constant 3 : i32
    %299 = arith.addi %298, %c3_i32_164 : i32
    %c4_i32_165 = arith.constant 4 : i32
    %300 = arith.muli %299, %c4_i32_165 : i32
    %c0_i32_166 = arith.constant 0 : i32
    %301 = arith.addi %300, %c0_i32_166 : i32
    %c9_i32_167 = arith.constant 9 : i32
    %302 = arith.muli %301, %c9_i32_167 : i32
    %c3_i32_168 = arith.constant 3 : i32
    %303 = arith.addi %302, %c3_i32_168 : i32
    %c2_i32_169 = arith.constant 2 : i32
    %304 = arith.addi %303, %c2_i32_169 : i32
    %305 = arith.index_cast %304 : i32 to index
    %306 = memref.load %arg3[%305] : memref<288xf32, #tpu.memory_space<smem>>
    %307 = vector.broadcast %306 : f32 to vector<16x16xf32>
    %308 = arith.mulf %307, %261 : vector<16x16xf32>
    %309 = arith.addf %259, %308 : vector<16x16xf32>
    %310 = vector.extract_strided_slice %5 {offsets = [0, 9, 0], sizes = [1, 16, 16], strides = [1, 1, 1]} : vector<4x32x18xf32> to vector<1x16x16xf32>
    %311 = vector.shape_cast %310 : vector<1x16x16xf32> to vector<16x16xf32>
    %c4_i32_170 = arith.constant 4 : i32
    %312 = arith.muli %arg1, %c4_i32_170 : i32
    %c0_i32_171 = arith.constant 0 : i32
    %313 = arith.addi %312, %c0_i32_171 : i32
    %c4_i32_172 = arith.constant 4 : i32
    %314 = arith.muli %313, %c4_i32_172 : i32
    %c0_i32_173 = arith.constant 0 : i32
    %315 = arith.addi %314, %c0_i32_173 : i32
    %c9_i32_174 = arith.constant 9 : i32
    %316 = arith.muli %315, %c9_i32_174 : i32
    %c6_i32 = arith.constant 6 : i32
    %317 = arith.addi %316, %c6_i32 : i32
    %c0_i32_175 = arith.constant 0 : i32
    %318 = arith.addi %317, %c0_i32_175 : i32
    %319 = arith.index_cast %318 : i32 to index
    %320 = memref.load %arg3[%319] : memref<288xf32, #tpu.memory_space<smem>>
    %321 = vector.broadcast %320 : f32 to vector<16x16xf32>
    %322 = arith.mulf %321, %311 : vector<16x16xf32>
    %323 = arith.addf %273, %322 : vector<16x16xf32>
    %c4_i32_176 = arith.constant 4 : i32
    %324 = arith.muli %arg1, %c4_i32_176 : i32
    %c1_i32_177 = arith.constant 1 : i32
    %325 = arith.addi %324, %c1_i32_177 : i32
    %c4_i32_178 = arith.constant 4 : i32
    %326 = arith.muli %325, %c4_i32_178 : i32
    %c0_i32_179 = arith.constant 0 : i32
    %327 = arith.addi %326, %c0_i32_179 : i32
    %c9_i32_180 = arith.constant 9 : i32
    %328 = arith.muli %327, %c9_i32_180 : i32
    %c6_i32_181 = arith.constant 6 : i32
    %329 = arith.addi %328, %c6_i32_181 : i32
    %c0_i32_182 = arith.constant 0 : i32
    %330 = arith.addi %329, %c0_i32_182 : i32
    %331 = arith.index_cast %330 : i32 to index
    %332 = memref.load %arg3[%331] : memref<288xf32, #tpu.memory_space<smem>>
    %333 = vector.broadcast %332 : f32 to vector<16x16xf32>
    %334 = arith.mulf %333, %311 : vector<16x16xf32>
    %335 = arith.addf %285, %334 : vector<16x16xf32>
    %c4_i32_183 = arith.constant 4 : i32
    %336 = arith.muli %arg1, %c4_i32_183 : i32
    %c2_i32_184 = arith.constant 2 : i32
    %337 = arith.addi %336, %c2_i32_184 : i32
    %c4_i32_185 = arith.constant 4 : i32
    %338 = arith.muli %337, %c4_i32_185 : i32
    %c0_i32_186 = arith.constant 0 : i32
    %339 = arith.addi %338, %c0_i32_186 : i32
    %c9_i32_187 = arith.constant 9 : i32
    %340 = arith.muli %339, %c9_i32_187 : i32
    %c6_i32_188 = arith.constant 6 : i32
    %341 = arith.addi %340, %c6_i32_188 : i32
    %c0_i32_189 = arith.constant 0 : i32
    %342 = arith.addi %341, %c0_i32_189 : i32
    %343 = arith.index_cast %342 : i32 to index
    %344 = memref.load %arg3[%343] : memref<288xf32, #tpu.memory_space<smem>>
    %345 = vector.broadcast %344 : f32 to vector<16x16xf32>
    %346 = arith.mulf %345, %311 : vector<16x16xf32>
    %347 = arith.addf %297, %346 : vector<16x16xf32>
    %c4_i32_190 = arith.constant 4 : i32
    %348 = arith.muli %arg1, %c4_i32_190 : i32
    %c3_i32_191 = arith.constant 3 : i32
    %349 = arith.addi %348, %c3_i32_191 : i32
    %c4_i32_192 = arith.constant 4 : i32
    %350 = arith.muli %349, %c4_i32_192 : i32
    %c0_i32_193 = arith.constant 0 : i32
    %351 = arith.addi %350, %c0_i32_193 : i32
    %c9_i32_194 = arith.constant 9 : i32
    %352 = arith.muli %351, %c9_i32_194 : i32
    %c6_i32_195 = arith.constant 6 : i32
    %353 = arith.addi %352, %c6_i32_195 : i32
    %c0_i32_196 = arith.constant 0 : i32
    %354 = arith.addi %353, %c0_i32_196 : i32
    %355 = arith.index_cast %354 : i32 to index
    %356 = memref.load %arg3[%355] : memref<288xf32, #tpu.memory_space<smem>>
    %357 = vector.broadcast %356 : f32 to vector<16x16xf32>
    %358 = arith.mulf %357, %311 : vector<16x16xf32>
    %359 = arith.addf %309, %358 : vector<16x16xf32>
    %360 = vector.extract_strided_slice %5 {offsets = [0, 9, 1], sizes = [1, 16, 16], strides = [1, 1, 1]} : vector<4x32x18xf32> to vector<1x16x16xf32>
    %361 = vector.shape_cast %360 : vector<1x16x16xf32> to vector<16x16xf32>
    %c4_i32_197 = arith.constant 4 : i32
    %362 = arith.muli %arg1, %c4_i32_197 : i32
    %c0_i32_198 = arith.constant 0 : i32
    %363 = arith.addi %362, %c0_i32_198 : i32
    %c4_i32_199 = arith.constant 4 : i32
    %364 = arith.muli %363, %c4_i32_199 : i32
    %c0_i32_200 = arith.constant 0 : i32
    %365 = arith.addi %364, %c0_i32_200 : i32
    %c9_i32_201 = arith.constant 9 : i32
    %366 = arith.muli %365, %c9_i32_201 : i32
    %c6_i32_202 = arith.constant 6 : i32
    %367 = arith.addi %366, %c6_i32_202 : i32
    %c1_i32_203 = arith.constant 1 : i32
    %368 = arith.addi %367, %c1_i32_203 : i32
    %369 = arith.index_cast %368 : i32 to index
    %370 = memref.load %arg3[%369] : memref<288xf32, #tpu.memory_space<smem>>
    %371 = vector.broadcast %370 : f32 to vector<16x16xf32>
    %372 = arith.mulf %371, %361 : vector<16x16xf32>
    %373 = arith.addf %323, %372 : vector<16x16xf32>
    %c4_i32_204 = arith.constant 4 : i32
    %374 = arith.muli %arg1, %c4_i32_204 : i32
    %c1_i32_205 = arith.constant 1 : i32
    %375 = arith.addi %374, %c1_i32_205 : i32
    %c4_i32_206 = arith.constant 4 : i32
    %376 = arith.muli %375, %c4_i32_206 : i32
    %c0_i32_207 = arith.constant 0 : i32
    %377 = arith.addi %376, %c0_i32_207 : i32
    %c9_i32_208 = arith.constant 9 : i32
    %378 = arith.muli %377, %c9_i32_208 : i32
    %c6_i32_209 = arith.constant 6 : i32
    %379 = arith.addi %378, %c6_i32_209 : i32
    %c1_i32_210 = arith.constant 1 : i32
    %380 = arith.addi %379, %c1_i32_210 : i32
    %381 = arith.index_cast %380 : i32 to index
    %382 = memref.load %arg3[%381] : memref<288xf32, #tpu.memory_space<smem>>
    %383 = vector.broadcast %382 : f32 to vector<16x16xf32>
    %384 = arith.mulf %383, %361 : vector<16x16xf32>
    %385 = arith.addf %335, %384 : vector<16x16xf32>
    %c4_i32_211 = arith.constant 4 : i32
    %386 = arith.muli %arg1, %c4_i32_211 : i32
    %c2_i32_212 = arith.constant 2 : i32
    %387 = arith.addi %386, %c2_i32_212 : i32
    %c4_i32_213 = arith.constant 4 : i32
    %388 = arith.muli %387, %c4_i32_213 : i32
    %c0_i32_214 = arith.constant 0 : i32
    %389 = arith.addi %388, %c0_i32_214 : i32
    %c9_i32_215 = arith.constant 9 : i32
    %390 = arith.muli %389, %c9_i32_215 : i32
    %c6_i32_216 = arith.constant 6 : i32
    %391 = arith.addi %390, %c6_i32_216 : i32
    %c1_i32_217 = arith.constant 1 : i32
    %392 = arith.addi %391, %c1_i32_217 : i32
    %393 = arith.index_cast %392 : i32 to index
    %394 = memref.load %arg3[%393] : memref<288xf32, #tpu.memory_space<smem>>
    %395 = vector.broadcast %394 : f32 to vector<16x16xf32>
    %396 = arith.mulf %395, %361 : vector<16x16xf32>
    %397 = arith.addf %347, %396 : vector<16x16xf32>
    %c4_i32_218 = arith.constant 4 : i32
    %398 = arith.muli %arg1, %c4_i32_218 : i32
    %c3_i32_219 = arith.constant 3 : i32
    %399 = arith.addi %398, %c3_i32_219 : i32
    %c4_i32_220 = arith.constant 4 : i32
    %400 = arith.muli %399, %c4_i32_220 : i32
    %c0_i32_221 = arith.constant 0 : i32
    %401 = arith.addi %400, %c0_i32_221 : i32
    %c9_i32_222 = arith.constant 9 : i32
    %402 = arith.muli %401, %c9_i32_222 : i32
    %c6_i32_223 = arith.constant 6 : i32
    %403 = arith.addi %402, %c6_i32_223 : i32
    %c1_i32_224 = arith.constant 1 : i32
    %404 = arith.addi %403, %c1_i32_224 : i32
    %405 = arith.index_cast %404 : i32 to index
    %406 = memref.load %arg3[%405] : memref<288xf32, #tpu.memory_space<smem>>
    %407 = vector.broadcast %406 : f32 to vector<16x16xf32>
    %408 = arith.mulf %407, %361 : vector<16x16xf32>
    %409 = arith.addf %359, %408 : vector<16x16xf32>
    %410 = vector.extract_strided_slice %5 {offsets = [0, 9, 2], sizes = [1, 16, 16], strides = [1, 1, 1]} : vector<4x32x18xf32> to vector<1x16x16xf32>
    %411 = vector.shape_cast %410 : vector<1x16x16xf32> to vector<16x16xf32>
    %c4_i32_225 = arith.constant 4 : i32
    %412 = arith.muli %arg1, %c4_i32_225 : i32
    %c0_i32_226 = arith.constant 0 : i32
    %413 = arith.addi %412, %c0_i32_226 : i32
    %c4_i32_227 = arith.constant 4 : i32
    %414 = arith.muli %413, %c4_i32_227 : i32
    %c0_i32_228 = arith.constant 0 : i32
    %415 = arith.addi %414, %c0_i32_228 : i32
    %c9_i32_229 = arith.constant 9 : i32
    %416 = arith.muli %415, %c9_i32_229 : i32
    %c6_i32_230 = arith.constant 6 : i32
    %417 = arith.addi %416, %c6_i32_230 : i32
    %c2_i32_231 = arith.constant 2 : i32
    %418 = arith.addi %417, %c2_i32_231 : i32
    %419 = arith.index_cast %418 : i32 to index
    %420 = memref.load %arg3[%419] : memref<288xf32, #tpu.memory_space<smem>>
    %421 = vector.broadcast %420 : f32 to vector<16x16xf32>
    %422 = arith.mulf %421, %411 : vector<16x16xf32>
    %423 = arith.addf %373, %422 : vector<16x16xf32>
    %c4_i32_232 = arith.constant 4 : i32
    %424 = arith.muli %arg1, %c4_i32_232 : i32
    %c1_i32_233 = arith.constant 1 : i32
    %425 = arith.addi %424, %c1_i32_233 : i32
    %c4_i32_234 = arith.constant 4 : i32
    %426 = arith.muli %425, %c4_i32_234 : i32
    %c0_i32_235 = arith.constant 0 : i32
    %427 = arith.addi %426, %c0_i32_235 : i32
    %c9_i32_236 = arith.constant 9 : i32
    %428 = arith.muli %427, %c9_i32_236 : i32
    %c6_i32_237 = arith.constant 6 : i32
    %429 = arith.addi %428, %c6_i32_237 : i32
    %c2_i32_238 = arith.constant 2 : i32
    %430 = arith.addi %429, %c2_i32_238 : i32
    %431 = arith.index_cast %430 : i32 to index
    %432 = memref.load %arg3[%431] : memref<288xf32, #tpu.memory_space<smem>>
    %433 = vector.broadcast %432 : f32 to vector<16x16xf32>
    %434 = arith.mulf %433, %411 : vector<16x16xf32>
    %435 = arith.addf %385, %434 : vector<16x16xf32>
    %c4_i32_239 = arith.constant 4 : i32
    %436 = arith.muli %arg1, %c4_i32_239 : i32
    %c2_i32_240 = arith.constant 2 : i32
    %437 = arith.addi %436, %c2_i32_240 : i32
    %c4_i32_241 = arith.constant 4 : i32
    %438 = arith.muli %437, %c4_i32_241 : i32
    %c0_i32_242 = arith.constant 0 : i32
    %439 = arith.addi %438, %c0_i32_242 : i32
    %c9_i32_243 = arith.constant 9 : i32
    %440 = arith.muli %439, %c9_i32_243 : i32
    %c6_i32_244 = arith.constant 6 : i32
    %441 = arith.addi %440, %c6_i32_244 : i32
    %c2_i32_245 = arith.constant 2 : i32
    %442 = arith.addi %441, %c2_i32_245 : i32
    %443 = arith.index_cast %442 : i32 to index
    %444 = memref.load %arg3[%443] : memref<288xf32, #tpu.memory_space<smem>>
    %445 = vector.broadcast %444 : f32 to vector<16x16xf32>
    %446 = arith.mulf %445, %411 : vector<16x16xf32>
    %447 = arith.addf %397, %446 : vector<16x16xf32>
    %c4_i32_246 = arith.constant 4 : i32
    %448 = arith.muli %arg1, %c4_i32_246 : i32
    %c3_i32_247 = arith.constant 3 : i32
    %449 = arith.addi %448, %c3_i32_247 : i32
    %c4_i32_248 = arith.constant 4 : i32
    %450 = arith.muli %449, %c4_i32_248 : i32
    %c0_i32_249 = arith.constant 0 : i32
    %451 = arith.addi %450, %c0_i32_249 : i32
    %c9_i32_250 = arith.constant 9 : i32
    %452 = arith.muli %451, %c9_i32_250 : i32
    %c6_i32_251 = arith.constant 6 : i32
    %453 = arith.addi %452, %c6_i32_251 : i32
    %c2_i32_252 = arith.constant 2 : i32
    %454 = arith.addi %453, %c2_i32_252 : i32
    %455 = arith.index_cast %454 : i32 to index
    %456 = memref.load %arg3[%455] : memref<288xf32, #tpu.memory_space<smem>>
    %457 = vector.broadcast %456 : f32 to vector<16x16xf32>
    %458 = arith.mulf %457, %411 : vector<16x16xf32>
    %459 = arith.addf %409, %458 : vector<16x16xf32>
    %460 = vector.extract_strided_slice %5 {offsets = [1, 7, 0], sizes = [1, 16, 16], strides = [1, 1, 1]} : vector<4x32x18xf32> to vector<1x16x16xf32>
    %461 = vector.shape_cast %460 : vector<1x16x16xf32> to vector<16x16xf32>
    %c4_i32_253 = arith.constant 4 : i32
    %462 = arith.muli %arg1, %c4_i32_253 : i32
    %c0_i32_254 = arith.constant 0 : i32
    %463 = arith.addi %462, %c0_i32_254 : i32
    %c4_i32_255 = arith.constant 4 : i32
    %464 = arith.muli %463, %c4_i32_255 : i32
    %c1_i32_256 = arith.constant 1 : i32
    %465 = arith.addi %464, %c1_i32_256 : i32
    %c9_i32_257 = arith.constant 9 : i32
    %466 = arith.muli %465, %c9_i32_257 : i32
    %c0_i32_258 = arith.constant 0 : i32
    %467 = arith.addi %466, %c0_i32_258 : i32
    %c0_i32_259 = arith.constant 0 : i32
    %468 = arith.addi %467, %c0_i32_259 : i32
    %469 = arith.index_cast %468 : i32 to index
    %470 = memref.load %arg3[%469] : memref<288xf32, #tpu.memory_space<smem>>
    %471 = vector.broadcast %470 : f32 to vector<16x16xf32>
    %472 = arith.mulf %471, %461 : vector<16x16xf32>
    %473 = arith.addf %423, %472 : vector<16x16xf32>
    %c4_i32_260 = arith.constant 4 : i32
    %474 = arith.muli %arg1, %c4_i32_260 : i32
    %c1_i32_261 = arith.constant 1 : i32
    %475 = arith.addi %474, %c1_i32_261 : i32
    %c4_i32_262 = arith.constant 4 : i32
    %476 = arith.muli %475, %c4_i32_262 : i32
    %c1_i32_263 = arith.constant 1 : i32
    %477 = arith.addi %476, %c1_i32_263 : i32
    %c9_i32_264 = arith.constant 9 : i32
    %478 = arith.muli %477, %c9_i32_264 : i32
    %c0_i32_265 = arith.constant 0 : i32
    %479 = arith.addi %478, %c0_i32_265 : i32
    %c0_i32_266 = arith.constant 0 : i32
    %480 = arith.addi %479, %c0_i32_266 : i32
    %481 = arith.index_cast %480 : i32 to index
    %482 = memref.load %arg3[%481] : memref<288xf32, #tpu.memory_space<smem>>
    %483 = vector.broadcast %482 : f32 to vector<16x16xf32>
    %484 = arith.mulf %483, %461 : vector<16x16xf32>
    %485 = arith.addf %435, %484 : vector<16x16xf32>
    %c4_i32_267 = arith.constant 4 : i32
    %486 = arith.muli %arg1, %c4_i32_267 : i32
    %c2_i32_268 = arith.constant 2 : i32
    %487 = arith.addi %486, %c2_i32_268 : i32
    %c4_i32_269 = arith.constant 4 : i32
    %488 = arith.muli %487, %c4_i32_269 : i32
    %c1_i32_270 = arith.constant 1 : i32
    %489 = arith.addi %488, %c1_i32_270 : i32
    %c9_i32_271 = arith.constant 9 : i32
    %490 = arith.muli %489, %c9_i32_271 : i32
    %c0_i32_272 = arith.constant 0 : i32
    %491 = arith.addi %490, %c0_i32_272 : i32
    %c0_i32_273 = arith.constant 0 : i32
    %492 = arith.addi %491, %c0_i32_273 : i32
    %493 = arith.index_cast %492 : i32 to index
    %494 = memref.load %arg3[%493] : memref<288xf32, #tpu.memory_space<smem>>
    %495 = vector.broadcast %494 : f32 to vector<16x16xf32>
    %496 = arith.mulf %495, %461 : vector<16x16xf32>
    %497 = arith.addf %447, %496 : vector<16x16xf32>
    %c4_i32_274 = arith.constant 4 : i32
    %498 = arith.muli %arg1, %c4_i32_274 : i32
    %c3_i32_275 = arith.constant 3 : i32
    %499 = arith.addi %498, %c3_i32_275 : i32
    %c4_i32_276 = arith.constant 4 : i32
    %500 = arith.muli %499, %c4_i32_276 : i32
    %c1_i32_277 = arith.constant 1 : i32
    %501 = arith.addi %500, %c1_i32_277 : i32
    %c9_i32_278 = arith.constant 9 : i32
    %502 = arith.muli %501, %c9_i32_278 : i32
    %c0_i32_279 = arith.constant 0 : i32
    %503 = arith.addi %502, %c0_i32_279 : i32
    %c0_i32_280 = arith.constant 0 : i32
    %504 = arith.addi %503, %c0_i32_280 : i32
    %505 = arith.index_cast %504 : i32 to index
    %506 = memref.load %arg3[%505] : memref<288xf32, #tpu.memory_space<smem>>
    %507 = vector.broadcast %506 : f32 to vector<16x16xf32>
    %508 = arith.mulf %507, %461 : vector<16x16xf32>
    %509 = arith.addf %459, %508 : vector<16x16xf32>
    %510 = vector.extract_strided_slice %5 {offsets = [1, 7, 1], sizes = [1, 16, 16], strides = [1, 1, 1]} : vector<4x32x18xf32> to vector<1x16x16xf32>
    %511 = vector.shape_cast %510 : vector<1x16x16xf32> to vector<16x16xf32>
    %c4_i32_281 = arith.constant 4 : i32
    %512 = arith.muli %arg1, %c4_i32_281 : i32
    %c0_i32_282 = arith.constant 0 : i32
    %513 = arith.addi %512, %c0_i32_282 : i32
    %c4_i32_283 = arith.constant 4 : i32
    %514 = arith.muli %513, %c4_i32_283 : i32
    %c1_i32_284 = arith.constant 1 : i32
    %515 = arith.addi %514, %c1_i32_284 : i32
    %c9_i32_285 = arith.constant 9 : i32
    %516 = arith.muli %515, %c9_i32_285 : i32
    %c0_i32_286 = arith.constant 0 : i32
    %517 = arith.addi %516, %c0_i32_286 : i32
    %c1_i32_287 = arith.constant 1 : i32
    %518 = arith.addi %517, %c1_i32_287 : i32
    %519 = arith.index_cast %518 : i32 to index
    %520 = memref.load %arg3[%519] : memref<288xf32, #tpu.memory_space<smem>>
    %521 = vector.broadcast %520 : f32 to vector<16x16xf32>
    %522 = arith.mulf %521, %511 : vector<16x16xf32>
    %523 = arith.addf %473, %522 : vector<16x16xf32>
    %c4_i32_288 = arith.constant 4 : i32
    %524 = arith.muli %arg1, %c4_i32_288 : i32
    %c1_i32_289 = arith.constant 1 : i32
    %525 = arith.addi %524, %c1_i32_289 : i32
    %c4_i32_290 = arith.constant 4 : i32
    %526 = arith.muli %525, %c4_i32_290 : i32
    %c1_i32_291 = arith.constant 1 : i32
    %527 = arith.addi %526, %c1_i32_291 : i32
    %c9_i32_292 = arith.constant 9 : i32
    %528 = arith.muli %527, %c9_i32_292 : i32
    %c0_i32_293 = arith.constant 0 : i32
    %529 = arith.addi %528, %c0_i32_293 : i32
    %c1_i32_294 = arith.constant 1 : i32
    %530 = arith.addi %529, %c1_i32_294 : i32
    %531 = arith.index_cast %530 : i32 to index
    %532 = memref.load %arg3[%531] : memref<288xf32, #tpu.memory_space<smem>>
    %533 = vector.broadcast %532 : f32 to vector<16x16xf32>
    %534 = arith.mulf %533, %511 : vector<16x16xf32>
    %535 = arith.addf %485, %534 : vector<16x16xf32>
    %c4_i32_295 = arith.constant 4 : i32
    %536 = arith.muli %arg1, %c4_i32_295 : i32
    %c2_i32_296 = arith.constant 2 : i32
    %537 = arith.addi %536, %c2_i32_296 : i32
    %c4_i32_297 = arith.constant 4 : i32
    %538 = arith.muli %537, %c4_i32_297 : i32
    %c1_i32_298 = arith.constant 1 : i32
    %539 = arith.addi %538, %c1_i32_298 : i32
    %c9_i32_299 = arith.constant 9 : i32
    %540 = arith.muli %539, %c9_i32_299 : i32
    %c0_i32_300 = arith.constant 0 : i32
    %541 = arith.addi %540, %c0_i32_300 : i32
    %c1_i32_301 = arith.constant 1 : i32
    %542 = arith.addi %541, %c1_i32_301 : i32
    %543 = arith.index_cast %542 : i32 to index
    %544 = memref.load %arg3[%543] : memref<288xf32, #tpu.memory_space<smem>>
    %545 = vector.broadcast %544 : f32 to vector<16x16xf32>
    %546 = arith.mulf %545, %511 : vector<16x16xf32>
    %547 = arith.addf %497, %546 : vector<16x16xf32>
    %c4_i32_302 = arith.constant 4 : i32
    %548 = arith.muli %arg1, %c4_i32_302 : i32
    %c3_i32_303 = arith.constant 3 : i32
    %549 = arith.addi %548, %c3_i32_303 : i32
    %c4_i32_304 = arith.constant 4 : i32
    %550 = arith.muli %549, %c4_i32_304 : i32
    %c1_i32_305 = arith.constant 1 : i32
    %551 = arith.addi %550, %c1_i32_305 : i32
    %c9_i32_306 = arith.constant 9 : i32
    %552 = arith.muli %551, %c9_i32_306 : i32
    %c0_i32_307 = arith.constant 0 : i32
    %553 = arith.addi %552, %c0_i32_307 : i32
    %c1_i32_308 = arith.constant 1 : i32
    %554 = arith.addi %553, %c1_i32_308 : i32
    %555 = arith.index_cast %554 : i32 to index
    %556 = memref.load %arg3[%555] : memref<288xf32, #tpu.memory_space<smem>>
    %557 = vector.broadcast %556 : f32 to vector<16x16xf32>
    %558 = arith.mulf %557, %511 : vector<16x16xf32>
    %559 = arith.addf %509, %558 : vector<16x16xf32>
    %560 = vector.extract_strided_slice %5 {offsets = [1, 7, 2], sizes = [1, 16, 16], strides = [1, 1, 1]} : vector<4x32x18xf32> to vector<1x16x16xf32>
    %561 = vector.shape_cast %560 : vector<1x16x16xf32> to vector<16x16xf32>
    %c4_i32_309 = arith.constant 4 : i32
    %562 = arith.muli %arg1, %c4_i32_309 : i32
    %c0_i32_310 = arith.constant 0 : i32
    %563 = arith.addi %562, %c0_i32_310 : i32
    %c4_i32_311 = arith.constant 4 : i32
    %564 = arith.muli %563, %c4_i32_311 : i32
    %c1_i32_312 = arith.constant 1 : i32
    %565 = arith.addi %564, %c1_i32_312 : i32
    %c9_i32_313 = arith.constant 9 : i32
    %566 = arith.muli %565, %c9_i32_313 : i32
    %c0_i32_314 = arith.constant 0 : i32
    %567 = arith.addi %566, %c0_i32_314 : i32
    %c2_i32_315 = arith.constant 2 : i32
    %568 = arith.addi %567, %c2_i32_315 : i32
    %569 = arith.index_cast %568 : i32 to index
    %570 = memref.load %arg3[%569] : memref<288xf32, #tpu.memory_space<smem>>
    %571 = vector.broadcast %570 : f32 to vector<16x16xf32>
    %572 = arith.mulf %571, %561 : vector<16x16xf32>
    %573 = arith.addf %523, %572 : vector<16x16xf32>
    %c4_i32_316 = arith.constant 4 : i32
    %574 = arith.muli %arg1, %c4_i32_316 : i32
    %c1_i32_317 = arith.constant 1 : i32
    %575 = arith.addi %574, %c1_i32_317 : i32
    %c4_i32_318 = arith.constant 4 : i32
    %576 = arith.muli %575, %c4_i32_318 : i32
    %c1_i32_319 = arith.constant 1 : i32
    %577 = arith.addi %576, %c1_i32_319 : i32
    %c9_i32_320 = arith.constant 9 : i32
    %578 = arith.muli %577, %c9_i32_320 : i32
    %c0_i32_321 = arith.constant 0 : i32
    %579 = arith.addi %578, %c0_i32_321 : i32
    %c2_i32_322 = arith.constant 2 : i32
    %580 = arith.addi %579, %c2_i32_322 : i32
    %581 = arith.index_cast %580 : i32 to index
    %582 = memref.load %arg3[%581] : memref<288xf32, #tpu.memory_space<smem>>
    %583 = vector.broadcast %582 : f32 to vector<16x16xf32>
    %584 = arith.mulf %583, %561 : vector<16x16xf32>
    %585 = arith.addf %535, %584 : vector<16x16xf32>
    %c4_i32_323 = arith.constant 4 : i32
    %586 = arith.muli %arg1, %c4_i32_323 : i32
    %c2_i32_324 = arith.constant 2 : i32
    %587 = arith.addi %586, %c2_i32_324 : i32
    %c4_i32_325 = arith.constant 4 : i32
    %588 = arith.muli %587, %c4_i32_325 : i32
    %c1_i32_326 = arith.constant 1 : i32
    %589 = arith.addi %588, %c1_i32_326 : i32
    %c9_i32_327 = arith.constant 9 : i32
    %590 = arith.muli %589, %c9_i32_327 : i32
    %c0_i32_328 = arith.constant 0 : i32
    %591 = arith.addi %590, %c0_i32_328 : i32
    %c2_i32_329 = arith.constant 2 : i32
    %592 = arith.addi %591, %c2_i32_329 : i32
    %593 = arith.index_cast %592 : i32 to index
    %594 = memref.load %arg3[%593] : memref<288xf32, #tpu.memory_space<smem>>
    %595 = vector.broadcast %594 : f32 to vector<16x16xf32>
    %596 = arith.mulf %595, %561 : vector<16x16xf32>
    %597 = arith.addf %547, %596 : vector<16x16xf32>
    %c4_i32_330 = arith.constant 4 : i32
    %598 = arith.muli %arg1, %c4_i32_330 : i32
    %c3_i32_331 = arith.constant 3 : i32
    %599 = arith.addi %598, %c3_i32_331 : i32
    %c4_i32_332 = arith.constant 4 : i32
    %600 = arith.muli %599, %c4_i32_332 : i32
    %c1_i32_333 = arith.constant 1 : i32
    %601 = arith.addi %600, %c1_i32_333 : i32
    %c9_i32_334 = arith.constant 9 : i32
    %602 = arith.muli %601, %c9_i32_334 : i32
    %c0_i32_335 = arith.constant 0 : i32
    %603 = arith.addi %602, %c0_i32_335 : i32
    %c2_i32_336 = arith.constant 2 : i32
    %604 = arith.addi %603, %c2_i32_336 : i32
    %605 = arith.index_cast %604 : i32 to index
    %606 = memref.load %arg3[%605] : memref<288xf32, #tpu.memory_space<smem>>
    %607 = vector.broadcast %606 : f32 to vector<16x16xf32>
    %608 = arith.mulf %607, %561 : vector<16x16xf32>
    %609 = arith.addf %559, %608 : vector<16x16xf32>
    %610 = vector.extract_strided_slice %5 {offsets = [1, 8, 0], sizes = [1, 16, 16], strides = [1, 1, 1]} : vector<4x32x18xf32> to vector<1x16x16xf32>
    %611 = vector.shape_cast %610 : vector<1x16x16xf32> to vector<16x16xf32>
    %c4_i32_337 = arith.constant 4 : i32
    %612 = arith.muli %arg1, %c4_i32_337 : i32
    %c0_i32_338 = arith.constant 0 : i32
    %613 = arith.addi %612, %c0_i32_338 : i32
    %c4_i32_339 = arith.constant 4 : i32
    %614 = arith.muli %613, %c4_i32_339 : i32
    %c1_i32_340 = arith.constant 1 : i32
    %615 = arith.addi %614, %c1_i32_340 : i32
    %c9_i32_341 = arith.constant 9 : i32
    %616 = arith.muli %615, %c9_i32_341 : i32
    %c3_i32_342 = arith.constant 3 : i32
    %617 = arith.addi %616, %c3_i32_342 : i32
    %c0_i32_343 = arith.constant 0 : i32
    %618 = arith.addi %617, %c0_i32_343 : i32
    %619 = arith.index_cast %618 : i32 to index
    %620 = memref.load %arg3[%619] : memref<288xf32, #tpu.memory_space<smem>>
    %621 = vector.broadcast %620 : f32 to vector<16x16xf32>
    %622 = arith.mulf %621, %611 : vector<16x16xf32>
    %623 = arith.addf %573, %622 : vector<16x16xf32>
    %c4_i32_344 = arith.constant 4 : i32
    %624 = arith.muli %arg1, %c4_i32_344 : i32
    %c1_i32_345 = arith.constant 1 : i32
    %625 = arith.addi %624, %c1_i32_345 : i32
    %c4_i32_346 = arith.constant 4 : i32
    %626 = arith.muli %625, %c4_i32_346 : i32
    %c1_i32_347 = arith.constant 1 : i32
    %627 = arith.addi %626, %c1_i32_347 : i32
    %c9_i32_348 = arith.constant 9 : i32
    %628 = arith.muli %627, %c9_i32_348 : i32
    %c3_i32_349 = arith.constant 3 : i32
    %629 = arith.addi %628, %c3_i32_349 : i32
    %c0_i32_350 = arith.constant 0 : i32
    %630 = arith.addi %629, %c0_i32_350 : i32
    %631 = arith.index_cast %630 : i32 to index
    %632 = memref.load %arg3[%631] : memref<288xf32, #tpu.memory_space<smem>>
    %633 = vector.broadcast %632 : f32 to vector<16x16xf32>
    %634 = arith.mulf %633, %611 : vector<16x16xf32>
    %635 = arith.addf %585, %634 : vector<16x16xf32>
    %c4_i32_351 = arith.constant 4 : i32
    %636 = arith.muli %arg1, %c4_i32_351 : i32
    %c2_i32_352 = arith.constant 2 : i32
    %637 = arith.addi %636, %c2_i32_352 : i32
    %c4_i32_353 = arith.constant 4 : i32
    %638 = arith.muli %637, %c4_i32_353 : i32
    %c1_i32_354 = arith.constant 1 : i32
    %639 = arith.addi %638, %c1_i32_354 : i32
    %c9_i32_355 = arith.constant 9 : i32
    %640 = arith.muli %639, %c9_i32_355 : i32
    %c3_i32_356 = arith.constant 3 : i32
    %641 = arith.addi %640, %c3_i32_356 : i32
    %c0_i32_357 = arith.constant 0 : i32
    %642 = arith.addi %641, %c0_i32_357 : i32
    %643 = arith.index_cast %642 : i32 to index
    %644 = memref.load %arg3[%643] : memref<288xf32, #tpu.memory_space<smem>>
    %645 = vector.broadcast %644 : f32 to vector<16x16xf32>
    %646 = arith.mulf %645, %611 : vector<16x16xf32>
    %647 = arith.addf %597, %646 : vector<16x16xf32>
    %c4_i32_358 = arith.constant 4 : i32
    %648 = arith.muli %arg1, %c4_i32_358 : i32
    %c3_i32_359 = arith.constant 3 : i32
    %649 = arith.addi %648, %c3_i32_359 : i32
    %c4_i32_360 = arith.constant 4 : i32
    %650 = arith.muli %649, %c4_i32_360 : i32
    %c1_i32_361 = arith.constant 1 : i32
    %651 = arith.addi %650, %c1_i32_361 : i32
    %c9_i32_362 = arith.constant 9 : i32
    %652 = arith.muli %651, %c9_i32_362 : i32
    %c3_i32_363 = arith.constant 3 : i32
    %653 = arith.addi %652, %c3_i32_363 : i32
    %c0_i32_364 = arith.constant 0 : i32
    %654 = arith.addi %653, %c0_i32_364 : i32
    %655 = arith.index_cast %654 : i32 to index
    %656 = memref.load %arg3[%655] : memref<288xf32, #tpu.memory_space<smem>>
    %657 = vector.broadcast %656 : f32 to vector<16x16xf32>
    %658 = arith.mulf %657, %611 : vector<16x16xf32>
    %659 = arith.addf %609, %658 : vector<16x16xf32>
    %660 = vector.extract_strided_slice %5 {offsets = [1, 8, 1], sizes = [1, 16, 16], strides = [1, 1, 1]} : vector<4x32x18xf32> to vector<1x16x16xf32>
    %661 = vector.shape_cast %660 : vector<1x16x16xf32> to vector<16x16xf32>
    %c4_i32_365 = arith.constant 4 : i32
    %662 = arith.muli %arg1, %c4_i32_365 : i32
    %c0_i32_366 = arith.constant 0 : i32
    %663 = arith.addi %662, %c0_i32_366 : i32
    %c4_i32_367 = arith.constant 4 : i32
    %664 = arith.muli %663, %c4_i32_367 : i32
    %c1_i32_368 = arith.constant 1 : i32
    %665 = arith.addi %664, %c1_i32_368 : i32
    %c9_i32_369 = arith.constant 9 : i32
    %666 = arith.muli %665, %c9_i32_369 : i32
    %c3_i32_370 = arith.constant 3 : i32
    %667 = arith.addi %666, %c3_i32_370 : i32
    %c1_i32_371 = arith.constant 1 : i32
    %668 = arith.addi %667, %c1_i32_371 : i32
    %669 = arith.index_cast %668 : i32 to index
    %670 = memref.load %arg3[%669] : memref<288xf32, #tpu.memory_space<smem>>
    %671 = vector.broadcast %670 : f32 to vector<16x16xf32>
    %672 = arith.mulf %671, %661 : vector<16x16xf32>
    %673 = arith.addf %623, %672 : vector<16x16xf32>
    %c4_i32_372 = arith.constant 4 : i32
    %674 = arith.muli %arg1, %c4_i32_372 : i32
    %c1_i32_373 = arith.constant 1 : i32
    %675 = arith.addi %674, %c1_i32_373 : i32
    %c4_i32_374 = arith.constant 4 : i32
    %676 = arith.muli %675, %c4_i32_374 : i32
    %c1_i32_375 = arith.constant 1 : i32
    %677 = arith.addi %676, %c1_i32_375 : i32
    %c9_i32_376 = arith.constant 9 : i32
    %678 = arith.muli %677, %c9_i32_376 : i32
    %c3_i32_377 = arith.constant 3 : i32
    %679 = arith.addi %678, %c3_i32_377 : i32
    %c1_i32_378 = arith.constant 1 : i32
    %680 = arith.addi %679, %c1_i32_378 : i32
    %681 = arith.index_cast %680 : i32 to index
    %682 = memref.load %arg3[%681] : memref<288xf32, #tpu.memory_space<smem>>
    %683 = vector.broadcast %682 : f32 to vector<16x16xf32>
    %684 = arith.mulf %683, %661 : vector<16x16xf32>
    %685 = arith.addf %635, %684 : vector<16x16xf32>
    %c4_i32_379 = arith.constant 4 : i32
    %686 = arith.muli %arg1, %c4_i32_379 : i32
    %c2_i32_380 = arith.constant 2 : i32
    %687 = arith.addi %686, %c2_i32_380 : i32
    %c4_i32_381 = arith.constant 4 : i32
    %688 = arith.muli %687, %c4_i32_381 : i32
    %c1_i32_382 = arith.constant 1 : i32
    %689 = arith.addi %688, %c1_i32_382 : i32
    %c9_i32_383 = arith.constant 9 : i32
    %690 = arith.muli %689, %c9_i32_383 : i32
    %c3_i32_384 = arith.constant 3 : i32
    %691 = arith.addi %690, %c3_i32_384 : i32
    %c1_i32_385 = arith.constant 1 : i32
    %692 = arith.addi %691, %c1_i32_385 : i32
    %693 = arith.index_cast %692 : i32 to index
    %694 = memref.load %arg3[%693] : memref<288xf32, #tpu.memory_space<smem>>
    %695 = vector.broadcast %694 : f32 to vector<16x16xf32>
    %696 = arith.mulf %695, %661 : vector<16x16xf32>
    %697 = arith.addf %647, %696 : vector<16x16xf32>
    %c4_i32_386 = arith.constant 4 : i32
    %698 = arith.muli %arg1, %c4_i32_386 : i32
    %c3_i32_387 = arith.constant 3 : i32
    %699 = arith.addi %698, %c3_i32_387 : i32
    %c4_i32_388 = arith.constant 4 : i32
    %700 = arith.muli %699, %c4_i32_388 : i32
    %c1_i32_389 = arith.constant 1 : i32
    %701 = arith.addi %700, %c1_i32_389 : i32
    %c9_i32_390 = arith.constant 9 : i32
    %702 = arith.muli %701, %c9_i32_390 : i32
    %c3_i32_391 = arith.constant 3 : i32
    %703 = arith.addi %702, %c3_i32_391 : i32
    %c1_i32_392 = arith.constant 1 : i32
    %704 = arith.addi %703, %c1_i32_392 : i32
    %705 = arith.index_cast %704 : i32 to index
    %706 = memref.load %arg3[%705] : memref<288xf32, #tpu.memory_space<smem>>
    %707 = vector.broadcast %706 : f32 to vector<16x16xf32>
    %708 = arith.mulf %707, %661 : vector<16x16xf32>
    %709 = arith.addf %659, %708 : vector<16x16xf32>
    %710 = vector.extract_strided_slice %5 {offsets = [1, 8, 2], sizes = [1, 16, 16], strides = [1, 1, 1]} : vector<4x32x18xf32> to vector<1x16x16xf32>
    %711 = vector.shape_cast %710 : vector<1x16x16xf32> to vector<16x16xf32>
    %c4_i32_393 = arith.constant 4 : i32
    %712 = arith.muli %arg1, %c4_i32_393 : i32
    %c0_i32_394 = arith.constant 0 : i32
    %713 = arith.addi %712, %c0_i32_394 : i32
    %c4_i32_395 = arith.constant 4 : i32
    %714 = arith.muli %713, %c4_i32_395 : i32
    %c1_i32_396 = arith.constant 1 : i32
    %715 = arith.addi %714, %c1_i32_396 : i32
    %c9_i32_397 = arith.constant 9 : i32
    %716 = arith.muli %715, %c9_i32_397 : i32
    %c3_i32_398 = arith.constant 3 : i32
    %717 = arith.addi %716, %c3_i32_398 : i32
    %c2_i32_399 = arith.constant 2 : i32
    %718 = arith.addi %717, %c2_i32_399 : i32
    %719 = arith.index_cast %718 : i32 to index
    %720 = memref.load %arg3[%719] : memref<288xf32, #tpu.memory_space<smem>>
    %721 = vector.broadcast %720 : f32 to vector<16x16xf32>
    %722 = arith.mulf %721, %711 : vector<16x16xf32>
    %723 = arith.addf %673, %722 : vector<16x16xf32>
    %c4_i32_400 = arith.constant 4 : i32
    %724 = arith.muli %arg1, %c4_i32_400 : i32
    %c1_i32_401 = arith.constant 1 : i32
    %725 = arith.addi %724, %c1_i32_401 : i32
    %c4_i32_402 = arith.constant 4 : i32
    %726 = arith.muli %725, %c4_i32_402 : i32
    %c1_i32_403 = arith.constant 1 : i32
    %727 = arith.addi %726, %c1_i32_403 : i32
    %c9_i32_404 = arith.constant 9 : i32
    %728 = arith.muli %727, %c9_i32_404 : i32
    %c3_i32_405 = arith.constant 3 : i32
    %729 = arith.addi %728, %c3_i32_405 : i32
    %c2_i32_406 = arith.constant 2 : i32
    %730 = arith.addi %729, %c2_i32_406 : i32
    %731 = arith.index_cast %730 : i32 to index
    %732 = memref.load %arg3[%731] : memref<288xf32, #tpu.memory_space<smem>>
    %733 = vector.broadcast %732 : f32 to vector<16x16xf32>
    %734 = arith.mulf %733, %711 : vector<16x16xf32>
    %735 = arith.addf %685, %734 : vector<16x16xf32>
    %c4_i32_407 = arith.constant 4 : i32
    %736 = arith.muli %arg1, %c4_i32_407 : i32
    %c2_i32_408 = arith.constant 2 : i32
    %737 = arith.addi %736, %c2_i32_408 : i32
    %c4_i32_409 = arith.constant 4 : i32
    %738 = arith.muli %737, %c4_i32_409 : i32
    %c1_i32_410 = arith.constant 1 : i32
    %739 = arith.addi %738, %c1_i32_410 : i32
    %c9_i32_411 = arith.constant 9 : i32
    %740 = arith.muli %739, %c9_i32_411 : i32
    %c3_i32_412 = arith.constant 3 : i32
    %741 = arith.addi %740, %c3_i32_412 : i32
    %c2_i32_413 = arith.constant 2 : i32
    %742 = arith.addi %741, %c2_i32_413 : i32
    %743 = arith.index_cast %742 : i32 to index
    %744 = memref.load %arg3[%743] : memref<288xf32, #tpu.memory_space<smem>>
    %745 = vector.broadcast %744 : f32 to vector<16x16xf32>
    %746 = arith.mulf %745, %711 : vector<16x16xf32>
    %747 = arith.addf %697, %746 : vector<16x16xf32>
    %c4_i32_414 = arith.constant 4 : i32
    %748 = arith.muli %arg1, %c4_i32_414 : i32
    %c3_i32_415 = arith.constant 3 : i32
    %749 = arith.addi %748, %c3_i32_415 : i32
    %c4_i32_416 = arith.constant 4 : i32
    %750 = arith.muli %749, %c4_i32_416 : i32
    %c1_i32_417 = arith.constant 1 : i32
    %751 = arith.addi %750, %c1_i32_417 : i32
    %c9_i32_418 = arith.constant 9 : i32
    %752 = arith.muli %751, %c9_i32_418 : i32
    %c3_i32_419 = arith.constant 3 : i32
    %753 = arith.addi %752, %c3_i32_419 : i32
    %c2_i32_420 = arith.constant 2 : i32
    %754 = arith.addi %753, %c2_i32_420 : i32
    %755 = arith.index_cast %754 : i32 to index
    %756 = memref.load %arg3[%755] : memref<288xf32, #tpu.memory_space<smem>>
    %757 = vector.broadcast %756 : f32 to vector<16x16xf32>
    %758 = arith.mulf %757, %711 : vector<16x16xf32>
    %759 = arith.addf %709, %758 : vector<16x16xf32>
    %760 = vector.extract_strided_slice %5 {offsets = [1, 9, 0], sizes = [1, 16, 16], strides = [1, 1, 1]} : vector<4x32x18xf32> to vector<1x16x16xf32>
    %761 = vector.shape_cast %760 : vector<1x16x16xf32> to vector<16x16xf32>
    %c4_i32_421 = arith.constant 4 : i32
    %762 = arith.muli %arg1, %c4_i32_421 : i32
    %c0_i32_422 = arith.constant 0 : i32
    %763 = arith.addi %762, %c0_i32_422 : i32
    %c4_i32_423 = arith.constant 4 : i32
    %764 = arith.muli %763, %c4_i32_423 : i32
    %c1_i32_424 = arith.constant 1 : i32
    %765 = arith.addi %764, %c1_i32_424 : i32
    %c9_i32_425 = arith.constant 9 : i32
    %766 = arith.muli %765, %c9_i32_425 : i32
    %c6_i32_426 = arith.constant 6 : i32
    %767 = arith.addi %766, %c6_i32_426 : i32
    %c0_i32_427 = arith.constant 0 : i32
    %768 = arith.addi %767, %c0_i32_427 : i32
    %769 = arith.index_cast %768 : i32 to index
    %770 = memref.load %arg3[%769] : memref<288xf32, #tpu.memory_space<smem>>
    %771 = vector.broadcast %770 : f32 to vector<16x16xf32>
    %772 = arith.mulf %771, %761 : vector<16x16xf32>
    %773 = arith.addf %723, %772 : vector<16x16xf32>
    %c4_i32_428 = arith.constant 4 : i32
    %774 = arith.muli %arg1, %c4_i32_428 : i32
    %c1_i32_429 = arith.constant 1 : i32
    %775 = arith.addi %774, %c1_i32_429 : i32
    %c4_i32_430 = arith.constant 4 : i32
    %776 = arith.muli %775, %c4_i32_430 : i32
    %c1_i32_431 = arith.constant 1 : i32
    %777 = arith.addi %776, %c1_i32_431 : i32
    %c9_i32_432 = arith.constant 9 : i32
    %778 = arith.muli %777, %c9_i32_432 : i32
    %c6_i32_433 = arith.constant 6 : i32
    %779 = arith.addi %778, %c6_i32_433 : i32
    %c0_i32_434 = arith.constant 0 : i32
    %780 = arith.addi %779, %c0_i32_434 : i32
    %781 = arith.index_cast %780 : i32 to index
    %782 = memref.load %arg3[%781] : memref<288xf32, #tpu.memory_space<smem>>
    %783 = vector.broadcast %782 : f32 to vector<16x16xf32>
    %784 = arith.mulf %783, %761 : vector<16x16xf32>
    %785 = arith.addf %735, %784 : vector<16x16xf32>
    %c4_i32_435 = arith.constant 4 : i32
    %786 = arith.muli %arg1, %c4_i32_435 : i32
    %c2_i32_436 = arith.constant 2 : i32
    %787 = arith.addi %786, %c2_i32_436 : i32
    %c4_i32_437 = arith.constant 4 : i32
    %788 = arith.muli %787, %c4_i32_437 : i32
    %c1_i32_438 = arith.constant 1 : i32
    %789 = arith.addi %788, %c1_i32_438 : i32
    %c9_i32_439 = arith.constant 9 : i32
    %790 = arith.muli %789, %c9_i32_439 : i32
    %c6_i32_440 = arith.constant 6 : i32
    %791 = arith.addi %790, %c6_i32_440 : i32
    %c0_i32_441 = arith.constant 0 : i32
    %792 = arith.addi %791, %c0_i32_441 : i32
    %793 = arith.index_cast %792 : i32 to index
    %794 = memref.load %arg3[%793] : memref<288xf32, #tpu.memory_space<smem>>
    %795 = vector.broadcast %794 : f32 to vector<16x16xf32>
    %796 = arith.mulf %795, %761 : vector<16x16xf32>
    %797 = arith.addf %747, %796 : vector<16x16xf32>
    %c4_i32_442 = arith.constant 4 : i32
    %798 = arith.muli %arg1, %c4_i32_442 : i32
    %c3_i32_443 = arith.constant 3 : i32
    %799 = arith.addi %798, %c3_i32_443 : i32
    %c4_i32_444 = arith.constant 4 : i32
    %800 = arith.muli %799, %c4_i32_444 : i32
    %c1_i32_445 = arith.constant 1 : i32
    %801 = arith.addi %800, %c1_i32_445 : i32
    %c9_i32_446 = arith.constant 9 : i32
    %802 = arith.muli %801, %c9_i32_446 : i32
    %c6_i32_447 = arith.constant 6 : i32
    %803 = arith.addi %802, %c6_i32_447 : i32
    %c0_i32_448 = arith.constant 0 : i32
    %804 = arith.addi %803, %c0_i32_448 : i32
    %805 = arith.index_cast %804 : i32 to index
    %806 = memref.load %arg3[%805] : memref<288xf32, #tpu.memory_space<smem>>
    %807 = vector.broadcast %806 : f32 to vector<16x16xf32>
    %808 = arith.mulf %807, %761 : vector<16x16xf32>
    %809 = arith.addf %759, %808 : vector<16x16xf32>
    %810 = vector.extract_strided_slice %5 {offsets = [1, 9, 1], sizes = [1, 16, 16], strides = [1, 1, 1]} : vector<4x32x18xf32> to vector<1x16x16xf32>
    %811 = vector.shape_cast %810 : vector<1x16x16xf32> to vector<16x16xf32>
    %c4_i32_449 = arith.constant 4 : i32
    %812 = arith.muli %arg1, %c4_i32_449 : i32
    %c0_i32_450 = arith.constant 0 : i32
    %813 = arith.addi %812, %c0_i32_450 : i32
    %c4_i32_451 = arith.constant 4 : i32
    %814 = arith.muli %813, %c4_i32_451 : i32
    %c1_i32_452 = arith.constant 1 : i32
    %815 = arith.addi %814, %c1_i32_452 : i32
    %c9_i32_453 = arith.constant 9 : i32
    %816 = arith.muli %815, %c9_i32_453 : i32
    %c6_i32_454 = arith.constant 6 : i32
    %817 = arith.addi %816, %c6_i32_454 : i32
    %c1_i32_455 = arith.constant 1 : i32
    %818 = arith.addi %817, %c1_i32_455 : i32
    %819 = arith.index_cast %818 : i32 to index
    %820 = memref.load %arg3[%819] : memref<288xf32, #tpu.memory_space<smem>>
    %821 = vector.broadcast %820 : f32 to vector<16x16xf32>
    %822 = arith.mulf %821, %811 : vector<16x16xf32>
    %823 = arith.addf %773, %822 : vector<16x16xf32>
    %c4_i32_456 = arith.constant 4 : i32
    %824 = arith.muli %arg1, %c4_i32_456 : i32
    %c1_i32_457 = arith.constant 1 : i32
    %825 = arith.addi %824, %c1_i32_457 : i32
    %c4_i32_458 = arith.constant 4 : i32
    %826 = arith.muli %825, %c4_i32_458 : i32
    %c1_i32_459 = arith.constant 1 : i32
    %827 = arith.addi %826, %c1_i32_459 : i32
    %c9_i32_460 = arith.constant 9 : i32
    %828 = arith.muli %827, %c9_i32_460 : i32
    %c6_i32_461 = arith.constant 6 : i32
    %829 = arith.addi %828, %c6_i32_461 : i32
    %c1_i32_462 = arith.constant 1 : i32
    %830 = arith.addi %829, %c1_i32_462 : i32
    %831 = arith.index_cast %830 : i32 to index
    %832 = memref.load %arg3[%831] : memref<288xf32, #tpu.memory_space<smem>>
    %833 = vector.broadcast %832 : f32 to vector<16x16xf32>
    %834 = arith.mulf %833, %811 : vector<16x16xf32>
    %835 = arith.addf %785, %834 : vector<16x16xf32>
    %c4_i32_463 = arith.constant 4 : i32
    %836 = arith.muli %arg1, %c4_i32_463 : i32
    %c2_i32_464 = arith.constant 2 : i32
    %837 = arith.addi %836, %c2_i32_464 : i32
    %c4_i32_465 = arith.constant 4 : i32
    %838 = arith.muli %837, %c4_i32_465 : i32
    %c1_i32_466 = arith.constant 1 : i32
    %839 = arith.addi %838, %c1_i32_466 : i32
    %c9_i32_467 = arith.constant 9 : i32
    %840 = arith.muli %839, %c9_i32_467 : i32
    %c6_i32_468 = arith.constant 6 : i32
    %841 = arith.addi %840, %c6_i32_468 : i32
    %c1_i32_469 = arith.constant 1 : i32
    %842 = arith.addi %841, %c1_i32_469 : i32
    %843 = arith.index_cast %842 : i32 to index
    %844 = memref.load %arg3[%843] : memref<288xf32, #tpu.memory_space<smem>>
    %845 = vector.broadcast %844 : f32 to vector<16x16xf32>
    %846 = arith.mulf %845, %811 : vector<16x16xf32>
    %847 = arith.addf %797, %846 : vector<16x16xf32>
    %c4_i32_470 = arith.constant 4 : i32
    %848 = arith.muli %arg1, %c4_i32_470 : i32
    %c3_i32_471 = arith.constant 3 : i32
    %849 = arith.addi %848, %c3_i32_471 : i32
    %c4_i32_472 = arith.constant 4 : i32
    %850 = arith.muli %849, %c4_i32_472 : i32
    %c1_i32_473 = arith.constant 1 : i32
    %851 = arith.addi %850, %c1_i32_473 : i32
    %c9_i32_474 = arith.constant 9 : i32
    %852 = arith.muli %851, %c9_i32_474 : i32
    %c6_i32_475 = arith.constant 6 : i32
    %853 = arith.addi %852, %c6_i32_475 : i32
    %c1_i32_476 = arith.constant 1 : i32
    %854 = arith.addi %853, %c1_i32_476 : i32
    %855 = arith.index_cast %854 : i32 to index
    %856 = memref.load %arg3[%855] : memref<288xf32, #tpu.memory_space<smem>>
    %857 = vector.broadcast %856 : f32 to vector<16x16xf32>
    %858 = arith.mulf %857, %811 : vector<16x16xf32>
    %859 = arith.addf %809, %858 : vector<16x16xf32>
    %860 = vector.extract_strided_slice %5 {offsets = [1, 9, 2], sizes = [1, 16, 16], strides = [1, 1, 1]} : vector<4x32x18xf32> to vector<1x16x16xf32>
    %861 = vector.shape_cast %860 : vector<1x16x16xf32> to vector<16x16xf32>
    %c4_i32_477 = arith.constant 4 : i32
    %862 = arith.muli %arg1, %c4_i32_477 : i32
    %c0_i32_478 = arith.constant 0 : i32
    %863 = arith.addi %862, %c0_i32_478 : i32
    %c4_i32_479 = arith.constant 4 : i32
    %864 = arith.muli %863, %c4_i32_479 : i32
    %c1_i32_480 = arith.constant 1 : i32
    %865 = arith.addi %864, %c1_i32_480 : i32
    %c9_i32_481 = arith.constant 9 : i32
    %866 = arith.muli %865, %c9_i32_481 : i32
    %c6_i32_482 = arith.constant 6 : i32
    %867 = arith.addi %866, %c6_i32_482 : i32
    %c2_i32_483 = arith.constant 2 : i32
    %868 = arith.addi %867, %c2_i32_483 : i32
    %869 = arith.index_cast %868 : i32 to index
    %870 = memref.load %arg3[%869] : memref<288xf32, #tpu.memory_space<smem>>
    %871 = vector.broadcast %870 : f32 to vector<16x16xf32>
    %872 = arith.mulf %871, %861 : vector<16x16xf32>
    %873 = arith.addf %823, %872 : vector<16x16xf32>
    %c4_i32_484 = arith.constant 4 : i32
    %874 = arith.muli %arg1, %c4_i32_484 : i32
    %c1_i32_485 = arith.constant 1 : i32
    %875 = arith.addi %874, %c1_i32_485 : i32
    %c4_i32_486 = arith.constant 4 : i32
    %876 = arith.muli %875, %c4_i32_486 : i32
    %c1_i32_487 = arith.constant 1 : i32
    %877 = arith.addi %876, %c1_i32_487 : i32
    %c9_i32_488 = arith.constant 9 : i32
    %878 = arith.muli %877, %c9_i32_488 : i32
    %c6_i32_489 = arith.constant 6 : i32
    %879 = arith.addi %878, %c6_i32_489 : i32
    %c2_i32_490 = arith.constant 2 : i32
    %880 = arith.addi %879, %c2_i32_490 : i32
    %881 = arith.index_cast %880 : i32 to index
    %882 = memref.load %arg3[%881] : memref<288xf32, #tpu.memory_space<smem>>
    %883 = vector.broadcast %882 : f32 to vector<16x16xf32>
    %884 = arith.mulf %883, %861 : vector<16x16xf32>
    %885 = arith.addf %835, %884 : vector<16x16xf32>
    %c4_i32_491 = arith.constant 4 : i32
    %886 = arith.muli %arg1, %c4_i32_491 : i32
    %c2_i32_492 = arith.constant 2 : i32
    %887 = arith.addi %886, %c2_i32_492 : i32
    %c4_i32_493 = arith.constant 4 : i32
    %888 = arith.muli %887, %c4_i32_493 : i32
    %c1_i32_494 = arith.constant 1 : i32
    %889 = arith.addi %888, %c1_i32_494 : i32
    %c9_i32_495 = arith.constant 9 : i32
    %890 = arith.muli %889, %c9_i32_495 : i32
    %c6_i32_496 = arith.constant 6 : i32
    %891 = arith.addi %890, %c6_i32_496 : i32
    %c2_i32_497 = arith.constant 2 : i32
    %892 = arith.addi %891, %c2_i32_497 : i32
    %893 = arith.index_cast %892 : i32 to index
    %894 = memref.load %arg3[%893] : memref<288xf32, #tpu.memory_space<smem>>
    %895 = vector.broadcast %894 : f32 to vector<16x16xf32>
    %896 = arith.mulf %895, %861 : vector<16x16xf32>
    %897 = arith.addf %847, %896 : vector<16x16xf32>
    %c4_i32_498 = arith.constant 4 : i32
    %898 = arith.muli %arg1, %c4_i32_498 : i32
    %c3_i32_499 = arith.constant 3 : i32
    %899 = arith.addi %898, %c3_i32_499 : i32
    %c4_i32_500 = arith.constant 4 : i32
    %900 = arith.muli %899, %c4_i32_500 : i32
    %c1_i32_501 = arith.constant 1 : i32
    %901 = arith.addi %900, %c1_i32_501 : i32
    %c9_i32_502 = arith.constant 9 : i32
    %902 = arith.muli %901, %c9_i32_502 : i32
    %c6_i32_503 = arith.constant 6 : i32
    %903 = arith.addi %902, %c6_i32_503 : i32
    %c2_i32_504 = arith.constant 2 : i32
    %904 = arith.addi %903, %c2_i32_504 : i32
    %905 = arith.index_cast %904 : i32 to index
    %906 = memref.load %arg3[%905] : memref<288xf32, #tpu.memory_space<smem>>
    %907 = vector.broadcast %906 : f32 to vector<16x16xf32>
    %908 = arith.mulf %907, %861 : vector<16x16xf32>
    %909 = arith.addf %859, %908 : vector<16x16xf32>
    %910 = vector.extract_strided_slice %5 {offsets = [2, 7, 0], sizes = [1, 16, 16], strides = [1, 1, 1]} : vector<4x32x18xf32> to vector<1x16x16xf32>
    %911 = vector.shape_cast %910 : vector<1x16x16xf32> to vector<16x16xf32>
    %c4_i32_505 = arith.constant 4 : i32
    %912 = arith.muli %arg1, %c4_i32_505 : i32
    %c0_i32_506 = arith.constant 0 : i32
    %913 = arith.addi %912, %c0_i32_506 : i32
    %c4_i32_507 = arith.constant 4 : i32
    %914 = arith.muli %913, %c4_i32_507 : i32
    %c2_i32_508 = arith.constant 2 : i32
    %915 = arith.addi %914, %c2_i32_508 : i32
    %c9_i32_509 = arith.constant 9 : i32
    %916 = arith.muli %915, %c9_i32_509 : i32
    %c0_i32_510 = arith.constant 0 : i32
    %917 = arith.addi %916, %c0_i32_510 : i32
    %c0_i32_511 = arith.constant 0 : i32
    %918 = arith.addi %917, %c0_i32_511 : i32
    %919 = arith.index_cast %918 : i32 to index
    %920 = memref.load %arg3[%919] : memref<288xf32, #tpu.memory_space<smem>>
    %921 = vector.broadcast %920 : f32 to vector<16x16xf32>
    %922 = arith.mulf %921, %911 : vector<16x16xf32>
    %923 = arith.addf %873, %922 : vector<16x16xf32>
    %c4_i32_512 = arith.constant 4 : i32
    %924 = arith.muli %arg1, %c4_i32_512 : i32
    %c1_i32_513 = arith.constant 1 : i32
    %925 = arith.addi %924, %c1_i32_513 : i32
    %c4_i32_514 = arith.constant 4 : i32
    %926 = arith.muli %925, %c4_i32_514 : i32
    %c2_i32_515 = arith.constant 2 : i32
    %927 = arith.addi %926, %c2_i32_515 : i32
    %c9_i32_516 = arith.constant 9 : i32
    %928 = arith.muli %927, %c9_i32_516 : i32
    %c0_i32_517 = arith.constant 0 : i32
    %929 = arith.addi %928, %c0_i32_517 : i32
    %c0_i32_518 = arith.constant 0 : i32
    %930 = arith.addi %929, %c0_i32_518 : i32
    %931 = arith.index_cast %930 : i32 to index
    %932 = memref.load %arg3[%931] : memref<288xf32, #tpu.memory_space<smem>>
    %933 = vector.broadcast %932 : f32 to vector<16x16xf32>
    %934 = arith.mulf %933, %911 : vector<16x16xf32>
    %935 = arith.addf %885, %934 : vector<16x16xf32>
    %c4_i32_519 = arith.constant 4 : i32
    %936 = arith.muli %arg1, %c4_i32_519 : i32
    %c2_i32_520 = arith.constant 2 : i32
    %937 = arith.addi %936, %c2_i32_520 : i32
    %c4_i32_521 = arith.constant 4 : i32
    %938 = arith.muli %937, %c4_i32_521 : i32
    %c2_i32_522 = arith.constant 2 : i32
    %939 = arith.addi %938, %c2_i32_522 : i32
    %c9_i32_523 = arith.constant 9 : i32
    %940 = arith.muli %939, %c9_i32_523 : i32
    %c0_i32_524 = arith.constant 0 : i32
    %941 = arith.addi %940, %c0_i32_524 : i32
    %c0_i32_525 = arith.constant 0 : i32
    %942 = arith.addi %941, %c0_i32_525 : i32
    %943 = arith.index_cast %942 : i32 to index
    %944 = memref.load %arg3[%943] : memref<288xf32, #tpu.memory_space<smem>>
    %945 = vector.broadcast %944 : f32 to vector<16x16xf32>
    %946 = arith.mulf %945, %911 : vector<16x16xf32>
    %947 = arith.addf %897, %946 : vector<16x16xf32>
    %c4_i32_526 = arith.constant 4 : i32
    %948 = arith.muli %arg1, %c4_i32_526 : i32
    %c3_i32_527 = arith.constant 3 : i32
    %949 = arith.addi %948, %c3_i32_527 : i32
    %c4_i32_528 = arith.constant 4 : i32
    %950 = arith.muli %949, %c4_i32_528 : i32
    %c2_i32_529 = arith.constant 2 : i32
    %951 = arith.addi %950, %c2_i32_529 : i32
    %c9_i32_530 = arith.constant 9 : i32
    %952 = arith.muli %951, %c9_i32_530 : i32
    %c0_i32_531 = arith.constant 0 : i32
    %953 = arith.addi %952, %c0_i32_531 : i32
    %c0_i32_532 = arith.constant 0 : i32
    %954 = arith.addi %953, %c0_i32_532 : i32
    %955 = arith.index_cast %954 : i32 to index
    %956 = memref.load %arg3[%955] : memref<288xf32, #tpu.memory_space<smem>>
    %957 = vector.broadcast %956 : f32 to vector<16x16xf32>
    %958 = arith.mulf %957, %911 : vector<16x16xf32>
    %959 = arith.addf %909, %958 : vector<16x16xf32>
    %960 = vector.extract_strided_slice %5 {offsets = [2, 7, 1], sizes = [1, 16, 16], strides = [1, 1, 1]} : vector<4x32x18xf32> to vector<1x16x16xf32>
    %961 = vector.shape_cast %960 : vector<1x16x16xf32> to vector<16x16xf32>
    %c4_i32_533 = arith.constant 4 : i32
    %962 = arith.muli %arg1, %c4_i32_533 : i32
    %c0_i32_534 = arith.constant 0 : i32
    %963 = arith.addi %962, %c0_i32_534 : i32
    %c4_i32_535 = arith.constant 4 : i32
    %964 = arith.muli %963, %c4_i32_535 : i32
    %c2_i32_536 = arith.constant 2 : i32
    %965 = arith.addi %964, %c2_i32_536 : i32
    %c9_i32_537 = arith.constant 9 : i32
    %966 = arith.muli %965, %c9_i32_537 : i32
    %c0_i32_538 = arith.constant 0 : i32
    %967 = arith.addi %966, %c0_i32_538 : i32
    %c1_i32_539 = arith.constant 1 : i32
    %968 = arith.addi %967, %c1_i32_539 : i32
    %969 = arith.index_cast %968 : i32 to index
    %970 = memref.load %arg3[%969] : memref<288xf32, #tpu.memory_space<smem>>
    %971 = vector.broadcast %970 : f32 to vector<16x16xf32>
    %972 = arith.mulf %971, %961 : vector<16x16xf32>
    %973 = arith.addf %923, %972 : vector<16x16xf32>
    %c4_i32_540 = arith.constant 4 : i32
    %974 = arith.muli %arg1, %c4_i32_540 : i32
    %c1_i32_541 = arith.constant 1 : i32
    %975 = arith.addi %974, %c1_i32_541 : i32
    %c4_i32_542 = arith.constant 4 : i32
    %976 = arith.muli %975, %c4_i32_542 : i32
    %c2_i32_543 = arith.constant 2 : i32
    %977 = arith.addi %976, %c2_i32_543 : i32
    %c9_i32_544 = arith.constant 9 : i32
    %978 = arith.muli %977, %c9_i32_544 : i32
    %c0_i32_545 = arith.constant 0 : i32
    %979 = arith.addi %978, %c0_i32_545 : i32
    %c1_i32_546 = arith.constant 1 : i32
    %980 = arith.addi %979, %c1_i32_546 : i32
    %981 = arith.index_cast %980 : i32 to index
    %982 = memref.load %arg3[%981] : memref<288xf32, #tpu.memory_space<smem>>
    %983 = vector.broadcast %982 : f32 to vector<16x16xf32>
    %984 = arith.mulf %983, %961 : vector<16x16xf32>
    %985 = arith.addf %935, %984 : vector<16x16xf32>
    %c4_i32_547 = arith.constant 4 : i32
    %986 = arith.muli %arg1, %c4_i32_547 : i32
    %c2_i32_548 = arith.constant 2 : i32
    %987 = arith.addi %986, %c2_i32_548 : i32
    %c4_i32_549 = arith.constant 4 : i32
    %988 = arith.muli %987, %c4_i32_549 : i32
    %c2_i32_550 = arith.constant 2 : i32
    %989 = arith.addi %988, %c2_i32_550 : i32
    %c9_i32_551 = arith.constant 9 : i32
    %990 = arith.muli %989, %c9_i32_551 : i32
    %c0_i32_552 = arith.constant 0 : i32
    %991 = arith.addi %990, %c0_i32_552 : i32
    %c1_i32_553 = arith.constant 1 : i32
    %992 = arith.addi %991, %c1_i32_553 : i32
    %993 = arith.index_cast %992 : i32 to index
    %994 = memref.load %arg3[%993] : memref<288xf32, #tpu.memory_space<smem>>
    %995 = vector.broadcast %994 : f32 to vector<16x16xf32>
    %996 = arith.mulf %995, %961 : vector<16x16xf32>
    %997 = arith.addf %947, %996 : vector<16x16xf32>
    %c4_i32_554 = arith.constant 4 : i32
    %998 = arith.muli %arg1, %c4_i32_554 : i32
    %c3_i32_555 = arith.constant 3 : i32
    %999 = arith.addi %998, %c3_i32_555 : i32
    %c4_i32_556 = arith.constant 4 : i32
    %1000 = arith.muli %999, %c4_i32_556 : i32
    %c2_i32_557 = arith.constant 2 : i32
    %1001 = arith.addi %1000, %c2_i32_557 : i32
    %c9_i32_558 = arith.constant 9 : i32
    %1002 = arith.muli %1001, %c9_i32_558 : i32
    %c0_i32_559 = arith.constant 0 : i32
    %1003 = arith.addi %1002, %c0_i32_559 : i32
    %c1_i32_560 = arith.constant 1 : i32
    %1004 = arith.addi %1003, %c1_i32_560 : i32
    %1005 = arith.index_cast %1004 : i32 to index
    %1006 = memref.load %arg3[%1005] : memref<288xf32, #tpu.memory_space<smem>>
    %1007 = vector.broadcast %1006 : f32 to vector<16x16xf32>
    %1008 = arith.mulf %1007, %961 : vector<16x16xf32>
    %1009 = arith.addf %959, %1008 : vector<16x16xf32>
    %1010 = vector.extract_strided_slice %5 {offsets = [2, 7, 2], sizes = [1, 16, 16], strides = [1, 1, 1]} : vector<4x32x18xf32> to vector<1x16x16xf32>
    %1011 = vector.shape_cast %1010 : vector<1x16x16xf32> to vector<16x16xf32>
    %c4_i32_561 = arith.constant 4 : i32
    %1012 = arith.muli %arg1, %c4_i32_561 : i32
    %c0_i32_562 = arith.constant 0 : i32
    %1013 = arith.addi %1012, %c0_i32_562 : i32
    %c4_i32_563 = arith.constant 4 : i32
    %1014 = arith.muli %1013, %c4_i32_563 : i32
    %c2_i32_564 = arith.constant 2 : i32
    %1015 = arith.addi %1014, %c2_i32_564 : i32
    %c9_i32_565 = arith.constant 9 : i32
    %1016 = arith.muli %1015, %c9_i32_565 : i32
    %c0_i32_566 = arith.constant 0 : i32
    %1017 = arith.addi %1016, %c0_i32_566 : i32
    %c2_i32_567 = arith.constant 2 : i32
    %1018 = arith.addi %1017, %c2_i32_567 : i32
    %1019 = arith.index_cast %1018 : i32 to index
    %1020 = memref.load %arg3[%1019] : memref<288xf32, #tpu.memory_space<smem>>
    %1021 = vector.broadcast %1020 : f32 to vector<16x16xf32>
    %1022 = arith.mulf %1021, %1011 : vector<16x16xf32>
    %1023 = arith.addf %973, %1022 : vector<16x16xf32>
    %c4_i32_568 = arith.constant 4 : i32
    %1024 = arith.muli %arg1, %c4_i32_568 : i32
    %c1_i32_569 = arith.constant 1 : i32
    %1025 = arith.addi %1024, %c1_i32_569 : i32
    %c4_i32_570 = arith.constant 4 : i32
    %1026 = arith.muli %1025, %c4_i32_570 : i32
    %c2_i32_571 = arith.constant 2 : i32
    %1027 = arith.addi %1026, %c2_i32_571 : i32
    %c9_i32_572 = arith.constant 9 : i32
    %1028 = arith.muli %1027, %c9_i32_572 : i32
    %c0_i32_573 = arith.constant 0 : i32
    %1029 = arith.addi %1028, %c0_i32_573 : i32
    %c2_i32_574 = arith.constant 2 : i32
    %1030 = arith.addi %1029, %c2_i32_574 : i32
    %1031 = arith.index_cast %1030 : i32 to index
    %1032 = memref.load %arg3[%1031] : memref<288xf32, #tpu.memory_space<smem>>
    %1033 = vector.broadcast %1032 : f32 to vector<16x16xf32>
    %1034 = arith.mulf %1033, %1011 : vector<16x16xf32>
    %1035 = arith.addf %985, %1034 : vector<16x16xf32>
    %c4_i32_575 = arith.constant 4 : i32
    %1036 = arith.muli %arg1, %c4_i32_575 : i32
    %c2_i32_576 = arith.constant 2 : i32
    %1037 = arith.addi %1036, %c2_i32_576 : i32
    %c4_i32_577 = arith.constant 4 : i32
    %1038 = arith.muli %1037, %c4_i32_577 : i32
    %c2_i32_578 = arith.constant 2 : i32
    %1039 = arith.addi %1038, %c2_i32_578 : i32
    %c9_i32_579 = arith.constant 9 : i32
    %1040 = arith.muli %1039, %c9_i32_579 : i32
    %c0_i32_580 = arith.constant 0 : i32
    %1041 = arith.addi %1040, %c0_i32_580 : i32
    %c2_i32_581 = arith.constant 2 : i32
    %1042 = arith.addi %1041, %c2_i32_581 : i32
    %1043 = arith.index_cast %1042 : i32 to index
    %1044 = memref.load %arg3[%1043] : memref<288xf32, #tpu.memory_space<smem>>
    %1045 = vector.broadcast %1044 : f32 to vector<16x16xf32>
    %1046 = arith.mulf %1045, %1011 : vector<16x16xf32>
    %1047 = arith.addf %997, %1046 : vector<16x16xf32>
    %c4_i32_582 = arith.constant 4 : i32
    %1048 = arith.muli %arg1, %c4_i32_582 : i32
    %c3_i32_583 = arith.constant 3 : i32
    %1049 = arith.addi %1048, %c3_i32_583 : i32
    %c4_i32_584 = arith.constant 4 : i32
    %1050 = arith.muli %1049, %c4_i32_584 : i32
    %c2_i32_585 = arith.constant 2 : i32
    %1051 = arith.addi %1050, %c2_i32_585 : i32
    %c9_i32_586 = arith.constant 9 : i32
    %1052 = arith.muli %1051, %c9_i32_586 : i32
    %c0_i32_587 = arith.constant 0 : i32
    %1053 = arith.addi %1052, %c0_i32_587 : i32
    %c2_i32_588 = arith.constant 2 : i32
    %1054 = arith.addi %1053, %c2_i32_588 : i32
    %1055 = arith.index_cast %1054 : i32 to index
    %1056 = memref.load %arg3[%1055] : memref<288xf32, #tpu.memory_space<smem>>
    %1057 = vector.broadcast %1056 : f32 to vector<16x16xf32>
    %1058 = arith.mulf %1057, %1011 : vector<16x16xf32>
    %1059 = arith.addf %1009, %1058 : vector<16x16xf32>
    %1060 = vector.extract_strided_slice %5 {offsets = [2, 8, 0], sizes = [1, 16, 16], strides = [1, 1, 1]} : vector<4x32x18xf32> to vector<1x16x16xf32>
    %1061 = vector.shape_cast %1060 : vector<1x16x16xf32> to vector<16x16xf32>
    %c4_i32_589 = arith.constant 4 : i32
    %1062 = arith.muli %arg1, %c4_i32_589 : i32
    %c0_i32_590 = arith.constant 0 : i32
    %1063 = arith.addi %1062, %c0_i32_590 : i32
    %c4_i32_591 = arith.constant 4 : i32
    %1064 = arith.muli %1063, %c4_i32_591 : i32
    %c2_i32_592 = arith.constant 2 : i32
    %1065 = arith.addi %1064, %c2_i32_592 : i32
    %c9_i32_593 = arith.constant 9 : i32
    %1066 = arith.muli %1065, %c9_i32_593 : i32
    %c3_i32_594 = arith.constant 3 : i32
    %1067 = arith.addi %1066, %c3_i32_594 : i32
    %c0_i32_595 = arith.constant 0 : i32
    %1068 = arith.addi %1067, %c0_i32_595 : i32
    %1069 = arith.index_cast %1068 : i32 to index
    %1070 = memref.load %arg3[%1069] : memref<288xf32, #tpu.memory_space<smem>>
    %1071 = vector.broadcast %1070 : f32 to vector<16x16xf32>
    %1072 = arith.mulf %1071, %1061 : vector<16x16xf32>
    %1073 = arith.addf %1023, %1072 : vector<16x16xf32>
    %c4_i32_596 = arith.constant 4 : i32
    %1074 = arith.muli %arg1, %c4_i32_596 : i32
    %c1_i32_597 = arith.constant 1 : i32
    %1075 = arith.addi %1074, %c1_i32_597 : i32
    %c4_i32_598 = arith.constant 4 : i32
    %1076 = arith.muli %1075, %c4_i32_598 : i32
    %c2_i32_599 = arith.constant 2 : i32
    %1077 = arith.addi %1076, %c2_i32_599 : i32
    %c9_i32_600 = arith.constant 9 : i32
    %1078 = arith.muli %1077, %c9_i32_600 : i32
    %c3_i32_601 = arith.constant 3 : i32
    %1079 = arith.addi %1078, %c3_i32_601 : i32
    %c0_i32_602 = arith.constant 0 : i32
    %1080 = arith.addi %1079, %c0_i32_602 : i32
    %1081 = arith.index_cast %1080 : i32 to index
    %1082 = memref.load %arg3[%1081] : memref<288xf32, #tpu.memory_space<smem>>
    %1083 = vector.broadcast %1082 : f32 to vector<16x16xf32>
    %1084 = arith.mulf %1083, %1061 : vector<16x16xf32>
    %1085 = arith.addf %1035, %1084 : vector<16x16xf32>
    %c4_i32_603 = arith.constant 4 : i32
    %1086 = arith.muli %arg1, %c4_i32_603 : i32
    %c2_i32_604 = arith.constant 2 : i32
    %1087 = arith.addi %1086, %c2_i32_604 : i32
    %c4_i32_605 = arith.constant 4 : i32
    %1088 = arith.muli %1087, %c4_i32_605 : i32
    %c2_i32_606 = arith.constant 2 : i32
    %1089 = arith.addi %1088, %c2_i32_606 : i32
    %c9_i32_607 = arith.constant 9 : i32
    %1090 = arith.muli %1089, %c9_i32_607 : i32
    %c3_i32_608 = arith.constant 3 : i32
    %1091 = arith.addi %1090, %c3_i32_608 : i32
    %c0_i32_609 = arith.constant 0 : i32
    %1092 = arith.addi %1091, %c0_i32_609 : i32
    %1093 = arith.index_cast %1092 : i32 to index
    %1094 = memref.load %arg3[%1093] : memref<288xf32, #tpu.memory_space<smem>>
    %1095 = vector.broadcast %1094 : f32 to vector<16x16xf32>
    %1096 = arith.mulf %1095, %1061 : vector<16x16xf32>
    %1097 = arith.addf %1047, %1096 : vector<16x16xf32>
    %c4_i32_610 = arith.constant 4 : i32
    %1098 = arith.muli %arg1, %c4_i32_610 : i32
    %c3_i32_611 = arith.constant 3 : i32
    %1099 = arith.addi %1098, %c3_i32_611 : i32
    %c4_i32_612 = arith.constant 4 : i32
    %1100 = arith.muli %1099, %c4_i32_612 : i32
    %c2_i32_613 = arith.constant 2 : i32
    %1101 = arith.addi %1100, %c2_i32_613 : i32
    %c9_i32_614 = arith.constant 9 : i32
    %1102 = arith.muli %1101, %c9_i32_614 : i32
    %c3_i32_615 = arith.constant 3 : i32
    %1103 = arith.addi %1102, %c3_i32_615 : i32
    %c0_i32_616 = arith.constant 0 : i32
    %1104 = arith.addi %1103, %c0_i32_616 : i32
    %1105 = arith.index_cast %1104 : i32 to index
    %1106 = memref.load %arg3[%1105] : memref<288xf32, #tpu.memory_space<smem>>
    %1107 = vector.broadcast %1106 : f32 to vector<16x16xf32>
    %1108 = arith.mulf %1107, %1061 : vector<16x16xf32>
    %1109 = arith.addf %1059, %1108 : vector<16x16xf32>
    %1110 = vector.extract_strided_slice %5 {offsets = [2, 8, 1], sizes = [1, 16, 16], strides = [1, 1, 1]} : vector<4x32x18xf32> to vector<1x16x16xf32>
    %1111 = vector.shape_cast %1110 : vector<1x16x16xf32> to vector<16x16xf32>
    %c4_i32_617 = arith.constant 4 : i32
    %1112 = arith.muli %arg1, %c4_i32_617 : i32
    %c0_i32_618 = arith.constant 0 : i32
    %1113 = arith.addi %1112, %c0_i32_618 : i32
    %c4_i32_619 = arith.constant 4 : i32
    %1114 = arith.muli %1113, %c4_i32_619 : i32
    %c2_i32_620 = arith.constant 2 : i32
    %1115 = arith.addi %1114, %c2_i32_620 : i32
    %c9_i32_621 = arith.constant 9 : i32
    %1116 = arith.muli %1115, %c9_i32_621 : i32
    %c3_i32_622 = arith.constant 3 : i32
    %1117 = arith.addi %1116, %c3_i32_622 : i32
    %c1_i32_623 = arith.constant 1 : i32
    %1118 = arith.addi %1117, %c1_i32_623 : i32
    %1119 = arith.index_cast %1118 : i32 to index
    %1120 = memref.load %arg3[%1119] : memref<288xf32, #tpu.memory_space<smem>>
    %1121 = vector.broadcast %1120 : f32 to vector<16x16xf32>
    %1122 = arith.mulf %1121, %1111 : vector<16x16xf32>
    %1123 = arith.addf %1073, %1122 : vector<16x16xf32>
    %c4_i32_624 = arith.constant 4 : i32
    %1124 = arith.muli %arg1, %c4_i32_624 : i32
    %c1_i32_625 = arith.constant 1 : i32
    %1125 = arith.addi %1124, %c1_i32_625 : i32
    %c4_i32_626 = arith.constant 4 : i32
    %1126 = arith.muli %1125, %c4_i32_626 : i32
    %c2_i32_627 = arith.constant 2 : i32
    %1127 = arith.addi %1126, %c2_i32_627 : i32
    %c9_i32_628 = arith.constant 9 : i32
    %1128 = arith.muli %1127, %c9_i32_628 : i32
    %c3_i32_629 = arith.constant 3 : i32
    %1129 = arith.addi %1128, %c3_i32_629 : i32
    %c1_i32_630 = arith.constant 1 : i32
    %1130 = arith.addi %1129, %c1_i32_630 : i32
    %1131 = arith.index_cast %1130 : i32 to index
    %1132 = memref.load %arg3[%1131] : memref<288xf32, #tpu.memory_space<smem>>
    %1133 = vector.broadcast %1132 : f32 to vector<16x16xf32>
    %1134 = arith.mulf %1133, %1111 : vector<16x16xf32>
    %1135 = arith.addf %1085, %1134 : vector<16x16xf32>
    %c4_i32_631 = arith.constant 4 : i32
    %1136 = arith.muli %arg1, %c4_i32_631 : i32
    %c2_i32_632 = arith.constant 2 : i32
    %1137 = arith.addi %1136, %c2_i32_632 : i32
    %c4_i32_633 = arith.constant 4 : i32
    %1138 = arith.muli %1137, %c4_i32_633 : i32
    %c2_i32_634 = arith.constant 2 : i32
    %1139 = arith.addi %1138, %c2_i32_634 : i32
    %c9_i32_635 = arith.constant 9 : i32
    %1140 = arith.muli %1139, %c9_i32_635 : i32
    %c3_i32_636 = arith.constant 3 : i32
    %1141 = arith.addi %1140, %c3_i32_636 : i32
    %c1_i32_637 = arith.constant 1 : i32
    %1142 = arith.addi %1141, %c1_i32_637 : i32
    %1143 = arith.index_cast %1142 : i32 to index
    %1144 = memref.load %arg3[%1143] : memref<288xf32, #tpu.memory_space<smem>>
    %1145 = vector.broadcast %1144 : f32 to vector<16x16xf32>
    %1146 = arith.mulf %1145, %1111 : vector<16x16xf32>
    %1147 = arith.addf %1097, %1146 : vector<16x16xf32>
    %c4_i32_638 = arith.constant 4 : i32
    %1148 = arith.muli %arg1, %c4_i32_638 : i32
    %c3_i32_639 = arith.constant 3 : i32
    %1149 = arith.addi %1148, %c3_i32_639 : i32
    %c4_i32_640 = arith.constant 4 : i32
    %1150 = arith.muli %1149, %c4_i32_640 : i32
    %c2_i32_641 = arith.constant 2 : i32
    %1151 = arith.addi %1150, %c2_i32_641 : i32
    %c9_i32_642 = arith.constant 9 : i32
    %1152 = arith.muli %1151, %c9_i32_642 : i32
    %c3_i32_643 = arith.constant 3 : i32
    %1153 = arith.addi %1152, %c3_i32_643 : i32
    %c1_i32_644 = arith.constant 1 : i32
    %1154 = arith.addi %1153, %c1_i32_644 : i32
    %1155 = arith.index_cast %1154 : i32 to index
    %1156 = memref.load %arg3[%1155] : memref<288xf32, #tpu.memory_space<smem>>
    %1157 = vector.broadcast %1156 : f32 to vector<16x16xf32>
    %1158 = arith.mulf %1157, %1111 : vector<16x16xf32>
    %1159 = arith.addf %1109, %1158 : vector<16x16xf32>
    %1160 = vector.extract_strided_slice %5 {offsets = [2, 8, 2], sizes = [1, 16, 16], strides = [1, 1, 1]} : vector<4x32x18xf32> to vector<1x16x16xf32>
    %1161 = vector.shape_cast %1160 : vector<1x16x16xf32> to vector<16x16xf32>
    %c4_i32_645 = arith.constant 4 : i32
    %1162 = arith.muli %arg1, %c4_i32_645 : i32
    %c0_i32_646 = arith.constant 0 : i32
    %1163 = arith.addi %1162, %c0_i32_646 : i32
    %c4_i32_647 = arith.constant 4 : i32
    %1164 = arith.muli %1163, %c4_i32_647 : i32
    %c2_i32_648 = arith.constant 2 : i32
    %1165 = arith.addi %1164, %c2_i32_648 : i32
    %c9_i32_649 = arith.constant 9 : i32
    %1166 = arith.muli %1165, %c9_i32_649 : i32
    %c3_i32_650 = arith.constant 3 : i32
    %1167 = arith.addi %1166, %c3_i32_650 : i32
    %c2_i32_651 = arith.constant 2 : i32
    %1168 = arith.addi %1167, %c2_i32_651 : i32
    %1169 = arith.index_cast %1168 : i32 to index
    %1170 = memref.load %arg3[%1169] : memref<288xf32, #tpu.memory_space<smem>>
    %1171 = vector.broadcast %1170 : f32 to vector<16x16xf32>
    %1172 = arith.mulf %1171, %1161 : vector<16x16xf32>
    %1173 = arith.addf %1123, %1172 : vector<16x16xf32>
    %c4_i32_652 = arith.constant 4 : i32
    %1174 = arith.muli %arg1, %c4_i32_652 : i32
    %c1_i32_653 = arith.constant 1 : i32
    %1175 = arith.addi %1174, %c1_i32_653 : i32
    %c4_i32_654 = arith.constant 4 : i32
    %1176 = arith.muli %1175, %c4_i32_654 : i32
    %c2_i32_655 = arith.constant 2 : i32
    %1177 = arith.addi %1176, %c2_i32_655 : i32
    %c9_i32_656 = arith.constant 9 : i32
    %1178 = arith.muli %1177, %c9_i32_656 : i32
    %c3_i32_657 = arith.constant 3 : i32
    %1179 = arith.addi %1178, %c3_i32_657 : i32
    %c2_i32_658 = arith.constant 2 : i32
    %1180 = arith.addi %1179, %c2_i32_658 : i32
    %1181 = arith.index_cast %1180 : i32 to index
    %1182 = memref.load %arg3[%1181] : memref<288xf32, #tpu.memory_space<smem>>
    %1183 = vector.broadcast %1182 : f32 to vector<16x16xf32>
    %1184 = arith.mulf %1183, %1161 : vector<16x16xf32>
    %1185 = arith.addf %1135, %1184 : vector<16x16xf32>
    %c4_i32_659 = arith.constant 4 : i32
    %1186 = arith.muli %arg1, %c4_i32_659 : i32
    %c2_i32_660 = arith.constant 2 : i32
    %1187 = arith.addi %1186, %c2_i32_660 : i32
    %c4_i32_661 = arith.constant 4 : i32
    %1188 = arith.muli %1187, %c4_i32_661 : i32
    %c2_i32_662 = arith.constant 2 : i32
    %1189 = arith.addi %1188, %c2_i32_662 : i32
    %c9_i32_663 = arith.constant 9 : i32
    %1190 = arith.muli %1189, %c9_i32_663 : i32
    %c3_i32_664 = arith.constant 3 : i32
    %1191 = arith.addi %1190, %c3_i32_664 : i32
    %c2_i32_665 = arith.constant 2 : i32
    %1192 = arith.addi %1191, %c2_i32_665 : i32
    %1193 = arith.index_cast %1192 : i32 to index
    %1194 = memref.load %arg3[%1193] : memref<288xf32, #tpu.memory_space<smem>>
    %1195 = vector.broadcast %1194 : f32 to vector<16x16xf32>
    %1196 = arith.mulf %1195, %1161 : vector<16x16xf32>
    %1197 = arith.addf %1147, %1196 : vector<16x16xf32>
    %c4_i32_666 = arith.constant 4 : i32
    %1198 = arith.muli %arg1, %c4_i32_666 : i32
    %c3_i32_667 = arith.constant 3 : i32
    %1199 = arith.addi %1198, %c3_i32_667 : i32
    %c4_i32_668 = arith.constant 4 : i32
    %1200 = arith.muli %1199, %c4_i32_668 : i32
    %c2_i32_669 = arith.constant 2 : i32
    %1201 = arith.addi %1200, %c2_i32_669 : i32
    %c9_i32_670 = arith.constant 9 : i32
    %1202 = arith.muli %1201, %c9_i32_670 : i32
    %c3_i32_671 = arith.constant 3 : i32
    %1203 = arith.addi %1202, %c3_i32_671 : i32
    %c2_i32_672 = arith.constant 2 : i32
    %1204 = arith.addi %1203, %c2_i32_672 : i32
    %1205 = arith.index_cast %1204 : i32 to index
    %1206 = memref.load %arg3[%1205] : memref<288xf32, #tpu.memory_space<smem>>
    %1207 = vector.broadcast %1206 : f32 to vector<16x16xf32>
    %1208 = arith.mulf %1207, %1161 : vector<16x16xf32>
    %1209 = arith.addf %1159, %1208 : vector<16x16xf32>
    %1210 = vector.extract_strided_slice %5 {offsets = [2, 9, 0], sizes = [1, 16, 16], strides = [1, 1, 1]} : vector<4x32x18xf32> to vector<1x16x16xf32>
    %1211 = vector.shape_cast %1210 : vector<1x16x16xf32> to vector<16x16xf32>
    %c4_i32_673 = arith.constant 4 : i32
    %1212 = arith.muli %arg1, %c4_i32_673 : i32
    %c0_i32_674 = arith.constant 0 : i32
    %1213 = arith.addi %1212, %c0_i32_674 : i32
    %c4_i32_675 = arith.constant 4 : i32
    %1214 = arith.muli %1213, %c4_i32_675 : i32
    %c2_i32_676 = arith.constant 2 : i32
    %1215 = arith.addi %1214, %c2_i32_676 : i32
    %c9_i32_677 = arith.constant 9 : i32
    %1216 = arith.muli %1215, %c9_i32_677 : i32
    %c6_i32_678 = arith.constant 6 : i32
    %1217 = arith.addi %1216, %c6_i32_678 : i32
    %c0_i32_679 = arith.constant 0 : i32
    %1218 = arith.addi %1217, %c0_i32_679 : i32
    %1219 = arith.index_cast %1218 : i32 to index
    %1220 = memref.load %arg3[%1219] : memref<288xf32, #tpu.memory_space<smem>>
    %1221 = vector.broadcast %1220 : f32 to vector<16x16xf32>
    %1222 = arith.mulf %1221, %1211 : vector<16x16xf32>
    %1223 = arith.addf %1173, %1222 : vector<16x16xf32>
    %c4_i32_680 = arith.constant 4 : i32
    %1224 = arith.muli %arg1, %c4_i32_680 : i32
    %c1_i32_681 = arith.constant 1 : i32
    %1225 = arith.addi %1224, %c1_i32_681 : i32
    %c4_i32_682 = arith.constant 4 : i32
    %1226 = arith.muli %1225, %c4_i32_682 : i32
    %c2_i32_683 = arith.constant 2 : i32
    %1227 = arith.addi %1226, %c2_i32_683 : i32
    %c9_i32_684 = arith.constant 9 : i32
    %1228 = arith.muli %1227, %c9_i32_684 : i32
    %c6_i32_685 = arith.constant 6 : i32
    %1229 = arith.addi %1228, %c6_i32_685 : i32
    %c0_i32_686 = arith.constant 0 : i32
    %1230 = arith.addi %1229, %c0_i32_686 : i32
    %1231 = arith.index_cast %1230 : i32 to index
    %1232 = memref.load %arg3[%1231] : memref<288xf32, #tpu.memory_space<smem>>
    %1233 = vector.broadcast %1232 : f32 to vector<16x16xf32>
    %1234 = arith.mulf %1233, %1211 : vector<16x16xf32>
    %1235 = arith.addf %1185, %1234 : vector<16x16xf32>
    %c4_i32_687 = arith.constant 4 : i32
    %1236 = arith.muli %arg1, %c4_i32_687 : i32
    %c2_i32_688 = arith.constant 2 : i32
    %1237 = arith.addi %1236, %c2_i32_688 : i32
    %c4_i32_689 = arith.constant 4 : i32
    %1238 = arith.muli %1237, %c4_i32_689 : i32
    %c2_i32_690 = arith.constant 2 : i32
    %1239 = arith.addi %1238, %c2_i32_690 : i32
    %c9_i32_691 = arith.constant 9 : i32
    %1240 = arith.muli %1239, %c9_i32_691 : i32
    %c6_i32_692 = arith.constant 6 : i32
    %1241 = arith.addi %1240, %c6_i32_692 : i32
    %c0_i32_693 = arith.constant 0 : i32
    %1242 = arith.addi %1241, %c0_i32_693 : i32
    %1243 = arith.index_cast %1242 : i32 to index
    %1244 = memref.load %arg3[%1243] : memref<288xf32, #tpu.memory_space<smem>>
    %1245 = vector.broadcast %1244 : f32 to vector<16x16xf32>
    %1246 = arith.mulf %1245, %1211 : vector<16x16xf32>
    %1247 = arith.addf %1197, %1246 : vector<16x16xf32>
    %c4_i32_694 = arith.constant 4 : i32
    %1248 = arith.muli %arg1, %c4_i32_694 : i32
    %c3_i32_695 = arith.constant 3 : i32
    %1249 = arith.addi %1248, %c3_i32_695 : i32
    %c4_i32_696 = arith.constant 4 : i32
    %1250 = arith.muli %1249, %c4_i32_696 : i32
    %c2_i32_697 = arith.constant 2 : i32
    %1251 = arith.addi %1250, %c2_i32_697 : i32
    %c9_i32_698 = arith.constant 9 : i32
    %1252 = arith.muli %1251, %c9_i32_698 : i32
    %c6_i32_699 = arith.constant 6 : i32
    %1253 = arith.addi %1252, %c6_i32_699 : i32
    %c0_i32_700 = arith.constant 0 : i32
    %1254 = arith.addi %1253, %c0_i32_700 : i32
    %1255 = arith.index_cast %1254 : i32 to index
    %1256 = memref.load %arg3[%1255] : memref<288xf32, #tpu.memory_space<smem>>
    %1257 = vector.broadcast %1256 : f32 to vector<16x16xf32>
    %1258 = arith.mulf %1257, %1211 : vector<16x16xf32>
    %1259 = arith.addf %1209, %1258 : vector<16x16xf32>
    %1260 = vector.extract_strided_slice %5 {offsets = [2, 9, 1], sizes = [1, 16, 16], strides = [1, 1, 1]} : vector<4x32x18xf32> to vector<1x16x16xf32>
    %1261 = vector.shape_cast %1260 : vector<1x16x16xf32> to vector<16x16xf32>
    %c4_i32_701 = arith.constant 4 : i32
    %1262 = arith.muli %arg1, %c4_i32_701 : i32
    %c0_i32_702 = arith.constant 0 : i32
    %1263 = arith.addi %1262, %c0_i32_702 : i32
    %c4_i32_703 = arith.constant 4 : i32
    %1264 = arith.muli %1263, %c4_i32_703 : i32
    %c2_i32_704 = arith.constant 2 : i32
    %1265 = arith.addi %1264, %c2_i32_704 : i32
    %c9_i32_705 = arith.constant 9 : i32
    %1266 = arith.muli %1265, %c9_i32_705 : i32
    %c6_i32_706 = arith.constant 6 : i32
    %1267 = arith.addi %1266, %c6_i32_706 : i32
    %c1_i32_707 = arith.constant 1 : i32
    %1268 = arith.addi %1267, %c1_i32_707 : i32
    %1269 = arith.index_cast %1268 : i32 to index
    %1270 = memref.load %arg3[%1269] : memref<288xf32, #tpu.memory_space<smem>>
    %1271 = vector.broadcast %1270 : f32 to vector<16x16xf32>
    %1272 = arith.mulf %1271, %1261 : vector<16x16xf32>
    %1273 = arith.addf %1223, %1272 : vector<16x16xf32>
    %c4_i32_708 = arith.constant 4 : i32
    %1274 = arith.muli %arg1, %c4_i32_708 : i32
    %c1_i32_709 = arith.constant 1 : i32
    %1275 = arith.addi %1274, %c1_i32_709 : i32
    %c4_i32_710 = arith.constant 4 : i32
    %1276 = arith.muli %1275, %c4_i32_710 : i32
    %c2_i32_711 = arith.constant 2 : i32
    %1277 = arith.addi %1276, %c2_i32_711 : i32
    %c9_i32_712 = arith.constant 9 : i32
    %1278 = arith.muli %1277, %c9_i32_712 : i32
    %c6_i32_713 = arith.constant 6 : i32
    %1279 = arith.addi %1278, %c6_i32_713 : i32
    %c1_i32_714 = arith.constant 1 : i32
    %1280 = arith.addi %1279, %c1_i32_714 : i32
    %1281 = arith.index_cast %1280 : i32 to index
    %1282 = memref.load %arg3[%1281] : memref<288xf32, #tpu.memory_space<smem>>
    %1283 = vector.broadcast %1282 : f32 to vector<16x16xf32>
    %1284 = arith.mulf %1283, %1261 : vector<16x16xf32>
    %1285 = arith.addf %1235, %1284 : vector<16x16xf32>
    %c4_i32_715 = arith.constant 4 : i32
    %1286 = arith.muli %arg1, %c4_i32_715 : i32
    %c2_i32_716 = arith.constant 2 : i32
    %1287 = arith.addi %1286, %c2_i32_716 : i32
    %c4_i32_717 = arith.constant 4 : i32
    %1288 = arith.muli %1287, %c4_i32_717 : i32
    %c2_i32_718 = arith.constant 2 : i32
    %1289 = arith.addi %1288, %c2_i32_718 : i32
    %c9_i32_719 = arith.constant 9 : i32
    %1290 = arith.muli %1289, %c9_i32_719 : i32
    %c6_i32_720 = arith.constant 6 : i32
    %1291 = arith.addi %1290, %c6_i32_720 : i32
    %c1_i32_721 = arith.constant 1 : i32
    %1292 = arith.addi %1291, %c1_i32_721 : i32
    %1293 = arith.index_cast %1292 : i32 to index
    %1294 = memref.load %arg3[%1293] : memref<288xf32, #tpu.memory_space<smem>>
    %1295 = vector.broadcast %1294 : f32 to vector<16x16xf32>
    %1296 = arith.mulf %1295, %1261 : vector<16x16xf32>
    %1297 = arith.addf %1247, %1296 : vector<16x16xf32>
    %c4_i32_722 = arith.constant 4 : i32
    %1298 = arith.muli %arg1, %c4_i32_722 : i32
    %c3_i32_723 = arith.constant 3 : i32
    %1299 = arith.addi %1298, %c3_i32_723 : i32
    %c4_i32_724 = arith.constant 4 : i32
    %1300 = arith.muli %1299, %c4_i32_724 : i32
    %c2_i32_725 = arith.constant 2 : i32
    %1301 = arith.addi %1300, %c2_i32_725 : i32
    %c9_i32_726 = arith.constant 9 : i32
    %1302 = arith.muli %1301, %c9_i32_726 : i32
    %c6_i32_727 = arith.constant 6 : i32
    %1303 = arith.addi %1302, %c6_i32_727 : i32
    %c1_i32_728 = arith.constant 1 : i32
    %1304 = arith.addi %1303, %c1_i32_728 : i32
    %1305 = arith.index_cast %1304 : i32 to index
    %1306 = memref.load %arg3[%1305] : memref<288xf32, #tpu.memory_space<smem>>
    %1307 = vector.broadcast %1306 : f32 to vector<16x16xf32>
    %1308 = arith.mulf %1307, %1261 : vector<16x16xf32>
    %1309 = arith.addf %1259, %1308 : vector<16x16xf32>
    %1310 = vector.extract_strided_slice %5 {offsets = [2, 9, 2], sizes = [1, 16, 16], strides = [1, 1, 1]} : vector<4x32x18xf32> to vector<1x16x16xf32>
    %1311 = vector.shape_cast %1310 : vector<1x16x16xf32> to vector<16x16xf32>
    %c4_i32_729 = arith.constant 4 : i32
    %1312 = arith.muli %arg1, %c4_i32_729 : i32
    %c0_i32_730 = arith.constant 0 : i32
    %1313 = arith.addi %1312, %c0_i32_730 : i32
    %c4_i32_731 = arith.constant 4 : i32
    %1314 = arith.muli %1313, %c4_i32_731 : i32
    %c2_i32_732 = arith.constant 2 : i32
    %1315 = arith.addi %1314, %c2_i32_732 : i32
    %c9_i32_733 = arith.constant 9 : i32
    %1316 = arith.muli %1315, %c9_i32_733 : i32
    %c6_i32_734 = arith.constant 6 : i32
    %1317 = arith.addi %1316, %c6_i32_734 : i32
    %c2_i32_735 = arith.constant 2 : i32
    %1318 = arith.addi %1317, %c2_i32_735 : i32
    %1319 = arith.index_cast %1318 : i32 to index
    %1320 = memref.load %arg3[%1319] : memref<288xf32, #tpu.memory_space<smem>>
    %1321 = vector.broadcast %1320 : f32 to vector<16x16xf32>
    %1322 = arith.mulf %1321, %1311 : vector<16x16xf32>
    %1323 = arith.addf %1273, %1322 : vector<16x16xf32>
    %c4_i32_736 = arith.constant 4 : i32
    %1324 = arith.muli %arg1, %c4_i32_736 : i32
    %c1_i32_737 = arith.constant 1 : i32
    %1325 = arith.addi %1324, %c1_i32_737 : i32
    %c4_i32_738 = arith.constant 4 : i32
    %1326 = arith.muli %1325, %c4_i32_738 : i32
    %c2_i32_739 = arith.constant 2 : i32
    %1327 = arith.addi %1326, %c2_i32_739 : i32
    %c9_i32_740 = arith.constant 9 : i32
    %1328 = arith.muli %1327, %c9_i32_740 : i32
    %c6_i32_741 = arith.constant 6 : i32
    %1329 = arith.addi %1328, %c6_i32_741 : i32
    %c2_i32_742 = arith.constant 2 : i32
    %1330 = arith.addi %1329, %c2_i32_742 : i32
    %1331 = arith.index_cast %1330 : i32 to index
    %1332 = memref.load %arg3[%1331] : memref<288xf32, #tpu.memory_space<smem>>
    %1333 = vector.broadcast %1332 : f32 to vector<16x16xf32>
    %1334 = arith.mulf %1333, %1311 : vector<16x16xf32>
    %1335 = arith.addf %1285, %1334 : vector<16x16xf32>
    %c4_i32_743 = arith.constant 4 : i32
    %1336 = arith.muli %arg1, %c4_i32_743 : i32
    %c2_i32_744 = arith.constant 2 : i32
    %1337 = arith.addi %1336, %c2_i32_744 : i32
    %c4_i32_745 = arith.constant 4 : i32
    %1338 = arith.muli %1337, %c4_i32_745 : i32
    %c2_i32_746 = arith.constant 2 : i32
    %1339 = arith.addi %1338, %c2_i32_746 : i32
    %c9_i32_747 = arith.constant 9 : i32
    %1340 = arith.muli %1339, %c9_i32_747 : i32
    %c6_i32_748 = arith.constant 6 : i32
    %1341 = arith.addi %1340, %c6_i32_748 : i32
    %c2_i32_749 = arith.constant 2 : i32
    %1342 = arith.addi %1341, %c2_i32_749 : i32
    %1343 = arith.index_cast %1342 : i32 to index
    %1344 = memref.load %arg3[%1343] : memref<288xf32, #tpu.memory_space<smem>>
    %1345 = vector.broadcast %1344 : f32 to vector<16x16xf32>
    %1346 = arith.mulf %1345, %1311 : vector<16x16xf32>
    %1347 = arith.addf %1297, %1346 : vector<16x16xf32>
    %c4_i32_750 = arith.constant 4 : i32
    %1348 = arith.muli %arg1, %c4_i32_750 : i32
    %c3_i32_751 = arith.constant 3 : i32
    %1349 = arith.addi %1348, %c3_i32_751 : i32
    %c4_i32_752 = arith.constant 4 : i32
    %1350 = arith.muli %1349, %c4_i32_752 : i32
    %c2_i32_753 = arith.constant 2 : i32
    %1351 = arith.addi %1350, %c2_i32_753 : i32
    %c9_i32_754 = arith.constant 9 : i32
    %1352 = arith.muli %1351, %c9_i32_754 : i32
    %c6_i32_755 = arith.constant 6 : i32
    %1353 = arith.addi %1352, %c6_i32_755 : i32
    %c2_i32_756 = arith.constant 2 : i32
    %1354 = arith.addi %1353, %c2_i32_756 : i32
    %1355 = arith.index_cast %1354 : i32 to index
    %1356 = memref.load %arg3[%1355] : memref<288xf32, #tpu.memory_space<smem>>
    %1357 = vector.broadcast %1356 : f32 to vector<16x16xf32>
    %1358 = arith.mulf %1357, %1311 : vector<16x16xf32>
    %1359 = arith.addf %1309, %1358 : vector<16x16xf32>
    %1360 = vector.extract_strided_slice %5 {offsets = [3, 7, 0], sizes = [1, 16, 16], strides = [1, 1, 1]} : vector<4x32x18xf32> to vector<1x16x16xf32>
    %1361 = vector.shape_cast %1360 : vector<1x16x16xf32> to vector<16x16xf32>
    %c4_i32_757 = arith.constant 4 : i32
    %1362 = arith.muli %arg1, %c4_i32_757 : i32
    %c0_i32_758 = arith.constant 0 : i32
    %1363 = arith.addi %1362, %c0_i32_758 : i32
    %c4_i32_759 = arith.constant 4 : i32
    %1364 = arith.muli %1363, %c4_i32_759 : i32
    %c3_i32_760 = arith.constant 3 : i32
    %1365 = arith.addi %1364, %c3_i32_760 : i32
    %c9_i32_761 = arith.constant 9 : i32
    %1366 = arith.muli %1365, %c9_i32_761 : i32
    %c0_i32_762 = arith.constant 0 : i32
    %1367 = arith.addi %1366, %c0_i32_762 : i32
    %c0_i32_763 = arith.constant 0 : i32
    %1368 = arith.addi %1367, %c0_i32_763 : i32
    %1369 = arith.index_cast %1368 : i32 to index
    %1370 = memref.load %arg3[%1369] : memref<288xf32, #tpu.memory_space<smem>>
    %1371 = vector.broadcast %1370 : f32 to vector<16x16xf32>
    %1372 = arith.mulf %1371, %1361 : vector<16x16xf32>
    %1373 = arith.addf %1323, %1372 : vector<16x16xf32>
    %c4_i32_764 = arith.constant 4 : i32
    %1374 = arith.muli %arg1, %c4_i32_764 : i32
    %c1_i32_765 = arith.constant 1 : i32
    %1375 = arith.addi %1374, %c1_i32_765 : i32
    %c4_i32_766 = arith.constant 4 : i32
    %1376 = arith.muli %1375, %c4_i32_766 : i32
    %c3_i32_767 = arith.constant 3 : i32
    %1377 = arith.addi %1376, %c3_i32_767 : i32
    %c9_i32_768 = arith.constant 9 : i32
    %1378 = arith.muli %1377, %c9_i32_768 : i32
    %c0_i32_769 = arith.constant 0 : i32
    %1379 = arith.addi %1378, %c0_i32_769 : i32
    %c0_i32_770 = arith.constant 0 : i32
    %1380 = arith.addi %1379, %c0_i32_770 : i32
    %1381 = arith.index_cast %1380 : i32 to index
    %1382 = memref.load %arg3[%1381] : memref<288xf32, #tpu.memory_space<smem>>
    %1383 = vector.broadcast %1382 : f32 to vector<16x16xf32>
    %1384 = arith.mulf %1383, %1361 : vector<16x16xf32>
    %1385 = arith.addf %1335, %1384 : vector<16x16xf32>
    %c4_i32_771 = arith.constant 4 : i32
    %1386 = arith.muli %arg1, %c4_i32_771 : i32
    %c2_i32_772 = arith.constant 2 : i32
    %1387 = arith.addi %1386, %c2_i32_772 : i32
    %c4_i32_773 = arith.constant 4 : i32
    %1388 = arith.muli %1387, %c4_i32_773 : i32
    %c3_i32_774 = arith.constant 3 : i32
    %1389 = arith.addi %1388, %c3_i32_774 : i32
    %c9_i32_775 = arith.constant 9 : i32
    %1390 = arith.muli %1389, %c9_i32_775 : i32
    %c0_i32_776 = arith.constant 0 : i32
    %1391 = arith.addi %1390, %c0_i32_776 : i32
    %c0_i32_777 = arith.constant 0 : i32
    %1392 = arith.addi %1391, %c0_i32_777 : i32
    %1393 = arith.index_cast %1392 : i32 to index
    %1394 = memref.load %arg3[%1393] : memref<288xf32, #tpu.memory_space<smem>>
    %1395 = vector.broadcast %1394 : f32 to vector<16x16xf32>
    %1396 = arith.mulf %1395, %1361 : vector<16x16xf32>
    %1397 = arith.addf %1347, %1396 : vector<16x16xf32>
    %c4_i32_778 = arith.constant 4 : i32
    %1398 = arith.muli %arg1, %c4_i32_778 : i32
    %c3_i32_779 = arith.constant 3 : i32
    %1399 = arith.addi %1398, %c3_i32_779 : i32
    %c4_i32_780 = arith.constant 4 : i32
    %1400 = arith.muli %1399, %c4_i32_780 : i32
    %c3_i32_781 = arith.constant 3 : i32
    %1401 = arith.addi %1400, %c3_i32_781 : i32
    %c9_i32_782 = arith.constant 9 : i32
    %1402 = arith.muli %1401, %c9_i32_782 : i32
    %c0_i32_783 = arith.constant 0 : i32
    %1403 = arith.addi %1402, %c0_i32_783 : i32
    %c0_i32_784 = arith.constant 0 : i32
    %1404 = arith.addi %1403, %c0_i32_784 : i32
    %1405 = arith.index_cast %1404 : i32 to index
    %1406 = memref.load %arg3[%1405] : memref<288xf32, #tpu.memory_space<smem>>
    %1407 = vector.broadcast %1406 : f32 to vector<16x16xf32>
    %1408 = arith.mulf %1407, %1361 : vector<16x16xf32>
    %1409 = arith.addf %1359, %1408 : vector<16x16xf32>
    %1410 = vector.extract_strided_slice %5 {offsets = [3, 7, 1], sizes = [1, 16, 16], strides = [1, 1, 1]} : vector<4x32x18xf32> to vector<1x16x16xf32>
    %1411 = vector.shape_cast %1410 : vector<1x16x16xf32> to vector<16x16xf32>
    %c4_i32_785 = arith.constant 4 : i32
    %1412 = arith.muli %arg1, %c4_i32_785 : i32
    %c0_i32_786 = arith.constant 0 : i32
    %1413 = arith.addi %1412, %c0_i32_786 : i32
    %c4_i32_787 = arith.constant 4 : i32
    %1414 = arith.muli %1413, %c4_i32_787 : i32
    %c3_i32_788 = arith.constant 3 : i32
    %1415 = arith.addi %1414, %c3_i32_788 : i32
    %c9_i32_789 = arith.constant 9 : i32
    %1416 = arith.muli %1415, %c9_i32_789 : i32
    %c0_i32_790 = arith.constant 0 : i32
    %1417 = arith.addi %1416, %c0_i32_790 : i32
    %c1_i32_791 = arith.constant 1 : i32
    %1418 = arith.addi %1417, %c1_i32_791 : i32
    %1419 = arith.index_cast %1418 : i32 to index
    %1420 = memref.load %arg3[%1419] : memref<288xf32, #tpu.memory_space<smem>>
    %1421 = vector.broadcast %1420 : f32 to vector<16x16xf32>
    %1422 = arith.mulf %1421, %1411 : vector<16x16xf32>
    %1423 = arith.addf %1373, %1422 : vector<16x16xf32>
    %c4_i32_792 = arith.constant 4 : i32
    %1424 = arith.muli %arg1, %c4_i32_792 : i32
    %c1_i32_793 = arith.constant 1 : i32
    %1425 = arith.addi %1424, %c1_i32_793 : i32
    %c4_i32_794 = arith.constant 4 : i32
    %1426 = arith.muli %1425, %c4_i32_794 : i32
    %c3_i32_795 = arith.constant 3 : i32
    %1427 = arith.addi %1426, %c3_i32_795 : i32
    %c9_i32_796 = arith.constant 9 : i32
    %1428 = arith.muli %1427, %c9_i32_796 : i32
    %c0_i32_797 = arith.constant 0 : i32
    %1429 = arith.addi %1428, %c0_i32_797 : i32
    %c1_i32_798 = arith.constant 1 : i32
    %1430 = arith.addi %1429, %c1_i32_798 : i32
    %1431 = arith.index_cast %1430 : i32 to index
    %1432 = memref.load %arg3[%1431] : memref<288xf32, #tpu.memory_space<smem>>
    %1433 = vector.broadcast %1432 : f32 to vector<16x16xf32>
    %1434 = arith.mulf %1433, %1411 : vector<16x16xf32>
    %1435 = arith.addf %1385, %1434 : vector<16x16xf32>
    %c4_i32_799 = arith.constant 4 : i32
    %1436 = arith.muli %arg1, %c4_i32_799 : i32
    %c2_i32_800 = arith.constant 2 : i32
    %1437 = arith.addi %1436, %c2_i32_800 : i32
    %c4_i32_801 = arith.constant 4 : i32
    %1438 = arith.muli %1437, %c4_i32_801 : i32
    %c3_i32_802 = arith.constant 3 : i32
    %1439 = arith.addi %1438, %c3_i32_802 : i32
    %c9_i32_803 = arith.constant 9 : i32
    %1440 = arith.muli %1439, %c9_i32_803 : i32
    %c0_i32_804 = arith.constant 0 : i32
    %1441 = arith.addi %1440, %c0_i32_804 : i32
    %c1_i32_805 = arith.constant 1 : i32
    %1442 = arith.addi %1441, %c1_i32_805 : i32
    %1443 = arith.index_cast %1442 : i32 to index
    %1444 = memref.load %arg3[%1443] : memref<288xf32, #tpu.memory_space<smem>>
    %1445 = vector.broadcast %1444 : f32 to vector<16x16xf32>
    %1446 = arith.mulf %1445, %1411 : vector<16x16xf32>
    %1447 = arith.addf %1397, %1446 : vector<16x16xf32>
    %c4_i32_806 = arith.constant 4 : i32
    %1448 = arith.muli %arg1, %c4_i32_806 : i32
    %c3_i32_807 = arith.constant 3 : i32
    %1449 = arith.addi %1448, %c3_i32_807 : i32
    %c4_i32_808 = arith.constant 4 : i32
    %1450 = arith.muli %1449, %c4_i32_808 : i32
    %c3_i32_809 = arith.constant 3 : i32
    %1451 = arith.addi %1450, %c3_i32_809 : i32
    %c9_i32_810 = arith.constant 9 : i32
    %1452 = arith.muli %1451, %c9_i32_810 : i32
    %c0_i32_811 = arith.constant 0 : i32
    %1453 = arith.addi %1452, %c0_i32_811 : i32
    %c1_i32_812 = arith.constant 1 : i32
    %1454 = arith.addi %1453, %c1_i32_812 : i32
    %1455 = arith.index_cast %1454 : i32 to index
    %1456 = memref.load %arg3[%1455] : memref<288xf32, #tpu.memory_space<smem>>
    %1457 = vector.broadcast %1456 : f32 to vector<16x16xf32>
    %1458 = arith.mulf %1457, %1411 : vector<16x16xf32>
    %1459 = arith.addf %1409, %1458 : vector<16x16xf32>
    %1460 = vector.extract_strided_slice %5 {offsets = [3, 7, 2], sizes = [1, 16, 16], strides = [1, 1, 1]} : vector<4x32x18xf32> to vector<1x16x16xf32>
    %1461 = vector.shape_cast %1460 : vector<1x16x16xf32> to vector<16x16xf32>
    %c4_i32_813 = arith.constant 4 : i32
    %1462 = arith.muli %arg1, %c4_i32_813 : i32
    %c0_i32_814 = arith.constant 0 : i32
    %1463 = arith.addi %1462, %c0_i32_814 : i32
    %c4_i32_815 = arith.constant 4 : i32
    %1464 = arith.muli %1463, %c4_i32_815 : i32
    %c3_i32_816 = arith.constant 3 : i32
    %1465 = arith.addi %1464, %c3_i32_816 : i32
    %c9_i32_817 = arith.constant 9 : i32
    %1466 = arith.muli %1465, %c9_i32_817 : i32
    %c0_i32_818 = arith.constant 0 : i32
    %1467 = arith.addi %1466, %c0_i32_818 : i32
    %c2_i32_819 = arith.constant 2 : i32
    %1468 = arith.addi %1467, %c2_i32_819 : i32
    %1469 = arith.index_cast %1468 : i32 to index
    %1470 = memref.load %arg3[%1469] : memref<288xf32, #tpu.memory_space<smem>>
    %1471 = vector.broadcast %1470 : f32 to vector<16x16xf32>
    %1472 = arith.mulf %1471, %1461 : vector<16x16xf32>
    %1473 = arith.addf %1423, %1472 : vector<16x16xf32>
    %c4_i32_820 = arith.constant 4 : i32
    %1474 = arith.muli %arg1, %c4_i32_820 : i32
    %c1_i32_821 = arith.constant 1 : i32
    %1475 = arith.addi %1474, %c1_i32_821 : i32
    %c4_i32_822 = arith.constant 4 : i32
    %1476 = arith.muli %1475, %c4_i32_822 : i32
    %c3_i32_823 = arith.constant 3 : i32
    %1477 = arith.addi %1476, %c3_i32_823 : i32
    %c9_i32_824 = arith.constant 9 : i32
    %1478 = arith.muli %1477, %c9_i32_824 : i32
    %c0_i32_825 = arith.constant 0 : i32
    %1479 = arith.addi %1478, %c0_i32_825 : i32
    %c2_i32_826 = arith.constant 2 : i32
    %1480 = arith.addi %1479, %c2_i32_826 : i32
    %1481 = arith.index_cast %1480 : i32 to index
    %1482 = memref.load %arg3[%1481] : memref<288xf32, #tpu.memory_space<smem>>
    %1483 = vector.broadcast %1482 : f32 to vector<16x16xf32>
    %1484 = arith.mulf %1483, %1461 : vector<16x16xf32>
    %1485 = arith.addf %1435, %1484 : vector<16x16xf32>
    %c4_i32_827 = arith.constant 4 : i32
    %1486 = arith.muli %arg1, %c4_i32_827 : i32
    %c2_i32_828 = arith.constant 2 : i32
    %1487 = arith.addi %1486, %c2_i32_828 : i32
    %c4_i32_829 = arith.constant 4 : i32
    %1488 = arith.muli %1487, %c4_i32_829 : i32
    %c3_i32_830 = arith.constant 3 : i32
    %1489 = arith.addi %1488, %c3_i32_830 : i32
    %c9_i32_831 = arith.constant 9 : i32
    %1490 = arith.muli %1489, %c9_i32_831 : i32
    %c0_i32_832 = arith.constant 0 : i32
    %1491 = arith.addi %1490, %c0_i32_832 : i32
    %c2_i32_833 = arith.constant 2 : i32
    %1492 = arith.addi %1491, %c2_i32_833 : i32
    %1493 = arith.index_cast %1492 : i32 to index
    %1494 = memref.load %arg3[%1493] : memref<288xf32, #tpu.memory_space<smem>>
    %1495 = vector.broadcast %1494 : f32 to vector<16x16xf32>
    %1496 = arith.mulf %1495, %1461 : vector<16x16xf32>
    %1497 = arith.addf %1447, %1496 : vector<16x16xf32>
    %c4_i32_834 = arith.constant 4 : i32
    %1498 = arith.muli %arg1, %c4_i32_834 : i32
    %c3_i32_835 = arith.constant 3 : i32
    %1499 = arith.addi %1498, %c3_i32_835 : i32
    %c4_i32_836 = arith.constant 4 : i32
    %1500 = arith.muli %1499, %c4_i32_836 : i32
    %c3_i32_837 = arith.constant 3 : i32
    %1501 = arith.addi %1500, %c3_i32_837 : i32
    %c9_i32_838 = arith.constant 9 : i32
    %1502 = arith.muli %1501, %c9_i32_838 : i32
    %c0_i32_839 = arith.constant 0 : i32
    %1503 = arith.addi %1502, %c0_i32_839 : i32
    %c2_i32_840 = arith.constant 2 : i32
    %1504 = arith.addi %1503, %c2_i32_840 : i32
    %1505 = arith.index_cast %1504 : i32 to index
    %1506 = memref.load %arg3[%1505] : memref<288xf32, #tpu.memory_space<smem>>
    %1507 = vector.broadcast %1506 : f32 to vector<16x16xf32>
    %1508 = arith.mulf %1507, %1461 : vector<16x16xf32>
    %1509 = arith.addf %1459, %1508 : vector<16x16xf32>
    %1510 = vector.extract_strided_slice %5 {offsets = [3, 8, 0], sizes = [1, 16, 16], strides = [1, 1, 1]} : vector<4x32x18xf32> to vector<1x16x16xf32>
    %1511 = vector.shape_cast %1510 : vector<1x16x16xf32> to vector<16x16xf32>
    %c4_i32_841 = arith.constant 4 : i32
    %1512 = arith.muli %arg1, %c4_i32_841 : i32
    %c0_i32_842 = arith.constant 0 : i32
    %1513 = arith.addi %1512, %c0_i32_842 : i32
    %c4_i32_843 = arith.constant 4 : i32
    %1514 = arith.muli %1513, %c4_i32_843 : i32
    %c3_i32_844 = arith.constant 3 : i32
    %1515 = arith.addi %1514, %c3_i32_844 : i32
    %c9_i32_845 = arith.constant 9 : i32
    %1516 = arith.muli %1515, %c9_i32_845 : i32
    %c3_i32_846 = arith.constant 3 : i32
    %1517 = arith.addi %1516, %c3_i32_846 : i32
    %c0_i32_847 = arith.constant 0 : i32
    %1518 = arith.addi %1517, %c0_i32_847 : i32
    %1519 = arith.index_cast %1518 : i32 to index
    %1520 = memref.load %arg3[%1519] : memref<288xf32, #tpu.memory_space<smem>>
    %1521 = vector.broadcast %1520 : f32 to vector<16x16xf32>
    %1522 = arith.mulf %1521, %1511 : vector<16x16xf32>
    %1523 = arith.addf %1473, %1522 : vector<16x16xf32>
    %c4_i32_848 = arith.constant 4 : i32
    %1524 = arith.muli %arg1, %c4_i32_848 : i32
    %c1_i32_849 = arith.constant 1 : i32
    %1525 = arith.addi %1524, %c1_i32_849 : i32
    %c4_i32_850 = arith.constant 4 : i32
    %1526 = arith.muli %1525, %c4_i32_850 : i32
    %c3_i32_851 = arith.constant 3 : i32
    %1527 = arith.addi %1526, %c3_i32_851 : i32
    %c9_i32_852 = arith.constant 9 : i32
    %1528 = arith.muli %1527, %c9_i32_852 : i32
    %c3_i32_853 = arith.constant 3 : i32
    %1529 = arith.addi %1528, %c3_i32_853 : i32
    %c0_i32_854 = arith.constant 0 : i32
    %1530 = arith.addi %1529, %c0_i32_854 : i32
    %1531 = arith.index_cast %1530 : i32 to index
    %1532 = memref.load %arg3[%1531] : memref<288xf32, #tpu.memory_space<smem>>
    %1533 = vector.broadcast %1532 : f32 to vector<16x16xf32>
    %1534 = arith.mulf %1533, %1511 : vector<16x16xf32>
    %1535 = arith.addf %1485, %1534 : vector<16x16xf32>
    %c4_i32_855 = arith.constant 4 : i32
    %1536 = arith.muli %arg1, %c4_i32_855 : i32
    %c2_i32_856 = arith.constant 2 : i32
    %1537 = arith.addi %1536, %c2_i32_856 : i32
    %c4_i32_857 = arith.constant 4 : i32
    %1538 = arith.muli %1537, %c4_i32_857 : i32
    %c3_i32_858 = arith.constant 3 : i32
    %1539 = arith.addi %1538, %c3_i32_858 : i32
    %c9_i32_859 = arith.constant 9 : i32
    %1540 = arith.muli %1539, %c9_i32_859 : i32
    %c3_i32_860 = arith.constant 3 : i32
    %1541 = arith.addi %1540, %c3_i32_860 : i32
    %c0_i32_861 = arith.constant 0 : i32
    %1542 = arith.addi %1541, %c0_i32_861 : i32
    %1543 = arith.index_cast %1542 : i32 to index
    %1544 = memref.load %arg3[%1543] : memref<288xf32, #tpu.memory_space<smem>>
    %1545 = vector.broadcast %1544 : f32 to vector<16x16xf32>
    %1546 = arith.mulf %1545, %1511 : vector<16x16xf32>
    %1547 = arith.addf %1497, %1546 : vector<16x16xf32>
    %c4_i32_862 = arith.constant 4 : i32
    %1548 = arith.muli %arg1, %c4_i32_862 : i32
    %c3_i32_863 = arith.constant 3 : i32
    %1549 = arith.addi %1548, %c3_i32_863 : i32
    %c4_i32_864 = arith.constant 4 : i32
    %1550 = arith.muli %1549, %c4_i32_864 : i32
    %c3_i32_865 = arith.constant 3 : i32
    %1551 = arith.addi %1550, %c3_i32_865 : i32
    %c9_i32_866 = arith.constant 9 : i32
    %1552 = arith.muli %1551, %c9_i32_866 : i32
    %c3_i32_867 = arith.constant 3 : i32
    %1553 = arith.addi %1552, %c3_i32_867 : i32
    %c0_i32_868 = arith.constant 0 : i32
    %1554 = arith.addi %1553, %c0_i32_868 : i32
    %1555 = arith.index_cast %1554 : i32 to index
    %1556 = memref.load %arg3[%1555] : memref<288xf32, #tpu.memory_space<smem>>
    %1557 = vector.broadcast %1556 : f32 to vector<16x16xf32>
    %1558 = arith.mulf %1557, %1511 : vector<16x16xf32>
    %1559 = arith.addf %1509, %1558 : vector<16x16xf32>
    %1560 = vector.extract_strided_slice %5 {offsets = [3, 8, 1], sizes = [1, 16, 16], strides = [1, 1, 1]} : vector<4x32x18xf32> to vector<1x16x16xf32>
    %1561 = vector.shape_cast %1560 : vector<1x16x16xf32> to vector<16x16xf32>
    %c4_i32_869 = arith.constant 4 : i32
    %1562 = arith.muli %arg1, %c4_i32_869 : i32
    %c0_i32_870 = arith.constant 0 : i32
    %1563 = arith.addi %1562, %c0_i32_870 : i32
    %c4_i32_871 = arith.constant 4 : i32
    %1564 = arith.muli %1563, %c4_i32_871 : i32
    %c3_i32_872 = arith.constant 3 : i32
    %1565 = arith.addi %1564, %c3_i32_872 : i32
    %c9_i32_873 = arith.constant 9 : i32
    %1566 = arith.muli %1565, %c9_i32_873 : i32
    %c3_i32_874 = arith.constant 3 : i32
    %1567 = arith.addi %1566, %c3_i32_874 : i32
    %c1_i32_875 = arith.constant 1 : i32
    %1568 = arith.addi %1567, %c1_i32_875 : i32
    %1569 = arith.index_cast %1568 : i32 to index
    %1570 = memref.load %arg3[%1569] : memref<288xf32, #tpu.memory_space<smem>>
    %1571 = vector.broadcast %1570 : f32 to vector<16x16xf32>
    %1572 = arith.mulf %1571, %1561 : vector<16x16xf32>
    %1573 = arith.addf %1523, %1572 : vector<16x16xf32>
    %c4_i32_876 = arith.constant 4 : i32
    %1574 = arith.muli %arg1, %c4_i32_876 : i32
    %c1_i32_877 = arith.constant 1 : i32
    %1575 = arith.addi %1574, %c1_i32_877 : i32
    %c4_i32_878 = arith.constant 4 : i32
    %1576 = arith.muli %1575, %c4_i32_878 : i32
    %c3_i32_879 = arith.constant 3 : i32
    %1577 = arith.addi %1576, %c3_i32_879 : i32
    %c9_i32_880 = arith.constant 9 : i32
    %1578 = arith.muli %1577, %c9_i32_880 : i32
    %c3_i32_881 = arith.constant 3 : i32
    %1579 = arith.addi %1578, %c3_i32_881 : i32
    %c1_i32_882 = arith.constant 1 : i32
    %1580 = arith.addi %1579, %c1_i32_882 : i32
    %1581 = arith.index_cast %1580 : i32 to index
    %1582 = memref.load %arg3[%1581] : memref<288xf32, #tpu.memory_space<smem>>
    %1583 = vector.broadcast %1582 : f32 to vector<16x16xf32>
    %1584 = arith.mulf %1583, %1561 : vector<16x16xf32>
    %1585 = arith.addf %1535, %1584 : vector<16x16xf32>
    %c4_i32_883 = arith.constant 4 : i32
    %1586 = arith.muli %arg1, %c4_i32_883 : i32
    %c2_i32_884 = arith.constant 2 : i32
    %1587 = arith.addi %1586, %c2_i32_884 : i32
    %c4_i32_885 = arith.constant 4 : i32
    %1588 = arith.muli %1587, %c4_i32_885 : i32
    %c3_i32_886 = arith.constant 3 : i32
    %1589 = arith.addi %1588, %c3_i32_886 : i32
    %c9_i32_887 = arith.constant 9 : i32
    %1590 = arith.muli %1589, %c9_i32_887 : i32
    %c3_i32_888 = arith.constant 3 : i32
    %1591 = arith.addi %1590, %c3_i32_888 : i32
    %c1_i32_889 = arith.constant 1 : i32
    %1592 = arith.addi %1591, %c1_i32_889 : i32
    %1593 = arith.index_cast %1592 : i32 to index
    %1594 = memref.load %arg3[%1593] : memref<288xf32, #tpu.memory_space<smem>>
    %1595 = vector.broadcast %1594 : f32 to vector<16x16xf32>
    %1596 = arith.mulf %1595, %1561 : vector<16x16xf32>
    %1597 = arith.addf %1547, %1596 : vector<16x16xf32>
    %c4_i32_890 = arith.constant 4 : i32
    %1598 = arith.muli %arg1, %c4_i32_890 : i32
    %c3_i32_891 = arith.constant 3 : i32
    %1599 = arith.addi %1598, %c3_i32_891 : i32
    %c4_i32_892 = arith.constant 4 : i32
    %1600 = arith.muli %1599, %c4_i32_892 : i32
    %c3_i32_893 = arith.constant 3 : i32
    %1601 = arith.addi %1600, %c3_i32_893 : i32
    %c9_i32_894 = arith.constant 9 : i32
    %1602 = arith.muli %1601, %c9_i32_894 : i32
    %c3_i32_895 = arith.constant 3 : i32
    %1603 = arith.addi %1602, %c3_i32_895 : i32
    %c1_i32_896 = arith.constant 1 : i32
    %1604 = arith.addi %1603, %c1_i32_896 : i32
    %1605 = arith.index_cast %1604 : i32 to index
    %1606 = memref.load %arg3[%1605] : memref<288xf32, #tpu.memory_space<smem>>
    %1607 = vector.broadcast %1606 : f32 to vector<16x16xf32>
    %1608 = arith.mulf %1607, %1561 : vector<16x16xf32>
    %1609 = arith.addf %1559, %1608 : vector<16x16xf32>
    %1610 = vector.extract_strided_slice %5 {offsets = [3, 8, 2], sizes = [1, 16, 16], strides = [1, 1, 1]} : vector<4x32x18xf32> to vector<1x16x16xf32>
    %1611 = vector.shape_cast %1610 : vector<1x16x16xf32> to vector<16x16xf32>
    %c4_i32_897 = arith.constant 4 : i32
    %1612 = arith.muli %arg1, %c4_i32_897 : i32
    %c0_i32_898 = arith.constant 0 : i32
    %1613 = arith.addi %1612, %c0_i32_898 : i32
    %c4_i32_899 = arith.constant 4 : i32
    %1614 = arith.muli %1613, %c4_i32_899 : i32
    %c3_i32_900 = arith.constant 3 : i32
    %1615 = arith.addi %1614, %c3_i32_900 : i32
    %c9_i32_901 = arith.constant 9 : i32
    %1616 = arith.muli %1615, %c9_i32_901 : i32
    %c3_i32_902 = arith.constant 3 : i32
    %1617 = arith.addi %1616, %c3_i32_902 : i32
    %c2_i32_903 = arith.constant 2 : i32
    %1618 = arith.addi %1617, %c2_i32_903 : i32
    %1619 = arith.index_cast %1618 : i32 to index
    %1620 = memref.load %arg3[%1619] : memref<288xf32, #tpu.memory_space<smem>>
    %1621 = vector.broadcast %1620 : f32 to vector<16x16xf32>
    %1622 = arith.mulf %1621, %1611 : vector<16x16xf32>
    %1623 = arith.addf %1573, %1622 : vector<16x16xf32>
    %c4_i32_904 = arith.constant 4 : i32
    %1624 = arith.muli %arg1, %c4_i32_904 : i32
    %c1_i32_905 = arith.constant 1 : i32
    %1625 = arith.addi %1624, %c1_i32_905 : i32
    %c4_i32_906 = arith.constant 4 : i32
    %1626 = arith.muli %1625, %c4_i32_906 : i32
    %c3_i32_907 = arith.constant 3 : i32
    %1627 = arith.addi %1626, %c3_i32_907 : i32
    %c9_i32_908 = arith.constant 9 : i32
    %1628 = arith.muli %1627, %c9_i32_908 : i32
    %c3_i32_909 = arith.constant 3 : i32
    %1629 = arith.addi %1628, %c3_i32_909 : i32
    %c2_i32_910 = arith.constant 2 : i32
    %1630 = arith.addi %1629, %c2_i32_910 : i32
    %1631 = arith.index_cast %1630 : i32 to index
    %1632 = memref.load %arg3[%1631] : memref<288xf32, #tpu.memory_space<smem>>
    %1633 = vector.broadcast %1632 : f32 to vector<16x16xf32>
    %1634 = arith.mulf %1633, %1611 : vector<16x16xf32>
    %1635 = arith.addf %1585, %1634 : vector<16x16xf32>
    %c4_i32_911 = arith.constant 4 : i32
    %1636 = arith.muli %arg1, %c4_i32_911 : i32
    %c2_i32_912 = arith.constant 2 : i32
    %1637 = arith.addi %1636, %c2_i32_912 : i32
    %c4_i32_913 = arith.constant 4 : i32
    %1638 = arith.muli %1637, %c4_i32_913 : i32
    %c3_i32_914 = arith.constant 3 : i32
    %1639 = arith.addi %1638, %c3_i32_914 : i32
    %c9_i32_915 = arith.constant 9 : i32
    %1640 = arith.muli %1639, %c9_i32_915 : i32
    %c3_i32_916 = arith.constant 3 : i32
    %1641 = arith.addi %1640, %c3_i32_916 : i32
    %c2_i32_917 = arith.constant 2 : i32
    %1642 = arith.addi %1641, %c2_i32_917 : i32
    %1643 = arith.index_cast %1642 : i32 to index
    %1644 = memref.load %arg3[%1643] : memref<288xf32, #tpu.memory_space<smem>>
    %1645 = vector.broadcast %1644 : f32 to vector<16x16xf32>
    %1646 = arith.mulf %1645, %1611 : vector<16x16xf32>
    %1647 = arith.addf %1597, %1646 : vector<16x16xf32>
    %c4_i32_918 = arith.constant 4 : i32
    %1648 = arith.muli %arg1, %c4_i32_918 : i32
    %c3_i32_919 = arith.constant 3 : i32
    %1649 = arith.addi %1648, %c3_i32_919 : i32
    %c4_i32_920 = arith.constant 4 : i32
    %1650 = arith.muli %1649, %c4_i32_920 : i32
    %c3_i32_921 = arith.constant 3 : i32
    %1651 = arith.addi %1650, %c3_i32_921 : i32
    %c9_i32_922 = arith.constant 9 : i32
    %1652 = arith.muli %1651, %c9_i32_922 : i32
    %c3_i32_923 = arith.constant 3 : i32
    %1653 = arith.addi %1652, %c3_i32_923 : i32
    %c2_i32_924 = arith.constant 2 : i32
    %1654 = arith.addi %1653, %c2_i32_924 : i32
    %1655 = arith.index_cast %1654 : i32 to index
    %1656 = memref.load %arg3[%1655] : memref<288xf32, #tpu.memory_space<smem>>
    %1657 = vector.broadcast %1656 : f32 to vector<16x16xf32>
    %1658 = arith.mulf %1657, %1611 : vector<16x16xf32>
    %1659 = arith.addf %1609, %1658 : vector<16x16xf32>
    %1660 = vector.extract_strided_slice %5 {offsets = [3, 9, 0], sizes = [1, 16, 16], strides = [1, 1, 1]} : vector<4x32x18xf32> to vector<1x16x16xf32>
    %1661 = vector.shape_cast %1660 : vector<1x16x16xf32> to vector<16x16xf32>
    %c4_i32_925 = arith.constant 4 : i32
    %1662 = arith.muli %arg1, %c4_i32_925 : i32
    %c0_i32_926 = arith.constant 0 : i32
    %1663 = arith.addi %1662, %c0_i32_926 : i32
    %c4_i32_927 = arith.constant 4 : i32
    %1664 = arith.muli %1663, %c4_i32_927 : i32
    %c3_i32_928 = arith.constant 3 : i32
    %1665 = arith.addi %1664, %c3_i32_928 : i32
    %c9_i32_929 = arith.constant 9 : i32
    %1666 = arith.muli %1665, %c9_i32_929 : i32
    %c6_i32_930 = arith.constant 6 : i32
    %1667 = arith.addi %1666, %c6_i32_930 : i32
    %c0_i32_931 = arith.constant 0 : i32
    %1668 = arith.addi %1667, %c0_i32_931 : i32
    %1669 = arith.index_cast %1668 : i32 to index
    %1670 = memref.load %arg3[%1669] : memref<288xf32, #tpu.memory_space<smem>>
    %1671 = vector.broadcast %1670 : f32 to vector<16x16xf32>
    %1672 = arith.mulf %1671, %1661 : vector<16x16xf32>
    %1673 = arith.addf %1623, %1672 : vector<16x16xf32>
    %c4_i32_932 = arith.constant 4 : i32
    %1674 = arith.muli %arg1, %c4_i32_932 : i32
    %c1_i32_933 = arith.constant 1 : i32
    %1675 = arith.addi %1674, %c1_i32_933 : i32
    %c4_i32_934 = arith.constant 4 : i32
    %1676 = arith.muli %1675, %c4_i32_934 : i32
    %c3_i32_935 = arith.constant 3 : i32
    %1677 = arith.addi %1676, %c3_i32_935 : i32
    %c9_i32_936 = arith.constant 9 : i32
    %1678 = arith.muli %1677, %c9_i32_936 : i32
    %c6_i32_937 = arith.constant 6 : i32
    %1679 = arith.addi %1678, %c6_i32_937 : i32
    %c0_i32_938 = arith.constant 0 : i32
    %1680 = arith.addi %1679, %c0_i32_938 : i32
    %1681 = arith.index_cast %1680 : i32 to index
    %1682 = memref.load %arg3[%1681] : memref<288xf32, #tpu.memory_space<smem>>
    %1683 = vector.broadcast %1682 : f32 to vector<16x16xf32>
    %1684 = arith.mulf %1683, %1661 : vector<16x16xf32>
    %1685 = arith.addf %1635, %1684 : vector<16x16xf32>
    %c4_i32_939 = arith.constant 4 : i32
    %1686 = arith.muli %arg1, %c4_i32_939 : i32
    %c2_i32_940 = arith.constant 2 : i32
    %1687 = arith.addi %1686, %c2_i32_940 : i32
    %c4_i32_941 = arith.constant 4 : i32
    %1688 = arith.muli %1687, %c4_i32_941 : i32
    %c3_i32_942 = arith.constant 3 : i32
    %1689 = arith.addi %1688, %c3_i32_942 : i32
    %c9_i32_943 = arith.constant 9 : i32
    %1690 = arith.muli %1689, %c9_i32_943 : i32
    %c6_i32_944 = arith.constant 6 : i32
    %1691 = arith.addi %1690, %c6_i32_944 : i32
    %c0_i32_945 = arith.constant 0 : i32
    %1692 = arith.addi %1691, %c0_i32_945 : i32
    %1693 = arith.index_cast %1692 : i32 to index
    %1694 = memref.load %arg3[%1693] : memref<288xf32, #tpu.memory_space<smem>>
    %1695 = vector.broadcast %1694 : f32 to vector<16x16xf32>
    %1696 = arith.mulf %1695, %1661 : vector<16x16xf32>
    %1697 = arith.addf %1647, %1696 : vector<16x16xf32>
    %c4_i32_946 = arith.constant 4 : i32
    %1698 = arith.muli %arg1, %c4_i32_946 : i32
    %c3_i32_947 = arith.constant 3 : i32
    %1699 = arith.addi %1698, %c3_i32_947 : i32
    %c4_i32_948 = arith.constant 4 : i32
    %1700 = arith.muli %1699, %c4_i32_948 : i32
    %c3_i32_949 = arith.constant 3 : i32
    %1701 = arith.addi %1700, %c3_i32_949 : i32
    %c9_i32_950 = arith.constant 9 : i32
    %1702 = arith.muli %1701, %c9_i32_950 : i32
    %c6_i32_951 = arith.constant 6 : i32
    %1703 = arith.addi %1702, %c6_i32_951 : i32
    %c0_i32_952 = arith.constant 0 : i32
    %1704 = arith.addi %1703, %c0_i32_952 : i32
    %1705 = arith.index_cast %1704 : i32 to index
    %1706 = memref.load %arg3[%1705] : memref<288xf32, #tpu.memory_space<smem>>
    %1707 = vector.broadcast %1706 : f32 to vector<16x16xf32>
    %1708 = arith.mulf %1707, %1661 : vector<16x16xf32>
    %1709 = arith.addf %1659, %1708 : vector<16x16xf32>
    %1710 = vector.extract_strided_slice %5 {offsets = [3, 9, 1], sizes = [1, 16, 16], strides = [1, 1, 1]} : vector<4x32x18xf32> to vector<1x16x16xf32>
    %1711 = vector.shape_cast %1710 : vector<1x16x16xf32> to vector<16x16xf32>
    %c4_i32_953 = arith.constant 4 : i32
    %1712 = arith.muli %arg1, %c4_i32_953 : i32
    %c0_i32_954 = arith.constant 0 : i32
    %1713 = arith.addi %1712, %c0_i32_954 : i32
    %c4_i32_955 = arith.constant 4 : i32
    %1714 = arith.muli %1713, %c4_i32_955 : i32
    %c3_i32_956 = arith.constant 3 : i32
    %1715 = arith.addi %1714, %c3_i32_956 : i32
    %c9_i32_957 = arith.constant 9 : i32
    %1716 = arith.muli %1715, %c9_i32_957 : i32
    %c6_i32_958 = arith.constant 6 : i32
    %1717 = arith.addi %1716, %c6_i32_958 : i32
    %c1_i32_959 = arith.constant 1 : i32
    %1718 = arith.addi %1717, %c1_i32_959 : i32
    %1719 = arith.index_cast %1718 : i32 to index
    %1720 = memref.load %arg3[%1719] : memref<288xf32, #tpu.memory_space<smem>>
    %1721 = vector.broadcast %1720 : f32 to vector<16x16xf32>
    %1722 = arith.mulf %1721, %1711 : vector<16x16xf32>
    %1723 = arith.addf %1673, %1722 : vector<16x16xf32>
    %c4_i32_960 = arith.constant 4 : i32
    %1724 = arith.muli %arg1, %c4_i32_960 : i32
    %c1_i32_961 = arith.constant 1 : i32
    %1725 = arith.addi %1724, %c1_i32_961 : i32
    %c4_i32_962 = arith.constant 4 : i32
    %1726 = arith.muli %1725, %c4_i32_962 : i32
    %c3_i32_963 = arith.constant 3 : i32
    %1727 = arith.addi %1726, %c3_i32_963 : i32
    %c9_i32_964 = arith.constant 9 : i32
    %1728 = arith.muli %1727, %c9_i32_964 : i32
    %c6_i32_965 = arith.constant 6 : i32
    %1729 = arith.addi %1728, %c6_i32_965 : i32
    %c1_i32_966 = arith.constant 1 : i32
    %1730 = arith.addi %1729, %c1_i32_966 : i32
    %1731 = arith.index_cast %1730 : i32 to index
    %1732 = memref.load %arg3[%1731] : memref<288xf32, #tpu.memory_space<smem>>
    %1733 = vector.broadcast %1732 : f32 to vector<16x16xf32>
    %1734 = arith.mulf %1733, %1711 : vector<16x16xf32>
    %1735 = arith.addf %1685, %1734 : vector<16x16xf32>
    %c4_i32_967 = arith.constant 4 : i32
    %1736 = arith.muli %arg1, %c4_i32_967 : i32
    %c2_i32_968 = arith.constant 2 : i32
    %1737 = arith.addi %1736, %c2_i32_968 : i32
    %c4_i32_969 = arith.constant 4 : i32
    %1738 = arith.muli %1737, %c4_i32_969 : i32
    %c3_i32_970 = arith.constant 3 : i32
    %1739 = arith.addi %1738, %c3_i32_970 : i32
    %c9_i32_971 = arith.constant 9 : i32
    %1740 = arith.muli %1739, %c9_i32_971 : i32
    %c6_i32_972 = arith.constant 6 : i32
    %1741 = arith.addi %1740, %c6_i32_972 : i32
    %c1_i32_973 = arith.constant 1 : i32
    %1742 = arith.addi %1741, %c1_i32_973 : i32
    %1743 = arith.index_cast %1742 : i32 to index
    %1744 = memref.load %arg3[%1743] : memref<288xf32, #tpu.memory_space<smem>>
    %1745 = vector.broadcast %1744 : f32 to vector<16x16xf32>
    %1746 = arith.mulf %1745, %1711 : vector<16x16xf32>
    %1747 = arith.addf %1697, %1746 : vector<16x16xf32>
    %c4_i32_974 = arith.constant 4 : i32
    %1748 = arith.muli %arg1, %c4_i32_974 : i32
    %c3_i32_975 = arith.constant 3 : i32
    %1749 = arith.addi %1748, %c3_i32_975 : i32
    %c4_i32_976 = arith.constant 4 : i32
    %1750 = arith.muli %1749, %c4_i32_976 : i32
    %c3_i32_977 = arith.constant 3 : i32
    %1751 = arith.addi %1750, %c3_i32_977 : i32
    %c9_i32_978 = arith.constant 9 : i32
    %1752 = arith.muli %1751, %c9_i32_978 : i32
    %c6_i32_979 = arith.constant 6 : i32
    %1753 = arith.addi %1752, %c6_i32_979 : i32
    %c1_i32_980 = arith.constant 1 : i32
    %1754 = arith.addi %1753, %c1_i32_980 : i32
    %1755 = arith.index_cast %1754 : i32 to index
    %1756 = memref.load %arg3[%1755] : memref<288xf32, #tpu.memory_space<smem>>
    %1757 = vector.broadcast %1756 : f32 to vector<16x16xf32>
    %1758 = arith.mulf %1757, %1711 : vector<16x16xf32>
    %1759 = arith.addf %1709, %1758 : vector<16x16xf32>
    %1760 = vector.extract_strided_slice %5 {offsets = [3, 9, 2], sizes = [1, 16, 16], strides = [1, 1, 1]} : vector<4x32x18xf32> to vector<1x16x16xf32>
    %1761 = vector.shape_cast %1760 : vector<1x16x16xf32> to vector<16x16xf32>
    %c4_i32_981 = arith.constant 4 : i32
    %1762 = arith.muli %arg1, %c4_i32_981 : i32
    %c0_i32_982 = arith.constant 0 : i32
    %1763 = arith.addi %1762, %c0_i32_982 : i32
    %c4_i32_983 = arith.constant 4 : i32
    %1764 = arith.muli %1763, %c4_i32_983 : i32
    %c3_i32_984 = arith.constant 3 : i32
    %1765 = arith.addi %1764, %c3_i32_984 : i32
    %c9_i32_985 = arith.constant 9 : i32
    %1766 = arith.muli %1765, %c9_i32_985 : i32
    %c6_i32_986 = arith.constant 6 : i32
    %1767 = arith.addi %1766, %c6_i32_986 : i32
    %c2_i32_987 = arith.constant 2 : i32
    %1768 = arith.addi %1767, %c2_i32_987 : i32
    %1769 = arith.index_cast %1768 : i32 to index
    %1770 = memref.load %arg3[%1769] : memref<288xf32, #tpu.memory_space<smem>>
    %1771 = vector.broadcast %1770 : f32 to vector<16x16xf32>
    %1772 = arith.mulf %1771, %1761 : vector<16x16xf32>
    %1773 = arith.addf %1723, %1772 : vector<16x16xf32>
    %c4_i32_988 = arith.constant 4 : i32
    %1774 = arith.muli %arg1, %c4_i32_988 : i32
    %c1_i32_989 = arith.constant 1 : i32
    %1775 = arith.addi %1774, %c1_i32_989 : i32
    %c4_i32_990 = arith.constant 4 : i32
    %1776 = arith.muli %1775, %c4_i32_990 : i32
    %c3_i32_991 = arith.constant 3 : i32
    %1777 = arith.addi %1776, %c3_i32_991 : i32
    %c9_i32_992 = arith.constant 9 : i32
    %1778 = arith.muli %1777, %c9_i32_992 : i32
    %c6_i32_993 = arith.constant 6 : i32
    %1779 = arith.addi %1778, %c6_i32_993 : i32
    %c2_i32_994 = arith.constant 2 : i32
    %1780 = arith.addi %1779, %c2_i32_994 : i32
    %1781 = arith.index_cast %1780 : i32 to index
    %1782 = memref.load %arg3[%1781] : memref<288xf32, #tpu.memory_space<smem>>
    %1783 = vector.broadcast %1782 : f32 to vector<16x16xf32>
    %1784 = arith.mulf %1783, %1761 : vector<16x16xf32>
    %1785 = arith.addf %1735, %1784 : vector<16x16xf32>
    %c4_i32_995 = arith.constant 4 : i32
    %1786 = arith.muli %arg1, %c4_i32_995 : i32
    %c2_i32_996 = arith.constant 2 : i32
    %1787 = arith.addi %1786, %c2_i32_996 : i32
    %c4_i32_997 = arith.constant 4 : i32
    %1788 = arith.muli %1787, %c4_i32_997 : i32
    %c3_i32_998 = arith.constant 3 : i32
    %1789 = arith.addi %1788, %c3_i32_998 : i32
    %c9_i32_999 = arith.constant 9 : i32
    %1790 = arith.muli %1789, %c9_i32_999 : i32
    %c6_i32_1000 = arith.constant 6 : i32
    %1791 = arith.addi %1790, %c6_i32_1000 : i32
    %c2_i32_1001 = arith.constant 2 : i32
    %1792 = arith.addi %1791, %c2_i32_1001 : i32
    %1793 = arith.index_cast %1792 : i32 to index
    %1794 = memref.load %arg3[%1793] : memref<288xf32, #tpu.memory_space<smem>>
    %1795 = vector.broadcast %1794 : f32 to vector<16x16xf32>
    %1796 = arith.mulf %1795, %1761 : vector<16x16xf32>
    %1797 = arith.addf %1747, %1796 : vector<16x16xf32>
    %c4_i32_1002 = arith.constant 4 : i32
    %1798 = arith.muli %arg1, %c4_i32_1002 : i32
    %c3_i32_1003 = arith.constant 3 : i32
    %1799 = arith.addi %1798, %c3_i32_1003 : i32
    %c4_i32_1004 = arith.constant 4 : i32
    %1800 = arith.muli %1799, %c4_i32_1004 : i32
    %c3_i32_1005 = arith.constant 3 : i32
    %1801 = arith.addi %1800, %c3_i32_1005 : i32
    %c9_i32_1006 = arith.constant 9 : i32
    %1802 = arith.muli %1801, %c9_i32_1006 : i32
    %c6_i32_1007 = arith.constant 6 : i32
    %1803 = arith.addi %1802, %c6_i32_1007 : i32
    %c2_i32_1008 = arith.constant 2 : i32
    %1804 = arith.addi %1803, %c2_i32_1008 : i32
    %1805 = arith.index_cast %1804 : i32 to index
    %1806 = memref.load %arg3[%1805] : memref<288xf32, #tpu.memory_space<smem>>
    %1807 = vector.broadcast %1806 : f32 to vector<16x16xf32>
    %1808 = arith.mulf %1807, %1761 : vector<16x16xf32>
    %1809 = arith.addf %1759, %1808 : vector<16x16xf32>
    %c0_1009 = arith.constant 0 : index
    %c0_1010 = arith.constant 0 : index
    %c0_1011 = arith.constant 0 : index
    %c0_1012 = arith.constant 0 : index
    %1810 = vector.load %arg4[%c0_1009, %c0_1010, %c0_1011, %c0_1012] : memref<1x4x16x16xf32, #tpu.memory_space<vmem>>, vector<1x1x16x16xf32>
    %1811 = vector.shape_cast %1810 : vector<1x1x16x16xf32> to vector<16x16xf32>
    %1812 = vector.shape_cast %1773 : vector<16x16xf32> to vector<1x1x16x16xf32>
    tpu.vector_store %arg4[%c0_1009, %c0_1010, %c0_1011, %c0_1012], %1812 {strides = array<i32>} : memref<1x4x16x16xf32, #tpu.memory_space<vmem>>, vector<1x1x16x16xf32>,
    %c0_1013 = arith.constant 0 : index
    %c1 = arith.constant 1 : index
    %c0_1014 = arith.constant 0 : index
    %c0_1015 = arith.constant 0 : index
    %1813 = vector.load %arg4[%c0_1013, %c1, %c0_1014, %c0_1015] : memref<1x4x16x16xf32, #tpu.memory_space<vmem>>, vector<1x1x16x16xf32>
    %1814 = vector.shape_cast %1813 : vector<1x1x16x16xf32> to vector<16x16xf32>
    %1815 = vector.shape_cast %1785 : vector<16x16xf32> to vector<1x1x16x16xf32>
    tpu.vector_store %arg4[%c0_1013, %c1, %c0_1014, %c0_1015], %1815 {strides = array<i32>} : memref<1x4x16x16xf32, #tpu.memory_space<vmem>>, vector<1x1x16x16xf32>,
    %c0_1016 = arith.constant 0 : index
    %c2 = arith.constant 2 : index
    %c0_1017 = arith.constant 0 : index
    %c0_1018 = arith.constant 0 : index
    %1816 = vector.load %arg4[%c0_1016, %c2, %c0_1017, %c0_1018] : memref<1x4x16x16xf32, #tpu.memory_space<vmem>>, vector<1x1x16x16xf32>
    %1817 = vector.shape_cast %1816 : vector<1x1x16x16xf32> to vector<16x16xf32>
    %1818 = vector.shape_cast %1797 : vector<16x16xf32> to vector<1x1x16x16xf32>
    tpu.vector_store %arg4[%c0_1016, %c2, %c0_1017, %c0_1018], %1818 {strides = array<i32>} : memref<1x4x16x16xf32, #tpu.memory_space<vmem>>, vector<1x1x16x16xf32>,
    %c0_1019 = arith.constant 0 : index
    %c3 = arith.constant 3 : index
    %c0_1020 = arith.constant 0 : index
    %c0_1021 = arith.constant 0 : index
    %1819 = vector.load %arg4[%c0_1019, %c3, %c0_1020, %c0_1021] : memref<1x4x16x16xf32, #tpu.memory_space<vmem>>, vector<1x1x16x16xf32>
    %1820 = vector.shape_cast %1819 : vector<1x1x16x16xf32> to vector<16x16xf32>
    %1821 = vector.shape_cast %1809 : vector<16x16xf32> to vector<1x1x16x16xf32>
    tpu.vector_store %arg4[%c0_1019, %c3, %c0_1020, %c0_1021], %1821 {strides = array<i32>} : memref<1x4x16x16xf32, #tpu.memory_space<vmem>>, vector<1x1x16x16xf32>,
    return
  }
  func.func @transform_0(%arg0: i32, %arg1: i32) -> (i32, i32, i32, i32) {
    %c0_i32 = arith.constant 0 : i32
    %c0_i32_0 = arith.constant 0 : i32
    %c0_i32_1 = arith.constant 0 : i32
    %c0_i32_2 = arith.constant 0 : i32
    return %arg0, %c0_i32, %c0_i32_0, %c0_i32_1 : i32, i32, i32, i32
  }
  func.func @transform_1(%arg0: i32, %arg1: i32) -> i32 {
    %c0_i32 = arith.constant 0 : i32
    %c0_i32_0 = arith.constant 0 : i32
    return %c0_i32 : i32
  }
  func.func @transform_2(%arg0: i32, %arg1: i32) -> (i32, i32, i32, i32) {
    %c0_i32 = arith.constant 0 : i32
    %c0_i32_0 = arith.constant 0 : i32
    %c0_i32_1 = arith.constant 0 : i32
    return %arg0, %arg1, %c0_i32, %c0_i32_0 : i32, i32, i32, i32
  }
}

</mosaic_0001>

<llo_original>
// kernel: upsample_forward.1
$region0: #{upsample_forward.1}
  #allocation0 [shape = 'u32[]', space=smem, size = 0x4, offset = 0x4, fixed_abs, tag = 'smem constant byte address 0x4 - core index']
  #allocation1 [shape = 'u32[144,128]{1,0:T(1,128)}', space=vmem, size = 0x12000, scoped, tag = 'internal scratch']
  %s0 = inlined_call_operand.vmem [shape: f32[2,4,16,16], index: 0, kind: input, shape index: {}]
  %s1 = inlined_call_operand.vmem [shape: f32[288], index: 1, kind: input, shape index: {}]
  %s2 = inlined_call_operand.vmem [shape: f32[2,8,16,16], index: 2, kind: output, shape index: {}]
  %s3 = sld [smem:[#allocation0]]
  $region45: #{upsample_forward.1} parent=0
    _
  %s5 = ssub.s32 1, %s3
  %s6 = scalar_select 0, %s5, %s3
  $region1: #{upsample_forward.1} parent=0
    #allocation2 [shape = 'u8[1536]{0}', space=smem, size = 0x600, scoped, tag = 'input window, operand 1, single buffered']
    #allocation3 [shape = 's32[2]{0}', space=sflag, size = 0x8, scoped, tag = 'scoped memory for upsample_forward.1']
    %7 = vsyncpa [#allocation3], 0
    loop: start=0, step=1, limit=6
    $region2: #{upsample_forward.1} parent=1 // loop_pre_header
      _
    $region3: #{upsample_forward.1} parent=1 // loop_header
      %s9 = sphi 0, %s13
      %p10 = scmp.ge.s32.totalorder %s9, 6
      %s16 = sphi 0, %s28
      %s17 = sphi 0, %s24
      %s18 = sphi 0, %s16
      %s19 = sphi 0, %s17
      %s20 = sphi 0, %s18
      %s21 = sphi 0, %s19
      %s31 = sphi 0, %s33
      %s34 = sphi 0, %s31
      %s35 = sphi 0, %s34
      %s51 = sphi 0, %s35
      %s55 = sphi 0, %s55
      %s57 = sphi 0, %s55
      %s58 = sphi 0, %s57
      %s72 = sphi 0, %s58
      %s80 = sphi 0, %s82
      %s83 = sphi 0, %s80
      %s84 = sphi 0, %s83
      %s100 = sphi 0, %s84
    $region4: #{upsample_forward.1} parent=1 // loop_header_branch
      %12 = sbr.rel (%p10) target = $region8
    $region5: #{upsample_forward.1} parent=1 // loop_body
      %s14 = ssub.s32 %s9, 1
      %s15 = ssub.s32 %s9, 2
      %s22 = sadd.s32 1, %s17
      %p23 = scmp.ge.s32.totalorder %s22, 2
      %s24 = scalar_select %p23, 0, %s22
      %s25 = sadd.s32 1, %s16
      %s26 = scalar_select %p23, %s25, %s16
      %p27 = scmp.ge.s32.totalorder %s26, 2
      %s28 = scalar_select %p27, 0, %s26
      %s29 = ssub.s32 %s16, %s28
      %p30 = scmp.eq.s32.totalorder %s29, 0
      %s32 = sadd.s32 %s31, 1
      %s33 = scalar_select %p30, %s31, %s32
      %p36 = pneg %p30
      %p37 = scmp.eq.s32.totalorder %s9, 3
      %p38 = por %p36, %p37
      %p39 = scmp.ne.s32.totalorder %s31, %s34
      %p40 = scmp.eq.s32.totalorder %s9, 0
      %p41 = por %p39, %p40
      %p42 = scmp.ne.s32.totalorder %s31, %s34
      %p43 = scmp.eq.s32.totalorder %s14, 3
      %p44 = por %p42, %p43
      %p45 = scmp.ne.s32.totalorder %s34, %s35
      %p46 = scmp.eq.s32.totalorder %s14, 0
      %p47 = por %p45, %p46
      %p48 = scmp.ne.s32.totalorder %s34, %s35
      %p49 = scmp.eq.s32.totalorder %s15, 3
      %p50 = por %p48, %p49
      %p52 = scmp.ne.s32.totalorder %s35, %s51
      %p53 = scmp.eq.s32.totalorder %s15, 0
      %p54 = por %p52, %p53
      %s56 = sadd.s32 %s55, 1
      %p59 = scmp.eq.s32.totalorder %s9, 3
      %p60 = scmp.ne.s32.totalorder %s55, %s57
      %p61 = scmp.eq.s32.totalorder %s9, 0
      %p62 = por %p60, %p61
      %p63 = scmp.ne.s32.totalorder %s55, %s57
      %p64 = scmp.eq.s32.totalorder %s14, 3
      %p65 = por %p63, %p64
      %p66 = scmp.ne.s32.totalorder %s57, %s58
      %p67 = scmp.eq.s32.totalorder %s14, 0
      %p68 = por %p66, %p67
      %p69 = scmp.ne.s32.totalorder %s57, %s58
      %p70 = scmp.eq.s32.totalorder %s15, 3
      %p71 = por %p69, %p70
      %p73 = scmp.ne.s32.totalorder %s58, %s72
      %p74 = scmp.eq.s32.totalorder %s15, 0
      %p75 = por %p73, %p74
      %s76 = ssub.s32 %s16, %s28
      %s77 = ssub.s32 %s17, %s24
      %s78 = sor.u32 %s76, %s77
      %p79 = scmp.eq.s32.totalorder %s78, 0
      %s81 = sadd.s32 %s80, 1
      %s82 = scalar_select %p79, %s80, %s81
      %p85 = pneg %p79
      %p86 = scmp.eq.s32.totalorder %s9, 3
      %p87 = por %p85, %p86
      %p88 = scmp.ne.s32.totalorder %s80, %s83
      %p89 = scmp.eq.s32.totalorder %s9, 0
      %p90 = por %p88, %p89
      %p91 = scmp.ne.s32.totalorder %s80, %s83
      %p92 = scmp.eq.s32.totalorder %s14, 3
      %p93 = por %p91, %p92
      %p94 = scmp.ne.s32.totalorder %s83, %s84
      %p95 = scmp.eq.s32.totalorder %s14, 0
      %p96 = por %p94, %p95
      %p97 = scmp.ne.s32.totalorder %s83, %s84
      %p98 = scmp.eq.s32.totalorder %s15, 3
      %p99 = por %p97, %p98
      %p101 = scmp.ne.s32.totalorder %s84, %s100
      %p102 = scmp.eq.s32.totalorder %s15, 0
      %p103 = por %p101, %p102
      %p104 = scmp.le.s32.totalorder 1, %s9
      %p105 = scmp.lt.s32.totalorder %s9, 5
      %p106 = pnand %p104, %p105
      %p107 = pneg %p106
      // Predicated region
      $region9: #{upsample_forward.1} parent=5 // pred_check
        _
      $region10: #{upsample_forward.1} parent=5 // pred_check_branch
        %109 = sbr.rel (%p106) target = $region12
      $region11: #{upsample_forward.1} parent=5 // pred_region
        %s110 = ssub.s32 %s9, 1
        // Predicated region
        $region13: #{upsample_forward.1} parent=11 // pred_check
          %p111 = pneg %p68
        $region14: #{upsample_forward.1} parent=11 // pred_check_branch
          %113 = sbr.rel (%p111) target = $region16
        $region15: #{upsample_forward.1} parent=11 // pred_region
          %s115 = ssub.s32 48, 48
          %116 = vsyncadd [#allocation3], %s115
          %s118 = sshll.u32 %s1, 4
          %s119 = int_to_ptr.vmem [resolvable:$true] %s118
          %121 = dma.vmem_to_smem %s119, 48, [#allocation2], [#allocation3]
        $region16: #{upsample_forward.1} parent=11 // pred_fallthru
          _
      $region12: #{upsample_forward.1} parent=5 // pred_fallthru
        _
      %p122 = scmp.lt.s32.totalorder %s9, 4
      // Predicated region
      $region17: #{upsample_forward.1} parent=5 // pred_check
        %p123 = pneg %p122
      $region18: #{upsample_forward.1} parent=5 // pred_check_branch
        %125 = sbr.rel (%p123) target = $region20
      $region19: #{upsample_forward.1} parent=5 // pred_region
        // Predicated region
        $region21: #{upsample_forward.1} parent=19 // pred_check
          %p126 = pneg %p41
        $region22: #{upsample_forward.1} parent=19 // pred_check_branch
          %128 = sbr.rel (%p126) target = $region24
        $region23: #{upsample_forward.1} parent=19 // pred_region
          %p129 = scmp.lt.s32.totalorder %s16, 1
          %s130 = scalar_select %p129, %s16, 1
          %s131 = smul.addr %s130, 8
          %s132 = smul.addr %s131, 8
          %s133 = scalar_lea.vmem %s0, %s132
        $region24: #{upsample_forward.1} parent=19 // pred_fallthru
          _
      $region20: #{upsample_forward.1} parent=5 // pred_fallthru
        _
      %p134 = scmp.le.s32.totalorder 1, %s9
      %p135 = scmp.lt.s32.totalorder %s9, 5
      %p136 = pnand %p134, %p135
      %p137 = pneg %p136
      // Predicated region
      $region25: #{upsample_forward.1} parent=5 // pred_check
        _
      $region26: #{upsample_forward.1} parent=5 // pred_check_branch
        %139 = sbr.rel (%p136) target = $region28
      $region27: #{upsample_forward.1} parent=5 // pred_region
        %s140 = ssub.s32 %s9, 1
        // Predicated region
        $region29: #{upsample_forward.1} parent=27 // pred_check
          %p141 = pneg %p68
        $region30: #{upsample_forward.1} parent=27 // pred_check_branch
          %143 = sbr.rel (%p141) target = $region32
        $region31: #{upsample_forward.1} parent=27 // pred_region
          %144 = dma.done [#allocation3], 48
        $region32: #{upsample_forward.1} parent=27 // pred_fallthru
          _
        %145 = sfence
        %p146 = scmp.lt.s32.totalorder %s18, 1
        %s147 = scalar_select %p146, %s18, 1
        %s148 = smul.addr %s147, 8
        %s149 = smul.addr %s148, 8
        %s150 = scalar_lea.vmem %s0, %s149
        %p151 = pneg %p47
        %p152 = pneg %p44
        %p153 = pneg %p68
        %p154 = pneg %p65
        %p155 = pneg %p96
        %p156 = pneg %p93
        %s157 = smul.u32 4, %s19
        %p158 = scmp.lt.s32.totalorder %s18, 1
        %s159 = scalar_select %p158, %s18, 1
        %p160 = scmp.lt.s32.totalorder %s157, 7
        %s161 = scalar_select %p160, %s157, 7
        %s162 = smul.addr %s161, 2
        %s163 = smul.addr %s159, 16
        %s164 = sadd.s32 %s162, %s163
        %s165 = smul.addr %s164, 8
        %s166 = scalar_lea.vmem %s2, %s165
        %p167 = scmp.lt.s32.totalorder %s18, 1
        %s168 = scalar_select %p167, %s18, 1
        %s169 = smul.addr %s168, 8
        %s170 = smul.addr %s169, 8
        %s171 = scalar_lea.vmem %s0, %s170
        %s172 = smul.u32 4, %s19
        %p173 = scmp.lt.s32.totalorder %s18, 1
        %s174 = scalar_select %p173, %s18, 1
        %p175 = scmp.lt.s32.totalorder %s172, 7
        %s176 = scalar_select %p175, %s172, 7
        %s177 = smul.addr %s176, 2
        %s178 = smul.addr %s174, 16
        %s179 = sadd.s32 %s177, %s178
        %s180 = smul.addr %s179, 8
        %s181 = scalar_lea.vmem %s2, %s180
        %s182 = smul.u32 4, %s19
        %v183 = vld [vmem:[%s171] sm:$0xff]
        %v184 = vld [vmem:[%s171 + $0x8] sm:$0xff]
        %v185 = vld [vmem:[%s171 + $0x10] sm:$0xff]
        %v186 = vld [vmem:[%s171 + $0x18] sm:$0xff]
        %v187 = vld [vmem:[%s171 + $0x20] sm:$0xff]
        %v188 = vld [vmem:[%s171 + $0x28] sm:$0xff]
        %v189 = vld [vmem:[%s171 + $0x30] sm:$0xff]
        %v190 = vld [vmem:[%s171 + $0x38] sm:$0xff]
        %199 = vrot.lane.b32.xlu0 %v183, 1
        %v200 = vpop.permute.xlu0 %199
        %201 = vrot.lane.b32.xlu0 %v184, 1
        %v202 = vpop.permute.xlu0 %201
        %203 = vrot.lane.b32.xlu0 %v185, 1
        %v204 = vpop.permute.xlu0 %203
        %205 = vrot.lane.b32.xlu0 %v186, 1
        %v206 = vpop.permute.xlu0 %205
        %207 = vrot.lane.b32.xlu0 %v187, 1
        %v208 = vpop.permute.xlu0 %207
        %209 = vrot.lane.b32.xlu0 %v188, 1
        %v210 = vpop.permute.xlu0 %209
        %211 = vrot.lane.b32.xlu0 %v189, 1
        %v212 = vpop.permute.xlu0 %211
        %213 = vrot.lane.b32.xlu0 %v190, 1
        %v214 = vpop.permute.xlu0 %213
        %vm223 = vcmask 7168
        %v224 = vsel %vm223, 0.0, %v200
        %v225 = vsel %vm223, 0.0, %v202
        %v226 = vsel %vm223, 0.0, %v204
        %v227 = vsel %vm223, 0.0, %v206
        %v228 = vsel %vm223, 0.0, %v208
        %v229 = vsel %vm223, 0.0, %v210
        %v230 = vsel %vm223, 0.0, %v212
        %v231 = vsel %vm223, 0.0, %v214
        %vm232 = vcmask 138240
        %v233 = vsel %vm232, %v224, 0.0
        %v234 = vsel %vm232, %v225, 0.0
        %v235 = vsel %vm232, %v226, 0.0
        %v236 = vsel %vm232, %v227, 0.0
        %v237 = vsel %vm232, %v228, 0.0
        %v238 = vsel %vm232, %v229, 0.0
        %v239 = vsel %vm232, %v230, 0.0
        %v240 = vsel %vm232, %v231, 0.0
        %s241 = smul.u32 %s19, 144
        %s242 = sld [smem:[#allocation2 + %s241]]
        %v243 = vstv %s242
        %v244 = vmul.f32 %v243, 0.0
        %v245 = vmul.f32 %v243, %v233
        %v246 = vmul.f32 %v243, %v234
        %v247 = vadd.f32 %v244, 0.0
        %v248 = vadd.f32 %v245, 0.0
        %v249 = vadd.f32 %v246, 0.0
        %s250 = smul.u32 %s19, 4
        %s251 = sadd.s32 %s250, 1
        %s252 = smul.u32 %s251, 36
        %s253 = sld [smem:[#allocation2 + %s252]]
        %v254 = vstv %s253
        %v255 = vmul.f32 %v254, 0.0
        %v256 = vmul.f32 %v254, %v233
        %v257 = vmul.f32 %v254, %v234
        %v258 = vadd.f32 %v255, 0.0
        %v259 = vadd.f32 %v256, 0.0
        %v260 = vadd.f32 %v257, 0.0
        %s261 = sadd.s32 %s250, 2
        %s262 = smul.u32 %s261, 36
        %s263 = sld [smem:[#allocation2 + %s262]]
        %v264 = vstv %s263
        %v265 = vmul.f32 %v264, 0.0
        %v266 = vmul.f32 %v264, %v233
        %v267 = vmul.f32 %v264, %v234
        %v268 = vadd.f32 %v265, 0.0
        %v269 = vadd.f32 %v266, 0.0
        %v270 = vadd.f32 %v267, 0.0
        %s271 = sadd.s32 %s250, 3
        %s272 = smul.u32 %s271, 36
        %s273 = sld [smem:[#allocation2 + %s272]]
        %v274 = vstv %s273
        %v275 = vmul.f32 %v274, 0.0
        %v276 = vmul.f32 %v274, %v233
        %v277 = vmul.f32 %v274, %v234
        %v278 = vadd.f32 %v275, 0.0
        %v279 = vadd.f32 %v276, 0.0
        %v280 = vadd.f32 %v277, 0.0
        %s281 = sadd.s32 %s241, 1
        %s282 = sld [smem:[#allocation2 + %s281]]
        %v283 = vstv %s282
        %v284 = vmul.f32 %v283, 0.0
        %v285 = vmul.f32 %v283, %v233
        %v286 = vmul.f32 %v283, %v234
        %290 = vrot.lane.b32.xlu0 %v284, 127
        %v291 = vpop.permute.xlu0 %290
        %292 = vrot.lane.b32.xlu0 %v285, 127
        %v293 = vpop.permute.xlu0 %292
        %294 = vrot.lane.b32.xlu0 %v286, 127
        %v295 = vpop.permute.xlu0 %294
        %v299 = vadd.f32 %v247, %v291
        %v300 = vadd.f32 %v248, %v293
        %v301 = vadd.f32 %v249, %v295
        %s302 = sadd.s32 %s252, 1
        %s303 = sld [smem:[#allocation2 + %s302]]
        %v304 = vstv %s303
        %v305 = vmul.f32 %v304, 0.0
        %v306 = vmul.f32 %v304, %v233
        %v307 = vmul.f32 %v304, %v234
        %311 = vrot.lane.b32.xlu0 %v305, 127
        %v312 = vpop.permute.xlu0 %311
        %313 = vrot.lane.b32.xlu0 %v306, 127
        %v314 = vpop.permute.xlu0 %313
        %315 = vrot.lane.b32.xlu0 %v307, 127
        %v316 = vpop.permute.xlu0 %315
        %v320 = vadd.f32 %v258, %v312
        %v321 = vadd.f32 %v259, %v314
        %v322 = vadd.f32 %v260, %v316
        %s323 = sadd.s32 %s262, 1
        %s324 = sld [smem:[#allocation2 + %s323]]
        %v325 = vstv %s324
        %v326 = vmul.f32 %v325, 0.0
        %v327 = vmul.f32 %v325, %v233
        %v328 = vmul.f32 %v325, %v234
        %332 = vrot.lane.b32.xlu0 %v326, 127
        %v333 = vpop.permute.xlu0 %332
        %334 = vrot.lane.b32.xlu0 %v327, 127
        %v335 = vpop.permute.xlu0 %334
        %336 = vrot.lane.b32.xlu0 %v328, 127
        %v337 = vpop.permute.xlu0 %336
        %v341 = vadd.f32 %v268, %v333
        %v342 = vadd.f32 %v269, %v335
        %v343 = vadd.f32 %v270, %v337
        %s344 = sadd.s32 %s272, 1
        %s345 = sld [smem:[#allocation2 + %s344]]
        %v346 = vstv %s345
        %v347 = vmul.f32 %v346, 0.0
        %v348 = vmul.f32 %v346, %v233
        %v349 = vmul.f32 %v346, %v234
        %353 = vrot.lane.b32.xlu0 %v347, 127
        %v354 = vpop.permute.xlu0 %353
        %355 = vrot.lane.b32.xlu0 %v348, 127
        %v356 = vpop.permute.xlu0 %355
        %357 = vrot.lane.b32.xlu0 %v349, 127
        %v358 = vpop.permute.xlu0 %357
        %v362 = vadd.f32 %v278, %v354
        %v363 = vadd.f32 %v279, %v356
        %v364 = vadd.f32 %v280, %v358
        %s365 = sadd.s32 %s241, 2
        %s366 = sld [smem:[#allocation2 + %s365]]
        %v367 = vstv %s366
        %v368 = vmul.f32 %v367, 0.0
        %v369 = vmul.f32 %v367, %v233
        %v370 = vmul.f32 %v367, %v234
        %374 = vrot.lane.b32.xlu0 %v368, 126
        %v375 = vpop.permute.xlu0 %374
        %376 = vrot.lane.b32.xlu0 %v369, 126
        %v377 = vpop.permute.xlu0 %376
        %378 = vrot.lane.b32.xlu0 %v370, 126
        %v379 = vpop.permute.xlu0 %378
        %v383 = vadd.f32 %v299, %v375
        %v384 = vadd.f32 %v300, %v377
        %v385 = vadd.f32 %v301, %v379
        %s386 = sadd.s32 %s252, 2
        %s387 = sld [smem:[#allocation2 + %s386]]
        %v388 = vstv %s387
        %v389 = vmul.f32 %v388, 0.0
        %v390 = vmul.f32 %v388, %v233
        %v391 = vmul.f32 %v388, %v234
        %395 = vrot.lane.b32.xlu0 %v389, 126
        %v396 = vpop.permute.xlu0 %395
        %397 = vrot.lane.b32.xlu0 %v390, 126
        %v398 = vpop.permute.xlu0 %397
        %399 = vrot.lane.b32.xlu0 %v391, 126
        %v400 = vpop.permute.xlu0 %399
        %v404 = vadd.f32 %v320, %v396
        %v405 = vadd.f32 %v321, %v398
        %v406 = vadd.f32 %v322, %v400
        %s407 = sadd.s32 %s262, 2
        %s408 = sld [smem:[#allocation2 + %s407]]
        %v409 = vstv %s408
        %v410 = vmul.f32 %v409, 0.0
        %v411 = vmul.f32 %v409, %v233
        %v412 = vmul.f32 %v409, %v234
        %416 = vrot.lane.b32.xlu0 %v410, 126
        %v417 = vpop.permute.xlu0 %416
        %418 = vrot.lane.b32.xlu0 %v411, 126
        %v419 = vpop.permute.xlu0 %418
        %420 = vrot.lane.b32.xlu0 %v412, 126
        %v421 = vpop.permute.xlu0 %420
        %v425 = vadd.f32 %v341, %v417
        %v426 = vadd.f32 %v342, %v419
        %v427 = vadd.f32 %v343, %v421
        %s428 = sadd.s32 %s272, 2
        %s429 = sld [smem:[#allocation2 + %s428]]
        %v430 = vstv %s429
        %v431 = vmul.f32 %v430, 0.0
        %v432 = vmul.f32 %v430, %v233
        %v433 = vmul.f32 %v430, %v234
        %437 = vrot.lane.b32.xlu0 %v431, 126
        %v438 = vpop.permute.xlu0 %437
        %439 = vrot.lane.b32.xlu0 %v432, 126
        %v440 = vpop.permute.xlu0 %439
        %441 = vrot.lane.b32.xlu0 %v433, 126
        %v442 = vpop.permute.xlu0 %441
        %v446 = vadd.f32 %v362, %v438
        %v447 = vadd.f32 %v363, %v440
        %v448 = vadd.f32 %v364, %v442
        %s449 = sadd.s32 %s241, 3
        %s450 = sld [smem:[#allocation2 + %s449]]
        %v451 = vstv %s450
        %v452 = vmul.f32 %v451, %v233
        %v453 = vmul.f32 %v451, %v234
        %vm456 = vcmask 1046528
        %v457 = vrot.slane %v452, 1
        %v458 = vrot.slane %v453, 1
        %v459 = vsel %vm456, %v457, %v458
        %v463 = vadd.f32 %v383, %v457
        %v464 = vadd.f32 %v384, %v459
        %v465 = vadd.f32 %v385, %v458
        %s466 = sadd.s32 %s252, 3
        %s467 = sld [smem:[#allocation2 + %s466]]
        %v468 = vstv %s467
        %v469 = vmul.f32 %v468, %v233
        %v470 = vmul.f32 %v468, %v234
        %v473 = vrot.slane %v469, 1
        %v474 = vrot.slane %v470, 1
        %v475 = vsel %vm456, %v473, %v474
        %v479 = vadd.f32 %v404, %v473
        %v480 = vadd.f32 %v405, %v475
        %v481 = vadd.f32 %v406, %v474
        %s482 = sadd.s32 %s262, 3
        %s483 = sld [smem:[#allocation2 + %s482]]
        %v484 = vstv %s483
        %v485 = vmul.f32 %v484, %v233
        %v486 = vmul.f32 %v484, %v234
        %v489 = vrot.slane %v485, 1
        %v490 = vrot.slane %v486, 1
        %v491 = vsel %vm456, %v489, %v490
        %v495 = vadd.f32 %v425, %v489
        %v496 = vadd.f32 %v426, %v491
        %v497 = vadd.f32 %v427, %v490
        %s498 = sadd.s32 %s272, 3
        %s499 = sld [smem:[#allocation2 + %s498]]
        %v500 = vstv %s499
        %v501 = vmul.f32 %v500, %v233
        %v502 = vmul.f32 %v500, %v234
        %v505 = vrot.slane %v501, 1
        %v506 = vrot.slane %v502, 1
        %v507 = vsel %vm456, %v505, %v506
        %v511 = vadd.f32 %v446, %v505
        %v512 = vadd.f32 %v447, %v507
        %v513 = vadd.f32 %v448, %v506
        %s514 = sadd.s32 %s241, 4
        %s515 = sld [smem:[#allocation2 + %s514]]
        %v516 = vstv %s515
        %v517 = vmul.f32 %v516, %v233
        %v518 = vmul.f32 %v516, %v234
        %v521 = vrot.slane %v517, 1
        %v522 = vrot.slane %v518, 1
        %v523 = vsel %vm456, %v521, %v522
        %524 = vrot.lane.b32.xlu0 %v521, 127
        %v525 = vpop.permute.xlu0 %524
        %526 = vrot.lane.b32.xlu0 %v523, 127
        %v527 = vpop.permute.xlu0 %526
        %528 = vrot.lane.b32.xlu0 %v522, 127
        %v529 = vpop.permute.xlu0 %528
        %v533 = vadd.f32 %v463, %v525
        %v534 = vadd.f32 %v464, %v527
        %v535 = vadd.f32 %v465, %v529
        %s536 = sadd.s32 %s252, 4
        %s537 = sld [smem:[#allocation2 + %s536]]
        %v538 = vstv %s537
        %v539 = vmul.f32 %v538, %v233
        %v540 = vmul.f32 %v538, %v234
        %v543 = vrot.slane %v539, 1
        %v544 = vrot.slane %v540, 1
        %v545 = vsel %vm456, %v543, %v544
        %546 = vrot.lane.b32.xlu0 %v543, 127
        %v547 = vpop.permute.xlu0 %546
        %548 = vrot.lane.b32.xlu0 %v545, 127
        %v549 = vpop.permute.xlu0 %548
        %550 = vrot.lane.b32.xlu0 %v544, 127
        %v551 = vpop.permute.xlu0 %550
        %v555 = vadd.f32 %v479, %v547
        %v556 = vadd.f32 %v480, %v549
        %v557 = vadd.f32 %v481, %v551
        %s558 = sadd.s32 %s262, 4
        %s559 = sld [smem:[#allocation2 + %s558]]
        %v560 = vstv %s559
        %v561 = vmul.f32 %v560, %v233
        %v562 = vmul.f32 %v560, %v234
        %v565 = vrot.slane %v561, 1
        %v566 = vrot.slane %v562, 1
        %v567 = vsel %vm456, %v565, %v566
        %568 = vrot.lane.b32.xlu0 %v565, 127
        %v569 = vpop.permute.xlu0 %568
        %570 = vrot.lane.b32.xlu0 %v567, 127
        %v571 = vpop.permute.xlu0 %570
        %572 = vrot.lane.b32.xlu0 %v566, 127
        %v573 = vpop.permute.xlu0 %572
        %v577 = vadd.f32 %v495, %v569
        %v578 = vadd.f32 %v496, %v571
        %v579 = vadd.f32 %v497, %v573
        %s580 = sadd.s32 %s272, 4
        %s581 = sld [smem:[#allocation2 + %s580]]
        %v582 = vstv %s581
        %v583 = vmul.f32 %v582, %v233
        %v584 = vmul.f32 %v582, %v234
        %v587 = vrot.slane %v583, 1
        %v588 = vrot.slane %v584, 1
        %v589 = vsel %vm456, %v587, %v588
        %590 = vrot.lane.b32.xlu0 %v587, 127
        %v591 = vpop.permute.xlu0 %590
        %592 = vrot.lane.b32.xlu0 %v589, 127
        %v593 = vpop.permute.xlu0 %592
        %594 = vrot.lane.b32.xlu0 %v588, 127
        %v595 = vpop.permute.xlu0 %594
        %v599 = vadd.f32 %v511, %v591
        %v600 = vadd.f32 %v512, %v593
        %v601 = vadd.f32 %v513, %v595
        %s602 = sadd.s32 %s241, 5
        %s603 = sld [smem:[#allocation2 + %s602]]
        %v604 = vstv %s603
        %v605 = vmul.f32 %v604, %v233
        %v606 = vmul.f32 %v604, %v234
        %v609 = vrot.slane %v605, 1
        %v610 = vrot.slane %v606, 1
        %v611 = vsel %vm456, %v609, %v610
        %612 = vrot.lane.b32.xlu0 %v609, 126
        %v613 = vpop.permute.xlu0 %612
        %614 = vrot.lane.b32.xlu0 %v611, 126
        %v615 = vpop.permute.xlu0 %614
        %616 = vrot.lane.b32.xlu0 %v610, 126
        %v617 = vpop.permute.xlu0 %616
        %v621 = vadd.f32 %v533, %v613
        %v622 = vadd.f32 %v534, %v615
        %v623 = vadd.f32 %v535, %v617
        %s624 = sadd.s32 %s252, 5
        %s625 = sld [smem:[#allocation2 + %s624]]
        %v626 = vstv %s625
        %v627 = vmul.f32 %v626, %v233
        %v628 = vmul.f32 %v626, %v234
        %v631 = vrot.slane %v627, 1
        %v632 = vrot.slane %v628, 1
        %v633 = vsel %vm456, %v631, %v632
        %634 = vrot.lane.b32.xlu0 %v631, 126
        %v635 = vpop.permute.xlu0 %634
        %636 = vrot.lane.b32.xlu0 %v633, 126
        %v637 = vpop.permute.xlu0 %636
        %638 = vrot.lane.b32.xlu0 %v632, 126
        %v639 = vpop.permute.xlu0 %638
        %v643 = vadd.f32 %v555, %v635
        %v644 = vadd.f32 %v556, %v637
        %v645 = vadd.f32 %v557, %v639
        %s646 = sadd.s32 %s262, 5
        %s647 = sld [smem:[#allocation2 + %s646]]
        %v648 = vstv %s647
        %v649 = vmul.f32 %v648, %v233
        %v650 = vmul.f32 %v648, %v234
        %v653 = vrot.slane %v649, 1
        %v654 = vrot.slane %v650, 1
        %v655 = vsel %vm456, %v653, %v654
        %656 = vrot.lane.b32.xlu0 %v653, 126
        %v657 = vpop.permute.xlu0 %656
        %658 = vrot.lane.b32.xlu0 %v655, 126
        %v659 = vpop.permute.xlu0 %658
        %660 = vrot.lane.b32.xlu0 %v654, 126
        %v661 = vpop.permute.xlu0 %660
        %v665 = vadd.f32 %v577, %v657
        %v666 = vadd.f32 %v578, %v659
        %v667 = vadd.f32 %v579, %v661
        %s668 = sadd.s32 %s272, 5
        %s669 = sld [smem:[#allocation2 + %s668]]
        %v670 = vstv %s669
        %v671 = vmul.f32 %v670, %v233
        %v672 = vmul.f32 %v670, %v234
        %v675 = vrot.slane %v671, 1
        %v676 = vrot.slane %v672, 1
        %v677 = vsel %vm456, %v675, %v676
        %678 = vrot.lane.b32.xlu0 %v675, 126
        %v679 = vpop.permute.xlu0 %678
        %680 = vrot.lane.b32.xlu0 %v677, 126
        %v681 = vpop.permute.xlu0 %680
        %682 = vrot.lane.b32.xlu0 %v676, 126
        %v683 = vpop.permute.xlu0 %682
        %v687 = vadd.f32 %v599, %v679
        %v688 = vadd.f32 %v600, %v681
        %v689 = vadd.f32 %v601, %v683
        %s690 = sadd.s32 %s241, 6
        %s691 = sld [smem:[#allocation2 + %s690]]
        %v692 = vstv %s691
        %v693 = vmul.f32 %v692, %v233
        %v694 = vmul.f32 %v692, %v234
        %v695 = vmul.f32 %v692, 0.0
        %vm699 = vcmask 1045504
        %v700 = vrot.slane %v693, 2
        %v701 = vrot.slane %v694, 2
        %v702 = vsel %vm699, %v700, %v701
        %v703 = vrot.slane %v695, 2
        %v704 = vsel %vm699, %v701, %v703
        %v708 = vadd.f32 %v621, %v700
        %v709 = vadd.f32 %v622, %v702
        %v710 = vadd.f32 %v623, %v704
        %s711 = sadd.s32 %s252, 6
        %s712 = sld [smem:[#allocation2 + %s711]]
        %v713 = vstv %s712
        %v714 = vmul.f32 %v713, %v233
        %v715 = vmul.f32 %v713, %v234
        %v716 = vmul.f32 %v713, 0.0
        %v720 = vrot.slane %v714, 2
        %v721 = vrot.slane %v715, 2
        %v722 = vsel %vm699, %v720, %v721
        %v723 = vrot.slane %v716, 2
        %v724 = vsel %vm699, %v721, %v723
        %v728 = vadd.f32 %v643, %v720
        %v729 = vadd.f32 %v644, %v722
        %v730 = vadd.f32 %v645, %v724
        %s731 = sadd.s32 %s262, 6
        %s732 = sld [smem:[#allocation2 + %s731]]
        %v733 = vstv %s732
        %v734 = vmul.f32 %v733, %v233
        %v735 = vmul.f32 %v733, %v234
        %v736 = vmul.f32 %v733, 0.0
        %v740 = vrot.slane %v734, 2
        %v741 = vrot.slane %v735, 2
        %v742 = vsel %vm699, %v740, %v741
        %v743 = vrot.slane %v736, 2
        %v744 = vsel %vm699, %v741, %v743
        %v748 = vadd.f32 %v665, %v740
        %v749 = vadd.f32 %v666, %v742
        %v750 = vadd.f32 %v667, %v744
        %s751 = sadd.s32 %s272, 6
        %s752 = sld [smem:[#allocation2 + %s751]]
        %v753 = vstv %s752
        %v754 = vmul.f32 %v753, %v233
        %v755 = vmul.f32 %v753, %v234
        %v756 = vmul.f32 %v753, 0.0
        %v760 = vrot.slane %v754, 2
        %v761 = vrot.slane %v755, 2
        %v762 = vsel %vm699, %v760, %v761
        %v763 = vrot.slane %v756, 2
        %v764 = vsel %vm699, %v761, %v763
        %v768 = vadd.f32 %v687, %v760
        %v769 = vadd.f32 %v688, %v762
        %v770 = vadd.f32 %v689, %v764
        %s771 = sadd.s32 %s241, 7
        %s772 = sld [smem:[#allocation2 + %s771]]
        %v773 = vstv %s772
        %v774 = vmul.f32 %v773, %v233
        %v775 = vmul.f32 %v773, %v234
        %v776 = vmul.f32 %v773, 0.0
        %v780 = vrot.slane %v774, 2
        %v781 = vrot.slane %v775, 2
        %v782 = vsel %vm699, %v780, %v781
        %v783 = vrot.slane %v776, 2
        %v784 = vsel %vm699, %v781, %v783
        %785 = vrot.lane.b32.xlu0 %v780, 127
        %v786 = vpop.permute.xlu0 %785
        %787 = vrot.lane.b32.xlu0 %v782, 127
        %v788 = vpop.permute.xlu0 %787
        %789 = vrot.lane.b32.xlu0 %v784, 127
        %v790 = vpop.permute.xlu0 %789
        %v794 = vadd.f32 %v708, %v786
        %v795 = vadd.f32 %v709, %v788
        %v796 = vadd.f32 %v710, %v790
        %s797 = sadd.s32 %s252, 7
        %s798 = sld [smem:[#allocation2 + %s797]]
        %v799 = vstv %s798
        %v800 = vmul.f32 %v799, %v233
        %v801 = vmul.f32 %v799, %v234
        %v802 = vmul.f32 %v799, 0.0
        %v806 = vrot.slane %v800, 2
        %v807 = vrot.slane %v801, 2
        %v808 = vsel %vm699, %v806, %v807
        %v809 = vrot.slane %v802, 2
        %v810 = vsel %vm699, %v807, %v809
        %811 = vrot.lane.b32.xlu0 %v806, 127
        %v812 = vpop.permute.xlu0 %811
        %813 = vrot.lane.b32.xlu0 %v808, 127
        %v814 = vpop.permute.xlu0 %813
        %815 = vrot.lane.b32.xlu0 %v810, 127
        %v816 = vpop.permute.xlu0 %815
        %v820 = vadd.f32 %v728, %v812
        %v821 = vadd.f32 %v729, %v814
        %v822 = vadd.f32 %v730, %v816
        %s823 = sadd.s32 %s262, 7
        %s824 = sld [smem:[#allocation2 + %s823]]
        %v825 = vstv %s824
        %v826 = vmul.f32 %v825, %v233
        %v827 = vmul.f32 %v825, %v234
        %v828 = vmul.f32 %v825, 0.0
        %v832 = vrot.slane %v826, 2
        %v833 = vrot.slane %v827, 2
        %v834 = vsel %vm699, %v832, %v833
        %v835 = vrot.slane %v828, 2
        %v836 = vsel %vm699, %v833, %v835
        %837 = vrot.lane.b32.xlu0 %v832, 127
        %v838 = vpop.permute.xlu0 %837
        %839 = vrot.lane.b32.xlu0 %v834, 127
        %v840 = vpop.permute.xlu0 %839
        %841 = vrot.lane.b32.xlu0 %v836, 127
        %v842 = vpop.permute.xlu0 %841
        %v846 = vadd.f32 %v748, %v838
        %v847 = vadd.f32 %v749, %v840
        %v848 = vadd.f32 %v750, %v842
        %s849 = sadd.s32 %s272, 7
        %s850 = sld [smem:[#allocation2 + %s849]]
        %v851 = vstv %s850
        %v852 = vmul.f32 %v851, %v233
        %v853 = vmul.f32 %v851, %v234
        %v854 = vmul.f32 %v851, 0.0
        %v858 = vrot.slane %v852, 2
        %v859 = vrot.slane %v853, 2
        %v860 = vsel %vm699, %v858, %v859
        %v861 = vrot.slane %v854, 2
        %v862 = vsel %vm699, %v859, %v861
        %863 = vrot.lane.b32.xlu0 %v858, 127
        %v864 = vpop.permute.xlu0 %863
        %865 = vrot.lane.b32.xlu0 %v860, 127
        %v866 = vpop.permute.xlu0 %865
        %867 = vrot.lane.b32.xlu0 %v862, 127
        %v868 = vpop.permute.xlu0 %867
        %v872 = vadd.f32 %v768, %v864
        %v873 = vadd.f32 %v769, %v866
        %v874 = vadd.f32 %v770, %v868
        %s875 = sadd.s32 %s241, 8
        %s876 = sld [smem:[#allocation2 + %s875]]
        %v877 = vstv %s876
        %v878 = vmul.f32 %v877, %v233
        %v879 = vmul.f32 %v877, %v234
        %v880 = vmul.f32 %v877, 0.0
        %v884 = vrot.slane %v878, 2
        %v885 = vrot.slane %v879, 2
        %v886 = vsel %vm699, %v884, %v885
        %v887 = vrot.slane %v880, 2
        %v888 = vsel %vm699, %v885, %v887
        %889 = vrot.lane.b32.xlu0 %v884, 126
        %v890 = vpop.permute.xlu0 %889
        %891 = vrot.lane.b32.xlu0 %v886, 126
        %v892 = vpop.permute.xlu0 %891
        %893 = vrot.lane.b32.xlu0 %v888, 126
        %v894 = vpop.permute.xlu0 %893
        %v898 = vadd.f32 %v794, %v890
        %v899 = vadd.f32 %v795, %v892
        %v900 = vadd.f32 %v796, %v894
        %s901 = sadd.s32 %s252, 8
        %s902 = sld [smem:[#allocation2 + %s901]]
        %v903 = vstv %s902
        %v904 = vmul.f32 %v903, %v233
        %v905 = vmul.f32 %v903, %v234
        %v906 = vmul.f32 %v903, 0.0
        %v910 = vrot.slane %v904, 2
        %v911 = vrot.slane %v905, 2
        %v912 = vsel %vm699, %v910, %v911
        %v913 = vrot.slane %v906, 2
        %v914 = vsel %vm699, %v911, %v913
        %915 = vrot.lane.b32.xlu0 %v910, 126
        %v916 = vpop.permute.xlu0 %915
        %917 = vrot.lane.b32.xlu0 %v912, 126
        %v918 = vpop.permute.xlu0 %917
        %919 = vrot.lane.b32.xlu0 %v914, 126
        %v920 = vpop.permute.xlu0 %919
        %v924 = vadd.f32 %v820, %v916
        %v925 = vadd.f32 %v821, %v918
        %v926 = vadd.f32 %v822, %v920
        %s927 = sadd.s32 %s262, 8
        %s928 = sld [smem:[#allocation2 + %s927]]
        %v929 = vstv %s928
        %v930 = vmul.f32 %v929, %v233
        %v931 = vmul.f32 %v929, %v234
        %v932 = vmul.f32 %v929, 0.0
        %v936 = vrot.slane %v930, 2
        %v937 = vrot.slane %v931, 2
        %v938 = vsel %vm699, %v936, %v937
        %v939 = vrot.slane %v932, 2
        %v940 = vsel %vm699, %v937, %v939
        %941 = vrot.lane.b32.xlu0 %v936, 126
        %v942 = vpop.permute.xlu0 %941
        %943 = vrot.lane.b32.xlu0 %v938, 126
        %v944 = vpop.permute.xlu0 %943
        %945 = vrot.lane.b32.xlu0 %v940, 126
        %v946 = vpop.permute.xlu0 %945
        %v950 = vadd.f32 %v846, %v942
        %v951 = vadd.f32 %v847, %v944
        %v952 = vadd.f32 %v848, %v946
        %s953 = sadd.s32 %s272, 8
        %s954 = sld [smem:[#allocation2 + %s953]]
        %v955 = vstv %s954
        %v956 = vmul.f32 %v955, %v233
        %v957 = vmul.f32 %v955, %v234
        %v958 = vmul.f32 %v955, 0.0
        %v962 = vrot.slane %v956, 2
        %v963 = vrot.slane %v957, 2
        %v964 = vsel %vm699, %v962, %v963
        %v965 = vrot.slane %v958, 2
        %v966 = vsel %vm699, %v963, %v965
        %967 = vrot.lane.b32.xlu0 %v962, 126
        %v968 = vpop.permute.xlu0 %967
        %969 = vrot.lane.b32.xlu0 %v964, 126
        %v970 = vpop.permute.xlu0 %969
        %971 = vrot.lane.b32.xlu0 %v966, 126
        %v972 = vpop.permute.xlu0 %971
        %v976 = vadd.f32 %v872, %v968
        %v977 = vadd.f32 %v873, %v970
        %v978 = vadd.f32 %v874, %v972
        %s979 = smul.u32 %s19, 16
        %s980 = sadd.s32 %s979, 1
        %s981 = smul.u32 %s980, 9
        %s982 = sld [smem:[#allocation2 + %s981]]
        %v983 = vstv %s982
        %v984 = vmul.f32 %v983, 0.0
        %v985 = vmul.f32 %v983, %v235
        %v986 = vmul.f32 %v983, %v236
        %v987 = vadd.f32 %v898, %v984
        %v988 = vadd.f32 %v899, %v985
        %v989 = vadd.f32 %v900, %v986
        %s990 = smul.u32 %s251, 4
        %s991 = sadd.s32 %s990, 1
        %s992 = smul.u32 %s991, 9
        %s993 = sld [smem:[#allocation2 + %s992]]
        %v994 = vstv %s993
        %v995 = vmul.f32 %v994, 0.0
        %v996 = vmul.f32 %v994, %v235
        %v997 = vmul.f32 %v994, %v236
        %v998 = vadd.f32 %v924, %v995
        %v999 = vadd.f32 %v925, %v996
        %v1000 = vadd.f32 %v926, %v997
        %s1001 = smul.u32 %s261, 4
        %s1002 = sadd.s32 %s1001, 1
        %s1003 = smul.u32 %s1002, 9
        %s1004 = sld [smem:[#allocation2 + %s1003]]
        %v1005 = vstv %s1004
        %v1006 = vmul.f32 %v1005, 0.0
        %v1007 = vmul.f32 %v1005, %v235
        %v1008 = vmul.f32 %v1005, %v236
        %v1009 = vadd.f32 %v950, %v1006
        %v1010 = vadd.f32 %v951, %v1007
        %v1011 = vadd.f32 %v952, %v1008
        %s1012 = smul.u32 %s271, 4
        %s1013 = sadd.s32 %s1012, 1
        %s1014 = smul.u32 %s1013, 9
        %s1015 = sld [smem:[#allocation2 + %s1014]]
        %v1016 = vstv %s1015
        %v1017 = vmul.f32 %v1016, 0.0
        %v1018 = vmul.f32 %v1016, %v235
        %v1019 = vmul.f32 %v1016, %v236
        %v1020 = vadd.f32 %v976, %v1017
        %v1021 = vadd.f32 %v977, %v1018
        %v1022 = vadd.f32 %v978, %v1019
        %s1023 = sadd.s32 %s981, 1
        %s1024 = sld [smem:[#allocation2 + %s1023]]
        %v1025 = vstv %s1024
        %v1026 = vmul.f32 %v1025, 0.0
        %v1027 = vmul.f32 %v1025, %v235
        %v1028 = vmul.f32 %v1025, %v236
        %1032 = vrot.lane.b32.xlu0 %v1026, 127
        %v1033 = vpop.permute.xlu0 %1032
        %1034 = vrot.lane.b32.xlu0 %v1027, 127
        %v1035 = vpop.permute.xlu0 %1034
        %1036 = vrot.lane.b32.xlu0 %v1028, 127
        %v1037 = vpop.permute.xlu0 %1036
        %v1041 = vadd.f32 %v987, %v1033
        %v1042 = vadd.f32 %v988, %v1035
        %v1043 = vadd.f32 %v989, %v1037
        %s1044 = sadd.s32 %s992, 1
        %s1045 = sld [smem:[#allocation2 + %s1044]]
        %v1046 = vstv %s1045
        %v1047 = vmul.f32 %v1046, 0.0
        %v1048 = vmul.f32 %v1046, %v235
        %v1049 = vmul.f32 %v1046, %v236
        %1053 = vrot.lane.b32.xlu0 %v1047, 127
        %v1054 = vpop.permute.xlu0 %1053
        %1055 = vrot.lane.b32.xlu0 %v1048, 127
        %v1056 = vpop.permute.xlu0 %1055
        %1057 = vrot.lane.b32.xlu0 %v1049, 127
        %v1058 = vpop.permute.xlu0 %1057
        %v1062 = vadd.f32 %v998, %v1054
        %v1063 = vadd.f32 %v999, %v1056
        %v1064 = vadd.f32 %v1000, %v1058
        %s1065 = sadd.s32 %s1003, 1
        %s1066 = sld [smem:[#allocation2 + %s1065]]
        %v1067 = vstv %s1066
        %v1068 = vmul.f32 %v1067, 0.0
        %v1069 = vmul.f32 %v1067, %v235
        %v1070 = vmul.f32 %v1067, %v236
        %1074 = vrot.lane.b32.xlu0 %v1068, 127
        %v1075 = vpop.permute.xlu0 %1074
        %1076 = vrot.lane.b32.xlu0 %v1069, 127
        %v1077 = vpop.permute.xlu0 %1076
        %1078 = vrot.lane.b32.xlu0 %v1070, 127
        %v1079 = vpop.permute.xlu0 %1078
        %v1083 = vadd.f32 %v1009, %v1075
        %v1084 = vadd.f32 %v1010, %v1077
        %v1085 = vadd.f32 %v1011, %v1079
        %s1086 = sadd.s32 %s1014, 1
        %s1087 = sld [smem:[#allocation2 + %s1086]]
        %v1088 = vstv %s1087
        %v1089 = vmul.f32 %v1088, 0.0
        %v1090 = vmul.f32 %v1088, %v235
        %v1091 = vmul.f32 %v1088, %v236
        %1095 = vrot.lane.b32.xlu0 %v1089, 127
        %v1096 = vpop.permute.xlu0 %1095
        %1097 = vrot.lane.b32.xlu0 %v1090, 127
        %v1098 = vpop.permute.xlu0 %1097
        %1099 = vrot.lane.b32.xlu0 %v1091, 127
        %v1100 = vpop.permute.xlu0 %1099
        %v1104 = vadd.f32 %v1020, %v1096
        %v1105 = vadd.f32 %v1021, %v1098
        %v1106 = vadd.f32 %v1022, %v1100
        %s1107 = sadd.s32 %s981, 2
        %s1108 = sld [smem:[#allocation2 + %s1107]]
        %v1109 = vstv %s1108
        %v1110 = vmul.f32 %v1109, 0.0
        %v1111 = vmul.f32 %v1109, %v235
        %v1112 = vmul.f32 %v1109, %v236
        %1116 = vrot.lane.b32.xlu0 %v1110, 126
        %v1117 = vpop.permute.xlu0 %1116
        %1118 = vrot.lane.b32.xlu0 %v1111, 126
        %v1119 = vpop.permute.xlu0 %1118
        %1120 = vrot.lane.b32.xlu0 %v1112, 126
        %v1121 = vpop.permute.xlu0 %1120
        %v1125 = vadd.f32 %v1041, %v1117
        %v1126 = vadd.f32 %v1042, %v1119
        %v1127 = vadd.f32 %v1043, %v1121
        %s1128 = sadd.s32 %s992, 2
        %s1129 = sld [smem:[#allocation2 + %s1128]]
        %v1130 = vstv %s1129
        %v1131 = vmul.f32 %v1130, 0.0
        %v1132 = vmul.f32 %v1130, %v235
        %v1133 = vmul.f32 %v1130, %v236
        %1137 = vrot.lane.b32.xlu0 %v1131, 126
        %v1138 = vpop.permute.xlu0 %1137
        %1139 = vrot.lane.b32.xlu0 %v1132, 126
        %v1140 = vpop.permute.xlu0 %1139
        %1141 = vrot.lane.b32.xlu0 %v1133, 126
        %v1142 = vpop.permute.xlu0 %1141
        %v1146 = vadd.f32 %v1062, %v1138
        %v1147 = vadd.f32 %v1063, %v1140
        %v1148 = vadd.f32 %v1064, %v1142
        %s1149 = sadd.s32 %s1003, 2
        %s1150 = sld [smem:[#allocation2 + %s1149]]
        %v1151 = vstv %s1150
        %v1152 = vmul.f32 %v1151, 0.0
        %v1153 = vmul.f32 %v1151, %v235
        %v1154 = vmul.f32 %v1151, %v236
        %1158 = vrot.lane.b32.xlu0 %v1152, 126
        %v1159 = vpop.permute.xlu0 %1158
        %1160 = vrot.lane.b32.xlu0 %v1153, 126
        %v1161 = vpop.permute.xlu0 %1160
        %1162 = vrot.lane.b32.xlu0 %v1154, 126
        %v1163 = vpop.permute.xlu0 %1162
        %v1167 = vadd.f32 %v1083, %v1159
        %v1168 = vadd.f32 %v1084, %v1161
        %v1169 = vadd.f32 %v1085, %v1163
        %s1170 = sadd.s32 %s1014, 2
        %s1171 = sld [smem:[#allocation2 + %s1170]]
        %v1172 = vstv %s1171
        %v1173 = vmul.f32 %v1172, 0.0
        %v1174 = vmul.f32 %v1172, %v235
        %v1175 = vmul.f32 %v1172, %v236
        %1179 = vrot.lane.b32.xlu0 %v1173, 126
        %v1180 = vpop.permute.xlu0 %1179
        %1181 = vrot.lane.b32.xlu0 %v1174, 126
        %v1182 = vpop.permute.xlu0 %1181
        %1183 = vrot.lane.b32.xlu0 %v1175, 126
        %v1184 = vpop.permute.xlu0 %1183
        %v1188 = vadd.f32 %v1104, %v1180
        %v1189 = vadd.f32 %v1105, %v1182
        %v1190 = vadd.f32 %v1106, %v1184
        %s1191 = sadd.s32 %s981, 3
        %s1192 = sld [smem:[#allocation2 + %s1191]]
        %v1193 = vstv %s1192
        %v1194 = vmul.f32 %v1193, %v235
        %v1195 = vmul.f32 %v1193, %v236
        %v1198 = vrot.slane %v1194, 1
        %v1199 = vrot.slane %v1195, 1
        %v1200 = vsel %vm456, %v1198, %v1199
        %v1204 = vadd.f32 %v1125, %v1198
        %v1205 = vadd.f32 %v1126, %v1200
        %v1206 = vadd.f32 %v1127, %v1199
        %s1207 = sadd.s32 %s992, 3
        %s1208 = sld [smem:[#allocation2 + %s1207]]
        %v1209 = vstv %s1208
        %v1210 = vmul.f32 %v1209, %v235
        %v1211 = vmul.f32 %v1209, %v236
        %v1214 = vrot.slane %v1210, 1
        %v1215 = vrot.slane %v1211, 1
        %v1216 = vsel %vm456, %v1214, %v1215
        %v1220 = vadd.f32 %v1146, %v1214
        %v1221 = vadd.f32 %v1147, %v1216
        %v1222 = vadd.f32 %v1148, %v1215
        %s1223 = sadd.s32 %s1003, 3
        %s1224 = sld [smem:[#allocation2 + %s1223]]
        %v1225 = vstv %s1224
        %v1226 = vmul.f32 %v1225, %v235
        %v1227 = vmul.f32 %v1225, %v236
        %v1230 = vrot.slane %v1226, 1
        %v1231 = vrot.slane %v1227, 1
        %v1232 = vsel %vm456, %v1230, %v1231
        %v1236 = vadd.f32 %v1167, %v1230
        %v1237 = vadd.f32 %v1168, %v1232
        %v1238 = vadd.f32 %v1169, %v1231
        %s1239 = sadd.s32 %s1014, 3
        %s1240 = sld [smem:[#allocation2 + %s1239]]
        %v1241 = vstv %s1240
        %v1242 = vmul.f32 %v1241, %v235
        %v1243 = vmul.f32 %v1241, %v236
        %v1246 = vrot.slane %v1242, 1
        %v1247 = vrot.slane %v1243, 1
        %v1248 = vsel %vm456, %v1246, %v1247
        %v1252 = vadd.f32 %v1188, %v1246
        %v1253 = vadd.f32 %v1189, %v1248
        %v1254 = vadd.f32 %v1190, %v1247
        %s1255 = sadd.s32 %s981, 4
        %s1256 = sld [smem:[#allocation2 + %s1255]]
        %v1257 = vstv %s1256
        %v1258 = vmul.f32 %v1257, %v235
        %v1259 = vmul.f32 %v1257, %v236
        %v1262 = vrot.slane %v1258, 1
        %v1263 = vrot.slane %v1259, 1
        %v1264 = vsel %vm456, %v1262, %v1263
        %1265 = vrot.lane.b32.xlu0 %v1262, 127
        %v1266 = vpop.permute.xlu0 %1265
        %1267 = vrot.lane.b32.xlu0 %v1264, 127
        %v1268 = vpop.permute.xlu0 %1267
        %1269 = vrot.lane.b32.xlu0 %v1263, 127
        %v1270 = vpop.permute.xlu0 %1269
        %v1274 = vadd.f32 %v1204, %v1266
        %v1275 = vadd.f32 %v1205, %v1268
        %v1276 = vadd.f32 %v1206, %v1270
        %s1277 = sadd.s32 %s992, 4
        %s1278 = sld [smem:[#allocation2 + %s1277]]
        %v1279 = vstv %s1278
        %v1280 = vmul.f32 %v1279, %v235
        %v1281 = vmul.f32 %v1279, %v236
        %v1284 = vrot.slane %v1280, 1
        %v1285 = vrot.slane %v1281, 1
        %v1286 = vsel %vm456, %v1284, %v1285
        %1287 = vrot.lane.b32.xlu0 %v1284, 127
        %v1288 = vpop.permute.xlu0 %1287
        %1289 = vrot.lane.b32.xlu0 %v1286, 127
        %v1290 = vpop.permute.xlu0 %1289
        %1291 = vrot.lane.b32.xlu0 %v1285, 127
        %v1292 = vpop.permute.xlu0 %1291
        %v1296 = vadd.f32 %v1220, %v1288
        %v1297 = vadd.f32 %v1221, %v1290
        %v1298 = vadd.f32 %v1222, %v1292
        %s1299 = sadd.s32 %s1003, 4
        %s1300 = sld [smem:[#allocation2 + %s1299]]
        %v1301 = vstv %s1300
        %v1302 = vmul.f32 %v1301, %v235
        %v1303 = vmul.f32 %v1301, %v236
        %v1306 = vrot.slane %v1302, 1
        %v1307 = vrot.slane %v1303, 1
        %v1308 = vsel %vm456, %v1306, %v1307
        %1309 = vrot.lane.b32.xlu0 %v1306, 127
        %v1310 = vpop.permute.xlu0 %1309
        %1311 = vrot.lane.b32.xlu0 %v1308, 127
        %v1312 = vpop.permute.xlu0 %1311
        %1313 = vrot.lane.b32.xlu0 %v1307, 127
        %v1314 = vpop.permute.xlu0 %1313
        %v1318 = vadd.f32 %v1236, %v1310
        %v1319 = vadd.f32 %v1237, %v1312
        %v1320 = vadd.f32 %v1238, %v1314
        %s1321 = sadd.s32 %s1014, 4
        %s1322 = sld [smem:[#allocation2 + %s1321]]
        %v1323 = vstv %s1322
        %v1324 = vmul.f32 %v1323, %v235
        %v1325 = vmul.f32 %v1323, %v236
        %v1328 = vrot.slane %v1324, 1
        %v1329 = vrot.slane %v1325, 1
        %v1330 = vsel %vm456, %v1328, %v1329
        %1331 = vrot.lane.b32.xlu0 %v1328, 127
        %v1332 = vpop.permute.xlu0 %1331
        %1333 = vrot.lane.b32.xlu0 %v1330, 127
        %v1334 = vpop.permute.xlu0 %1333
        %1335 = vrot.lane.b32.xlu0 %v1329, 127
        %v1336 = vpop.permute.xlu0 %1335
        %v1340 = vadd.f32 %v1252, %v1332
        %v1341 = vadd.f32 %v1253, %v1334
        %v1342 = vadd.f32 %v1254, %v1336
        %s1343 = sadd.s32 %s981, 5
        %s1344 = sld [smem:[#allocation2 + %s1343]]
        %v1345 = vstv %s1344
        %v1346 = vmul.f32 %v1345, %v235
        %v1347 = vmul.f32 %v1345, %v236
        %v1350 = vrot.slane %v1346, 1
        %v1351 = vrot.slane %v1347, 1
        %v1352 = vsel %vm456, %v1350, %v1351
        %1353 = vrot.lane.b32.xlu0 %v1350, 126
        %v1354 = vpop.permute.xlu0 %1353
        %1355 = vrot.lane.b32.xlu0 %v1352, 126
        %v1356 = vpop.permute.xlu0 %1355
        %1357 = vrot.lane.b32.xlu0 %v1351, 126
        %v1358 = vpop.permute.xlu0 %1357
        %v1362 = vadd.f32 %v1274, %v1354
        %v1363 = vadd.f32 %v1275, %v1356
        %v1364 = vadd.f32 %v1276, %v1358
        %s1365 = sadd.s32 %s992, 5
        %s1366 = sld [smem:[#allocation2 + %s1365]]
        %v1367 = vstv %s1366
        %v1368 = vmul.f32 %v1367, %v235
        %v1369 = vmul.f32 %v1367, %v236
        %v1372 = vrot.slane %v1368, 1
        %v1373 = vrot.slane %v1369, 1
        %v1374 = vsel %vm456, %v1372, %v1373
        %1375 = vrot.lane.b32.xlu0 %v1372, 126
        %v1376 = vpop.permute.xlu0 %1375
        %1377 = vrot.lane.b32.xlu0 %v1374, 126
        %v1378 = vpop.permute.xlu0 %1377
        %1379 = vrot.lane.b32.xlu0 %v1373, 126
        %v1380 = vpop.permute.xlu0 %1379
        %v1384 = vadd.f32 %v1296, %v1376
        %v1385 = vadd.f32 %v1297, %v1378
        %v1386 = vadd.f32 %v1298, %v1380
        %s1387 = sadd.s32 %s1003, 5
        %s1388 = sld [smem:[#allocation2 + %s1387]]
        %v1389 = vstv %s1388
        %v1390 = vmul.f32 %v1389, %v235
        %v1391 = vmul.f32 %v1389, %v236
        %v1394 = vrot.slane %v1390, 1
        %v1395 = vrot.slane %v1391, 1
        %v1396 = vsel %vm456, %v1394, %v1395
        %1397 = vrot.lane.b32.xlu0 %v1394, 126
        %v1398 = vpop.permute.xlu0 %1397
        %1399 = vrot.lane.b32.xlu0 %v1396, 126
        %v1400 = vpop.permute.xlu0 %1399
        %1401 = vrot.lane.b32.xlu0 %v1395, 126
        %v1402 = vpop.permute.xlu0 %1401
        %v1406 = vadd.f32 %v1318, %v1398
        %v1407 = vadd.f32 %v1319, %v1400
        %v1408 = vadd.f32 %v1320, %v1402
        %s1409 = sadd.s32 %s1014, 5
        %s1410 = sld [smem:[#allocation2 + %s1409]]
        %v1411 = vstv %s1410
        %v1412 = vmul.f32 %v1411, %v235
        %v1413 = vmul.f32 %v1411, %v236
        %v1416 = vrot.slane %v1412, 1
        %v1417 = vrot.slane %v1413, 1
        %v1418 = vsel %vm456, %v1416, %v1417
        %1419 = vrot.lane.b32.xlu0 %v1416, 126
        %v1420 = vpop.permute.xlu0 %1419
        %1421 = vrot.lane.b32.xlu0 %v1418, 126
        %v1422 = vpop.permute.xlu0 %1421
        %1423 = vrot.lane.b32.xlu0 %v1417, 126
        %v1424 = vpop.permute.xlu0 %1423
        %v1428 = vadd.f32 %v1340, %v1420
        %v1429 = vadd.f32 %v1341, %v1422
        %v1430 = vadd.f32 %v1342, %v1424
        %s1431 = sadd.s32 %s981, 6
        %s1432 = sld [smem:[#allocation2 + %s1431]]
        %v1433 = vstv %s1432
        %v1434 = vmul.f32 %v1433, %v235
        %v1435 = vmul.f32 %v1433, %v236
        %v1436 = vmul.f32 %v1433, 0.0
        %v1440 = vrot.slane %v1434, 2
        %v1441 = vrot.slane %v1435, 2
        %v1442 = vsel %vm699, %v1440, %v1441
        %v1443 = vrot.slane %v1436, 2
        %v1444 = vsel %vm699, %v1441, %v1443
        %v1448 = vadd.f32 %v1362, %v1440
        %v1449 = vadd.f32 %v1363, %v1442
        %v1450 = vadd.f32 %v1364, %v1444
        %s1451 = sadd.s32 %s992, 6
        %s1452 = sld [smem:[#allocation2 + %s1451]]
        %v1453 = vstv %s1452
        %v1454 = vmul.f32 %v1453, %v235
        %v1455 = vmul.f32 %v1453, %v236
        %v1456 = vmul.f32 %v1453, 0.0
        %v1460 = vrot.slane %v1454, 2
        %v1461 = vrot.slane %v1455, 2
        %v1462 = vsel %vm699, %v1460, %v1461
        %v1463 = vrot.slane %v1456, 2
        %v1464 = vsel %vm699, %v1461, %v1463
        %v1468 = vadd.f32 %v1384, %v1460
        %v1469 = vadd.f32 %v1385, %v1462
        %v1470 = vadd.f32 %v1386, %v1464
        %s1471 = sadd.s32 %s1003, 6
        %s1472 = sld [smem:[#allocation2 + %s1471]]
        %v1473 = vstv %s1472
        %v1474 = vmul.f32 %v1473, %v235
        %v1475 = vmul.f32 %v1473, %v236
        %v1476 = vmul.f32 %v1473, 0.0
        %v1480 = vrot.slane %v1474, 2
        %v1481 = vrot.slane %v1475, 2
        %v1482 = vsel %vm699, %v1480, %v1481
        %v1483 = vrot.slane %v1476, 2
        %v1484 = vsel %vm699, %v1481, %v1483
        %v1488 = vadd.f32 %v1406, %v1480
        %v1489 = vadd.f32 %v1407, %v1482
        %v1490 = vadd.f32 %v1408, %v1484
        %s1491 = sadd.s32 %s1014, 6
        %s1492 = sld [smem:[#allocation2 + %s1491]]
        %v1493 = vstv %s1492
        %v1494 = vmul.f32 %v1493, %v235
        %v1495 = vmul.f32 %v1493, %v236
        %v1496 = vmul.f32 %v1493, 0.0
        %v1500 = vrot.slane %v1494, 2
        %v1501 = vrot.slane %v1495, 2
        %v1502 = vsel %vm699, %v1500, %v1501
        %v1503 = vrot.slane %v1496, 2
        %v1504 = vsel %vm699, %v1501, %v1503
        %v1508 = vadd.f32 %v1428, %v1500
        %v1509 = vadd.f32 %v1429, %v1502
        %v1510 = vadd.f32 %v1430, %v1504
        %s1511 = sadd.s32 %s981, 7
        %s1512 = sld [smem:[#allocation2 + %s1511]]
        %v1513 = vstv %s1512
        %v1514 = vmul.f32 %v1513, %v235
        %v1515 = vmul.f32 %v1513, %v236
        %v1516 = vmul.f32 %v1513, 0.0
        %v1520 = vrot.slane %v1514, 2
        %v1521 = vrot.slane %v1515, 2
        %v1522 = vsel %vm699, %v1520, %v1521
        %v1523 = vrot.slane %v1516, 2
        %v1524 = vsel %vm699, %v1521, %v1523
        %1525 = vrot.lane.b32.xlu0 %v1520, 127
        %v1526 = vpop.permute.xlu0 %1525
        %1527 = vrot.lane.b32.xlu0 %v1522, 127
        %v1528 = vpop.permute.xlu0 %1527
        %1529 = vrot.lane.b32.xlu0 %v1524, 127
        %v1530 = vpop.permute.xlu0 %1529
        %v1534 = vadd.f32 %v1448, %v1526
        %v1535 = vadd.f32 %v1449, %v1528
        %v1536 = vadd.f32 %v1450, %v1530
        %s1537 = sadd.s32 %s992, 7
        %s1538 = sld [smem:[#allocation2 + %s1537]]
        %v1539 = vstv %s1538
        %v1540 = vmul.f32 %v1539, %v235
        %v1541 = vmul.f32 %v1539, %v236
        %v1542 = vmul.f32 %v1539, 0.0
        %v1546 = vrot.slane %v1540, 2
        %v1547 = vrot.slane %v1541, 2
        %v1548 = vsel %vm699, %v1546, %v1547
        %v1549 = vrot.slane %v1542, 2
        %v1550 = vsel %vm699, %v1547, %v1549
        %1551 = vrot.lane.b32.xlu0 %v1546, 127
        %v1552 = vpop.permute.xlu0 %1551
        %1553 = vrot.lane.b32.xlu0 %v1548, 127
        %v1554 = vpop.permute.xlu0 %1553
        %1555 = vrot.lane.b32.xlu0 %v1550, 127
        %v1556 = vpop.permute.xlu0 %1555
        %v1560 = vadd.f32 %v1468, %v1552
        %v1561 = vadd.f32 %v1469, %v1554
        %v1562 = vadd.f32 %v1470, %v1556
        %s1563 = sadd.s32 %s1003, 7
        %s1564 = sld [smem:[#allocation2 + %s1563]]
        %v1565 = vstv %s1564
        %v1566 = vmul.f32 %v1565, %v235
        %v1567 = vmul.f32 %v1565, %v236
        %v1568 = vmul.f32 %v1565, 0.0
        %v1572 = vrot.slane %v1566, 2
        %v1573 = vrot.slane %v1567, 2
        %v1574 = vsel %vm699, %v1572, %v1573
        %v1575 = vrot.slane %v1568, 2
        %v1576 = vsel %vm699, %v1573, %v1575
        %1577 = vrot.lane.b32.xlu0 %v1572, 127
        %v1578 = vpop.permute.xlu0 %1577
        %1579 = vrot.lane.b32.xlu0 %v1574, 127
        %v1580 = vpop.permute.xlu0 %1579
        %1581 = vrot.lane.b32.xlu0 %v1576, 127
        %v1582 = vpop.permute.xlu0 %1581
        %v1586 = vadd.f32 %v1488, %v1578
        %v1587 = vadd.f32 %v1489, %v1580
        %v1588 = vadd.f32 %v1490, %v1582
        %s1589 = sadd.s32 %s1014, 7
        %s1590 = sld [smem:[#allocation2 + %s1589]]
        %v1591 = vstv %s1590
        %v1592 = vmul.f32 %v1591, %v235
        %v1593 = vmul.f32 %v1591, %v236
        %v1594 = vmul.f32 %v1591, 0.0
        %v1598 = vrot.slane %v1592, 2
        %v1599 = vrot.slane %v1593, 2
        %v1600 = vsel %vm699, %v1598, %v1599
        %v1601 = vrot.slane %v1594, 2
        %v1602 = vsel %vm699, %v1599, %v1601
        %1603 = vrot.lane.b32.xlu0 %v1598, 127
        %v1604 = vpop.permute.xlu0 %1603
        %1605 = vrot.lane.b32.xlu0 %v1600, 127
        %v1606 = vpop.permute.xlu0 %1605
        %1607 = vrot.lane.b32.xlu0 %v1602, 127
        %v1608 = vpop.permute.xlu0 %1607
        %v1612 = vadd.f32 %v1508, %v1604
        %v1613 = vadd.f32 %v1509, %v1606
        %v1614 = vadd.f32 %v1510, %v1608
        %s1615 = sadd.s32 %s981, 8
        %s1616 = sld [smem:[#allocation2 + %s1615]]
        %v1617 = vstv %s1616
        %v1618 = vmul.f32 %v1617, %v235
        %v1619 = vmul.f32 %v1617, %v236
        %v1620 = vmul.f32 %v1617, 0.0
        %v1624 = vrot.slane %v1618, 2
        %v1625 = vrot.slane %v1619, 2
        %v1626 = vsel %vm699, %v1624, %v1625
        %v1627 = vrot.slane %v1620, 2
        %v1628 = vsel %vm699, %v1625, %v1627
        %1629 = vrot.lane.b32.xlu0 %v1624, 126
        %v1630 = vpop.permute.xlu0 %1629
        %1631 = vrot.lane.b32.xlu0 %v1626, 126
        %v1632 = vpop.permute.xlu0 %1631
        %1633 = vrot.lane.b32.xlu0 %v1628, 126
        %v1634 = vpop.permute.xlu0 %1633
        %v1638 = vadd.f32 %v1534, %v1630
        %v1639 = vadd.f32 %v1535, %v1632
        %v1640 = vadd.f32 %v1536, %v1634
        %s1641 = sadd.s32 %s992, 8
        %s1642 = sld [smem:[#allocation2 + %s1641]]
        %v1643 = vstv %s1642
        %v1644 = vmul.f32 %v1643, %v235
        %v1645 = vmul.f32 %v1643, %v236
        %v1646 = vmul.f32 %v1643, 0.0
        %v1650 = vrot.slane %v1644, 2
        %v1651 = vrot.slane %v1645, 2
        %v1652 = vsel %vm699, %v1650, %v1651
        %v1653 = vrot.slane %v1646, 2
        %v1654 = vsel %vm699, %v1651, %v1653
        %1655 = vrot.lane.b32.xlu0 %v1650, 126
        %v1656 = vpop.permute.xlu0 %1655
        %1657 = vrot.lane.b32.xlu0 %v1652, 126
        %v1658 = vpop.permute.xlu0 %1657
        %1659 = vrot.lane.b32.xlu0 %v1654, 126
        %v1660 = vpop.permute.xlu0 %1659
        %v1664 = vadd.f32 %v1560, %v1656
        %v1665 = vadd.f32 %v1561, %v1658
        %v1666 = vadd.f32 %v1562, %v1660
        %s1667 = sadd.s32 %s1003, 8
        %s1668 = sld [smem:[#allocation2 + %s1667]]
        %v1669 = vstv %s1668
        %v1670 = vmul.f32 %v1669, %v235
        %v1671 = vmul.f32 %v1669, %v236
        %v1672 = vmul.f32 %v1669, 0.0
        %v1676 = vrot.slane %v1670, 2
        %v1677 = vrot.slane %v1671, 2
        %v1678 = vsel %vm699, %v1676, %v1677
        %v1679 = vrot.slane %v1672, 2
        %v1680 = vsel %vm699, %v1677, %v1679
        %1681 = vrot.lane.b32.xlu0 %v1676, 126
        %v1682 = vpop.permute.xlu0 %1681
        %1683 = vrot.lane.b32.xlu0 %v1678, 126
        %v1684 = vpop.permute.xlu0 %1683
        %1685 = vrot.lane.b32.xlu0 %v1680, 126
        %v1686 = vpop.permute.xlu0 %1685
        %v1690 = vadd.f32 %v1586, %v1682
        %v1691 = vadd.f32 %v1587, %v1684
        %v1692 = vadd.f32 %v1588, %v1686
        %s1693 = sadd.s32 %s1014, 8
        %s1694 = sld [smem:[#allocation2 + %s1693]]
        %v1695 = vstv %s1694
        %v1696 = vmul.f32 %v1695, %v235
        %v1697 = vmul.f32 %v1695, %v236
        %v1698 = vmul.f32 %v1695, 0.0
        %v1702 = vrot.slane %v1696, 2
        %v1703 = vrot.slane %v1697, 2
        %v1704 = vsel %vm699, %v1702, %v1703
        %v1705 = vrot.slane %v1698, 2
        %v1706 = vsel %vm699, %v1703, %v1705
        %1707 = vrot.lane.b32.xlu0 %v1702, 126
        %v1708 = vpop.permute.xlu0 %1707
        %1709 = vrot.lane.b32.xlu0 %v1704, 126
        %v1710 = vpop.permute.xlu0 %1709
        %1711 = vrot.lane.b32.xlu0 %v1706, 126
        %v1712 = vpop.permute.xlu0 %1711
        %v1716 = vadd.f32 %v1612, %v1708
        %v1717 = vadd.f32 %v1613, %v1710
        %v1718 = vadd.f32 %v1614, %v1712
        %s1719 = sadd.s32 %s979, 2
        %s1720 = smul.u32 %s1719, 9
        %s1721 = sld [smem:[#allocation2 + %s1720]]
        %v1722 = vstv %s1721
        %v1723 = vmul.f32 %v1722, 0.0
        %v1724 = vmul.f32 %v1722, %v237
        %v1725 = vmul.f32 %v1722, %v238
        %v1726 = vadd.f32 %v1638, %v1723
        %v1727 = vadd.f32 %v1639, %v1724
        %v1728 = vadd.f32 %v1640, %v1725
        %s1729 = sadd.s32 %s990, 2
        %s1730 = smul.u32 %s1729, 9
        %s1731 = sld [smem:[#allocation2 + %s1730]]
        %v1732 = vstv %s1731
        %v1733 = vmul.f32 %v1732, 0.0
        %v1734 = vmul.f32 %v1732, %v237
        %v1735 = vmul.f32 %v1732, %v238
        %v1736 = vadd.f32 %v1664, %v1733
        %v1737 = vadd.f32 %v1665, %v1734
        %v1738 = vadd.f32 %v1666, %v1735
        %s1739 = sadd.s32 %s1001, 2
        %s1740 = smul.u32 %s1739, 9
        %s1741 = sld [smem:[#allocation2 + %s1740]]
        %v1742 = vstv %s1741
        %v1743 = vmul.f32 %v1742, 0.0
        %v1744 = vmul.f32 %v1742, %v237
        %v1745 = vmul.f32 %v1742, %v238
        %v1746 = vadd.f32 %v1690, %v1743
        %v1747 = vadd.f32 %v1691, %v1744
        %v1748 = vadd.f32 %v1692, %v1745
        %s1749 = sadd.s32 %s1012, 2
        %s1750 = smul.u32 %s1749, 9
        %s1751 = sld [smem:[#allocation2 + %s1750]]
        %v1752 = vstv %s1751
        %v1753 = vmul.f32 %v1752, 0.0
        %v1754 = vmul.f32 %v1752, %v237
        %v1755 = vmul.f32 %v1752, %v238
        %v1756 = vadd.f32 %v1716, %v1753
        %v1757 = vadd.f32 %v1717, %v1754
        %v1758 = vadd.f32 %v1718, %v1755
        %s1759 = sadd.s32 %s1720, 1
        %s1760 = sld [smem:[#allocation2 + %s1759]]
        %v1761 = vstv %s1760
        %v1762 = vmul.f32 %v1761, 0.0
        %v1763 = vmul.f32 %v1761, %v237
        %v1764 = vmul.f32 %v1761, %v238
        %1768 = vrot.lane.b32.xlu0 %v1762, 127
        %v1769 = vpop.permute.xlu0 %1768
        %1770 = vrot.lane.b32.xlu0 %v1763, 127
        %v1771 = vpop.permute.xlu0 %1770
        %1772 = vrot.lane.b32.xlu0 %v1764, 127
        %v1773 = vpop.permute.xlu0 %1772
        %v1777 = vadd.f32 %v1726, %v1769
        %v1778 = vadd.f32 %v1727, %v1771
        %v1779 = vadd.f32 %v1728, %v1773
        %s1780 = sadd.s32 %s1730, 1
        %s1781 = sld [smem:[#allocation2 + %s1780]]
        %v1782 = vstv %s1781
        %v1783 = vmul.f32 %v1782, 0.0
        %v1784 = vmul.f32 %v1782, %v237
        %v1785 = vmul.f32 %v1782, %v238
        %1789 = vrot.lane.b32.xlu0 %v1783, 127
        %v1790 = vpop.permute.xlu0 %1789
        %1791 = vrot.lane.b32.xlu0 %v1784, 127
        %v1792 = vpop.permute.xlu0 %1791
        %1793 = vrot.lane.b32.xlu0 %v1785, 127
        %v1794 = vpop.permute.xlu0 %1793
        %v1798 = vadd.f32 %v1736, %v1790
        %v1799 = vadd.f32 %v1737, %v1792
        %v1800 = vadd.f32 %v1738, %v1794
        %s1801 = sadd.s32 %s1740, 1
        %s1802 = sld [smem:[#allocation2 + %s1801]]
        %v1803 = vstv %s1802
        %v1804 = vmul.f32 %v1803, 0.0
        %v1805 = vmul.f32 %v1803, %v237
        %v1806 = vmul.f32 %v1803, %v238
        %1810 = vrot.lane.b32.xlu0 %v1804, 127
        %v1811 = vpop.permute.xlu0 %1810
        %1812 = vrot.lane.b32.xlu0 %v1805, 127
        %v1813 = vpop.permute.xlu0 %1812
        %1814 = vrot.lane.b32.xlu0 %v1806, 127
        %v1815 = vpop.permute.xlu0 %1814
        %v1819 = vadd.f32 %v1746, %v1811
        %v1820 = vadd.f32 %v1747, %v1813
        %v1821 = vadd.f32 %v1748, %v1815
        %s1822 = sadd.s32 %s1750, 1
        %s1823 = sld [smem:[#allocation2 + %s1822]]
        %v1824 = vstv %s1823
        %v1825 = vmul.f32 %v1824, 0.0
        %v1826 = vmul.f32 %v1824, %v237
        %v1827 = vmul.f32 %v1824, %v238
        %1831 = vrot.lane.b32.xlu0 %v1825, 127
        %v1832 = vpop.permute.xlu0 %1831
        %1833 = vrot.lane.b32.xlu0 %v1826, 127
        %v1834 = vpop.permute.xlu0 %1833
        %1835 = vrot.lane.b32.xlu0 %v1827, 127
        %v1836 = vpop.permute.xlu0 %1835
        %v1840 = vadd.f32 %v1756, %v1832
        %v1841 = vadd.f32 %v1757, %v1834
        %v1842 = vadd.f32 %v1758, %v1836
        %s1843 = sadd.s32 %s1720, 2
        %s1844 = sld [smem:[#allocation2 + %s1843]]
        %v1845 = vstv %s1844
        %v1846 = vmul.f32 %v1845, 0.0
        %v1847 = vmul.f32 %v1845, %v237
        %v1848 = vmul.f32 %v1845, %v238
        %1852 = vrot.lane.b32.xlu0 %v1846, 126
        %v1853 = vpop.permute.xlu0 %1852
        %1854 = vrot.lane.b32.xlu0 %v1847, 126
        %v1855 = vpop.permute.xlu0 %1854
        %1856 = vrot.lane.b32.xlu0 %v1848, 126
        %v1857 = vpop.permute.xlu0 %1856
        %v1861 = vadd.f32 %v1777, %v1853
        %v1862 = vadd.f32 %v1778, %v1855
        %v1863 = vadd.f32 %v1779, %v1857
        %s1864 = sadd.s32 %s1730, 2
        %s1865 = sld [smem:[#allocation2 + %s1864]]
        %v1866 = vstv %s1865
        %v1867 = vmul.f32 %v1866, 0.0
        %v1868 = vmul.f32 %v1866, %v237
        %v1869 = vmul.f32 %v1866, %v238
        %1873 = vrot.lane.b32.xlu0 %v1867, 126
        %v1874 = vpop.permute.xlu0 %1873
        %1875 = vrot.lane.b32.xlu0 %v1868, 126
        %v1876 = vpop.permute.xlu0 %1875
        %1877 = vrot.lane.b32.xlu0 %v1869, 126
        %v1878 = vpop.permute.xlu0 %1877
        %v1882 = vadd.f32 %v1798, %v1874
        %v1883 = vadd.f32 %v1799, %v1876
        %v1884 = vadd.f32 %v1800, %v1878
        %s1885 = sadd.s32 %s1740, 2
        %s1886 = sld [smem:[#allocation2 + %s1885]]
        %v1887 = vstv %s1886
        %v1888 = vmul.f32 %v1887, 0.0
        %v1889 = vmul.f32 %v1887, %v237
        %v1890 = vmul.f32 %v1887, %v238
        %1894 = vrot.lane.b32.xlu0 %v1888, 126
        %v1895 = vpop.permute.xlu0 %1894
        %1896 = vrot.lane.b32.xlu0 %v1889, 126
        %v1897 = vpop.permute.xlu0 %1896
        %1898 = vrot.lane.b32.xlu0 %v1890, 126
        %v1899 = vpop.permute.xlu0 %1898
        %v1903 = vadd.f32 %v1819, %v1895
        %v1904 = vadd.f32 %v1820, %v1897
        %v1905 = vadd.f32 %v1821, %v1899
        %s1906 = sadd.s32 %s1750, 2
        %s1907 = sld [smem:[#allocation2 + %s1906]]
        %v1908 = vstv %s1907
        %v1909 = vmul.f32 %v1908, 0.0
        %v1910 = vmul.f32 %v1908, %v237
        %v1911 = vmul.f32 %v1908, %v238
        %1915 = vrot.lane.b32.xlu0 %v1909, 126
        %v1916 = vpop.permute.xlu0 %1915
        %1917 = vrot.lane.b32.xlu0 %v1910, 126
        %v1918 = vpop.permute.xlu0 %1917
        %1919 = vrot.lane.b32.xlu0 %v1911, 126
        %v1920 = vpop.permute.xlu0 %1919
        %v1924 = vadd.f32 %v1840, %v1916
        %v1925 = vadd.f32 %v1841, %v1918
        %v1926 = vadd.f32 %v1842, %v1920
        %s1927 = sadd.s32 %s1720, 3
        %s1928 = sld [smem:[#allocation2 + %s1927]]
        %v1929 = vstv %s1928
        %v1930 = vmul.f32 %v1929, %v237
        %v1931 = vmul.f32 %v1929, %v238
        %v1934 = vrot.slane %v1930, 1
        %v1935 = vrot.slane %v1931, 1
        %v1936 = vsel %vm456, %v1934, %v1935
        %v1940 = vadd.f32 %v1861, %v1934
        %v1941 = vadd.f32 %v1862, %v1936
        %v1942 = vadd.f32 %v1863, %v1935
        %s1943 = sadd.s32 %s1730, 3
        %s1944 = sld [smem:[#allocation2 + %s1943]]
        %v1945 = vstv %s1944
        %v1946 = vmul.f32 %v1945, %v237
        %v1947 = vmul.f32 %v1945, %v238
        %v1950 = vrot.slane %v1946, 1
        %v1951 = vrot.slane %v1947, 1
        %v1952 = vsel %vm456, %v1950, %v1951
        %v1956 = vadd.f32 %v1882, %v1950
        %v1957 = vadd.f32 %v1883, %v1952
        %v1958 = vadd.f32 %v1884, %v1951
        %s1959 = sadd.s32 %s1740, 3
        %s1960 = sld [smem:[#allocation2 + %s1959]]
        %v1961 = vstv %s1960
        %v1962 = vmul.f32 %v1961, %v237
        %v1963 = vmul.f32 %v1961, %v238
        %v1966 = vrot.slane %v1962, 1
        %v1967 = vrot.slane %v1963, 1
        %v1968 = vsel %vm456, %v1966, %v1967
        %v1972 = vadd.f32 %v1903, %v1966
        %v1973 = vadd.f32 %v1904, %v1968
        %v1974 = vadd.f32 %v1905, %v1967
        %s1975 = sadd.s32 %s1750, 3
        %s1976 = sld [smem:[#allocation2 + %s1975]]
        %v1977 = vstv %s1976
        %v1978 = vmul.f32 %v1977, %v237
        %v1979 = vmul.f32 %v1977, %v238
        %v1982 = vrot.slane %v1978, 1
        %v1983 = vrot.slane %v1979, 1
        %v1984 = vsel %vm456, %v1982, %v1983
        %v1988 = vadd.f32 %v1924, %v1982
        %v1989 = vadd.f32 %v1925, %v1984
        %v1990 = vadd.f32 %v1926, %v1983
        %s1991 = sadd.s32 %s1720, 4
        %s1992 = sld [smem:[#allocation2 + %s1991]]
        %v1993 = vstv %s1992
        %v1994 = vmul.f32 %v1993, %v237
        %v1995 = vmul.f32 %v1993, %v238
        %v1998 = vrot.slane %v1994, 1
        %v1999 = vrot.slane %v1995, 1
        %v2000 = vsel %vm456, %v1998, %v1999
        %2001 = vrot.lane.b32.xlu0 %v1998, 127
        %v2002 = vpop.permute.xlu0 %2001
        %2003 = vrot.lane.b32.xlu0 %v2000, 127
        %v2004 = vpop.permute.xlu0 %2003
        %2005 = vrot.lane.b32.xlu0 %v1999, 127
        %v2006 = vpop.permute.xlu0 %2005
        %v2010 = vadd.f32 %v1940, %v2002
        %v2011 = vadd.f32 %v1941, %v2004
        %v2012 = vadd.f32 %v1942, %v2006
        %s2013 = sadd.s32 %s1730, 4
        %s2014 = sld [smem:[#allocation2 + %s2013]]
        %v2015 = vstv %s2014
        %v2016 = vmul.f32 %v2015, %v237
        %v2017 = vmul.f32 %v2015, %v238
        %v2020 = vrot.slane %v2016, 1
        %v2021 = vrot.slane %v2017, 1
        %v2022 = vsel %vm456, %v2020, %v2021
        %2023 = vrot.lane.b32.xlu0 %v2020, 127
        %v2024 = vpop.permute.xlu0 %2023
        %2025 = vrot.lane.b32.xlu0 %v2022, 127
        %v2026 = vpop.permute.xlu0 %2025
        %2027 = vrot.lane.b32.xlu0 %v2021, 127
        %v2028 = vpop.permute.xlu0 %2027
        %v2032 = vadd.f32 %v1956, %v2024
        %v2033 = vadd.f32 %v1957, %v2026
        %v2034 = vadd.f32 %v1958, %v2028
        %s2035 = sadd.s32 %s1740, 4
        %s2036 = sld [smem:[#allocation2 + %s2035]]
        %v2037 = vstv %s2036
        %v2038 = vmul.f32 %v2037, %v237
        %v2039 = vmul.f32 %v2037, %v238
        %v2042 = vrot.slane %v2038, 1
        %v2043 = vrot.slane %v2039, 1
        %v2044 = vsel %vm456, %v2042, %v2043
        %2045 = vrot.lane.b32.xlu0 %v2042, 127
        %v2046 = vpop.permute.xlu0 %2045
        %2047 = vrot.lane.b32.xlu0 %v2044, 127
        %v2048 = vpop.permute.xlu0 %2047
        %2049 = vrot.lane.b32.xlu0 %v2043, 127
        %v2050 = vpop.permute.xlu0 %2049
        %v2054 = vadd.f32 %v1972, %v2046
        %v2055 = vadd.f32 %v1973, %v2048
        %v2056 = vadd.f32 %v1974, %v2050
        %s2057 = sadd.s32 %s1750, 4
        %s2058 = sld [smem:[#allocation2 + %s2057]]
        %v2059 = vstv %s2058
        %v2060 = vmul.f32 %v2059, %v237
        %v2061 = vmul.f32 %v2059, %v238
        %v2064 = vrot.slane %v2060, 1
        %v2065 = vrot.slane %v2061, 1
        %v2066 = vsel %vm456, %v2064, %v2065
        %2067 = vrot.lane.b32.xlu0 %v2064, 127
        %v2068 = vpop.permute.xlu0 %2067
        %2069 = vrot.lane.b32.xlu0 %v2066, 127
        %v2070 = vpop.permute.xlu0 %2069
        %2071 = vrot.lane.b32.xlu0 %v2065, 127
        %v2072 = vpop.permute.xlu0 %2071
        %v2076 = vadd.f32 %v1988, %v2068
        %v2077 = vadd.f32 %v1989, %v2070
        %v2078 = vadd.f32 %v1990, %v2072
        %s2079 = sadd.s32 %s1720, 5
        %s2080 = sld [smem:[#allocation2 + %s2079]]
        %v2081 = vstv %s2080
        %v2082 = vmul.f32 %v2081, %v237
        %v2083 = vmul.f32 %v2081, %v238
        %v2086 = vrot.slane %v2082, 1
        %v2087 = vrot.slane %v2083, 1
        %v2088 = vsel %vm456, %v2086, %v2087
        %2089 = vrot.lane.b32.xlu0 %v2086, 126
        %v2090 = vpop.permute.xlu0 %2089
        %2091 = vrot.lane.b32.xlu0 %v2088, 126
        %v2092 = vpop.permute.xlu0 %2091
        %2093 = vrot.lane.b32.xlu0 %v2087, 126
        %v2094 = vpop.permute.xlu0 %2093
        %v2098 = vadd.f32 %v2010, %v2090
        %v2099 = vadd.f32 %v2011, %v2092
        %v2100 = vadd.f32 %v2012, %v2094
        %s2101 = sadd.s32 %s1730, 5
        %s2102 = sld [smem:[#allocation2 + %s2101]]
        %v2103 = vstv %s2102
        %v2104 = vmul.f32 %v2103, %v237
        %v2105 = vmul.f32 %v2103, %v238
        %v2108 = vrot.slane %v2104, 1
        %v2109 = vrot.slane %v2105, 1
        %v2110 = vsel %vm456, %v2108, %v2109
        %2111 = vrot.lane.b32.xlu0 %v2108, 126
        %v2112 = vpop.permute.xlu0 %2111
        %2113 = vrot.lane.b32.xlu0 %v2110, 126
        %v2114 = vpop.permute.xlu0 %2113
        %2115 = vrot.lane.b32.xlu0 %v2109, 126
        %v2116 = vpop.permute.xlu0 %2115
        %v2120 = vadd.f32 %v2032, %v2112
        %v2121 = vadd.f32 %v2033, %v2114
        %v2122 = vadd.f32 %v2034, %v2116
        %s2123 = sadd.s32 %s1740, 5
        %s2124 = sld [smem:[#allocation2 + %s2123]]
        %v2125 = vstv %s2124
        %v2126 = vmul.f32 %v2125, %v237
        %v2127 = vmul.f32 %v2125, %v238
        %v2130 = vrot.slane %v2126, 1
        %v2131 = vrot.slane %v2127, 1
        %v2132 = vsel %vm456, %v2130, %v2131
        %2133 = vrot.lane.b32.xlu0 %v2130, 126
        %v2134 = vpop.permute.xlu0 %2133
        %2135 = vrot.lane.b32.xlu0 %v2132, 126
        %v2136 = vpop.permute.xlu0 %2135
        %2137 = vrot.lane.b32.xlu0 %v2131, 126
        %v2138 = vpop.permute.xlu0 %2137
        %v2142 = vadd.f32 %v2054, %v2134
        %v2143 = vadd.f32 %v2055, %v2136
        %v2144 = vadd.f32 %v2056, %v2138
        %s2145 = sadd.s32 %s1750, 5
        %s2146 = sld [smem:[#allocation2 + %s2145]]
        %v2147 = vstv %s2146
        %v2148 = vmul.f32 %v2147, %v237
        %v2149 = vmul.f32 %v2147, %v238
        %v2152 = vrot.slane %v2148, 1
        %v2153 = vrot.slane %v2149, 1
        %v2154 = vsel %vm456, %v2152, %v2153
        %2155 = vrot.lane.b32.xlu0 %v2152, 126
        %v2156 = vpop.permute.xlu0 %2155
        %2157 = vrot.lane.b32.xlu0 %v2154, 126
        %v2158 = vpop.permute.xlu0 %2157
        %2159 = vrot.lane.b32.xlu0 %v2153, 126
        %v2160 = vpop.permute.xlu0 %2159
        %v2164 = vadd.f32 %v2076, %v2156
        %v2165 = vadd.f32 %v2077, %v2158
        %v2166 = vadd.f32 %v2078, %v2160
        %s2167 = sadd.s32 %s1720, 6
        %s2168 = sld [smem:[#allocation2 + %s2167]]
        %v2169 = vstv %s2168
        %v2170 = vmul.f32 %v2169, %v237
        %v2171 = vmul.f32 %v2169, %v238
        %v2172 = vmul.f32 %v2169, 0.0
        %v2176 = vrot.slane %v2170, 2
        %v2177 = vrot.slane %v2171, 2
        %v2178 = vsel %vm699, %v2176, %v2177
        %v2179 = vrot.slane %v2172, 2
        %v2180 = vsel %vm699, %v2177, %v2179
        %v2184 = vadd.f32 %v2098, %v2176
        %v2185 = vadd.f32 %v2099, %v2178
        %v2186 = vadd.f32 %v2100, %v2180
        %s2187 = sadd.s32 %s1730, 6
        %s2188 = sld [smem:[#allocation2 + %s2187]]
        %v2189 = vstv %s2188
        %v2190 = vmul.f32 %v2189, %v237
        %v2191 = vmul.f32 %v2189, %v238
        %v2192 = vmul.f32 %v2189, 0.0
        %v2196 = vrot.slane %v2190, 2
        %v2197 = vrot.slane %v2191, 2
        %v2198 = vsel %vm699, %v2196, %v2197
        %v2199 = vrot.slane %v2192, 2
        %v2200 = vsel %vm699, %v2197, %v2199
        %v2204 = vadd.f32 %v2120, %v2196
        %v2205 = vadd.f32 %v2121, %v2198
        %v2206 = vadd.f32 %v2122, %v2200
        %s2207 = sadd.s32 %s1740, 6
        %s2208 = sld [smem:[#allocation2 + %s2207]]
        %v2209 = vstv %s2208
        %v2210 = vmul.f32 %v2209, %v237
        %v2211 = vmul.f32 %v2209, %v238
        %v2212 = vmul.f32 %v2209, 0.0
        %v2216 = vrot.slane %v2210, 2
        %v2217 = vrot.slane %v2211, 2
        %v2218 = vsel %vm699, %v2216, %v2217
        %v2219 = vrot.slane %v2212, 2
        %v2220 = vsel %vm699, %v2217, %v2219
        %v2224 = vadd.f32 %v2142, %v2216
        %v2225 = vadd.f32 %v2143, %v2218
        %v2226 = vadd.f32 %v2144, %v2220
        %s2227 = sadd.s32 %s1750, 6
        %s2228 = sld [smem:[#allocation2 + %s2227]]
        %v2229 = vstv %s2228
        %v2230 = vmul.f32 %v2229, %v237
        %v2231 = vmul.f32 %v2229, %v238
        %v2232 = vmul.f32 %v2229, 0.0
        %v2236 = vrot.slane %v2230, 2
        %v2237 = vrot.slane %v2231, 2
        %v2238 = vsel %vm699, %v2236, %v2237
        %v2239 = vrot.slane %v2232, 2
        %v2240 = vsel %vm699, %v2237, %v2239
        %v2244 = vadd.f32 %v2164, %v2236
        %v2245 = vadd.f32 %v2165, %v2238
        %v2246 = vadd.f32 %v2166, %v2240
        %s2247 = sadd.s32 %s1720, 7
        %s2248 = sld [smem:[#allocation2 + %s2247]]
        %v2249 = vstv %s2248
        %v2250 = vmul.f32 %v2249, %v237
        %v2251 = vmul.f32 %v2249, %v238
        %v2252 = vmul.f32 %v2249, 0.0
        %v2256 = vrot.slane %v2250, 2
        %v2257 = vrot.slane %v2251, 2
        %v2258 = vsel %vm699, %v2256, %v2257
        %v2259 = vrot.slane %v2252, 2
        %v2260 = vsel %vm699, %v2257, %v2259
        %2261 = vrot.lane.b32.xlu0 %v2256, 127
        %v2262 = vpop.permute.xlu0 %2261
        %2263 = vrot.lane.b32.xlu0 %v2258, 127
        %v2264 = vpop.permute.xlu0 %2263
        %2265 = vrot.lane.b32.xlu0 %v2260, 127
        %v2266 = vpop.permute.xlu0 %2265
        %v2270 = vadd.f32 %v2184, %v2262
        %v2271 = vadd.f32 %v2185, %v2264
        %v2272 = vadd.f32 %v2186, %v2266
        %s2273 = sadd.s32 %s1730, 7
        %s2274 = sld [smem:[#allocation2 + %s2273]]
        %v2275 = vstv %s2274
        %v2276 = vmul.f32 %v2275, %v237
        %v2277 = vmul.f32 %v2275, %v238
        %v2278 = vmul.f32 %v2275, 0.0
        %v2282 = vrot.slane %v2276, 2
        %v2283 = vrot.slane %v2277, 2
        %v2284 = vsel %vm699, %v2282, %v2283
        %v2285 = vrot.slane %v2278, 2
        %v2286 = vsel %vm699, %v2283, %v2285
        %2287 = vrot.lane.b32.xlu0 %v2282, 127
        %v2288 = vpop.permute.xlu0 %2287
        %2289 = vrot.lane.b32.xlu0 %v2284, 127
        %v2290 = vpop.permute.xlu0 %2289
        %2291 = vrot.lane.b32.xlu0 %v2286, 127
        %v2292 = vpop.permute.xlu0 %2291
        %v2296 = vadd.f32 %v2204, %v2288
        %v2297 = vadd.f32 %v2205, %v2290
        %v2298 = vadd.f32 %v2206, %v2292
        %s2299 = sadd.s32 %s1740, 7
        %s2300 = sld [smem:[#allocation2 + %s2299]]
        %v2301 = vstv %s2300
        %v2302 = vmul.f32 %v2301, %v237
        %v2303 = vmul.f32 %v2301, %v238
        %v2304 = vmul.f32 %v2301, 0.0
        %v2308 = vrot.slane %v2302, 2
        %v2309 = vrot.slane %v2303, 2
        %v2310 = vsel %vm699, %v2308, %v2309
        %v2311 = vrot.slane %v2304, 2
        %v2312 = vsel %vm699, %v2309, %v2311
        %2313 = vrot.lane.b32.xlu0 %v2308, 127
        %v2314 = vpop.permute.xlu0 %2313
        %2315 = vrot.lane.b32.xlu0 %v2310, 127
        %v2316 = vpop.permute.xlu0 %2315
        %2317 = vrot.lane.b32.xlu0 %v2312, 127
        %v2318 = vpop.permute.xlu0 %2317
        %v2322 = vadd.f32 %v2224, %v2314
        %v2323 = vadd.f32 %v2225, %v2316
        %v2324 = vadd.f32 %v2226, %v2318
        %s2325 = sadd.s32 %s1750, 7
        %s2326 = sld [smem:[#allocation2 + %s2325]]
        %v2327 = vstv %s2326
        %v2328 = vmul.f32 %v2327, %v237
        %v2329 = vmul.f32 %v2327, %v238
        %v2330 = vmul.f32 %v2327, 0.0
        %v2334 = vrot.slane %v2328, 2
        %v2335 = vrot.slane %v2329, 2
        %v2336 = vsel %vm699, %v2334, %v2335
        %v2337 = vrot.slane %v2330, 2
        %v2338 = vsel %vm699, %v2335, %v2337
        %2339 = vrot.lane.b32.xlu0 %v2334, 127
        %v2340 = vpop.permute.xlu0 %2339
        %2341 = vrot.lane.b32.xlu0 %v2336, 127
        %v2342 = vpop.permute.xlu0 %2341
        %2343 = vrot.lane.b32.xlu0 %v2338, 127
        %v2344 = vpop.permute.xlu0 %2343
        %v2348 = vadd.f32 %v2244, %v2340
        %v2349 = vadd.f32 %v2245, %v2342
        %v2350 = vadd.f32 %v2246, %v2344
        %s2351 = sadd.s32 %s1720, 8
        %s2352 = sld [smem:[#allocation2 + %s2351]]
        %v2353 = vstv %s2352
        %v2354 = vmul.f32 %v2353, %v237
        %v2355 = vmul.f32 %v2353, %v238
        %v2356 = vmul.f32 %v2353, 0.0
        %v2360 = vrot.slane %v2354, 2
        %v2361 = vrot.slane %v2355, 2
        %v2362 = vsel %vm699, %v2360, %v2361
        %v2363 = vrot.slane %v2356, 2
        %v2364 = vsel %vm699, %v2361, %v2363
        %2365 = vrot.lane.b32.xlu0 %v2360, 126
        %v2366 = vpop.permute.xlu0 %2365
        %2367 = vrot.lane.b32.xlu0 %v2362, 126
        %v2368 = vpop.permute.xlu0 %2367
        %2369 = vrot.lane.b32.xlu0 %v2364, 126
        %v2370 = vpop.permute.xlu0 %2369
        %v2374 = vadd.f32 %v2270, %v2366
        %v2375 = vadd.f32 %v2271, %v2368
        %v2376 = vadd.f32 %v2272, %v2370
        %s2377 = sadd.s32 %s1730, 8
        %s2378 = sld [smem:[#allocation2 + %s2377]]
        %v2379 = vstv %s2378
        %v2380 = vmul.f32 %v2379, %v237
        %v2381 = vmul.f32 %v2379, %v238
        %v2382 = vmul.f32 %v2379, 0.0
        %v2386 = vrot.slane %v2380, 2
        %v2387 = vrot.slane %v2381, 2
        %v2388 = vsel %vm699, %v2386, %v2387
        %v2389 = vrot.slane %v2382, 2
        %v2390 = vsel %vm699, %v2387, %v2389
        %2391 = vrot.lane.b32.xlu0 %v2386, 126
        %v2392 = vpop.permute.xlu0 %2391
        %2393 = vrot.lane.b32.xlu0 %v2388, 126
        %v2394 = vpop.permute.xlu0 %2393
        %2395 = vrot.lane.b32.xlu0 %v2390, 126
        %v2396 = vpop.permute.xlu0 %2395
        %v2400 = vadd.f32 %v2296, %v2392
        %v2401 = vadd.f32 %v2297, %v2394
        %v2402 = vadd.f32 %v2298, %v2396
        %s2403 = sadd.s32 %s1740, 8
        %s2404 = sld [smem:[#allocation2 + %s2403]]
        %v2405 = vstv %s2404
        %v2406 = vmul.f32 %v2405, %v237
        %v2407 = vmul.f32 %v2405, %v238
        %v2408 = vmul.f32 %v2405, 0.0
        %v2412 = vrot.slane %v2406, 2
        %v2413 = vrot.slane %v2407, 2
        %v2414 = vsel %vm699, %v2412, %v2413
        %v2415 = vrot.slane %v2408, 2
        %v2416 = vsel %vm699, %v2413, %v2415
        %2417 = vrot.lane.b32.xlu0 %v2412, 126
        %v2418 = vpop.permute.xlu0 %2417
        %2419 = vrot.lane.b32.xlu0 %v2414, 126
        %v2420 = vpop.permute.xlu0 %2419
        %2421 = vrot.lane.b32.xlu0 %v2416, 126
        %v2422 = vpop.permute.xlu0 %2421
        %v2426 = vadd.f32 %v2322, %v2418
        %v2427 = vadd.f32 %v2323, %v2420
        %v2428 = vadd.f32 %v2324, %v2422
        %s2429 = sadd.s32 %s1750, 8
        %s2430 = sld [smem:[#allocation2 + %s2429]]
        %v2431 = vstv %s2430
        %v2432 = vmul.f32 %v2431, %v237
        %v2433 = vmul.f32 %v2431, %v238
        %v2434 = vmul.f32 %v2431, 0.0
        %v2438 = vrot.slane %v2432, 2
        %v2439 = vrot.slane %v2433, 2
        %v2440 = vsel %vm699, %v2438, %v2439
        %v2441 = vrot.slane %v2434, 2
        %v2442 = vsel %vm699, %v2439, %v2441
        %2443 = vrot.lane.b32.xlu0 %v2438, 126
        %v2444 = vpop.permute.xlu0 %2443
        %2445 = vrot.lane.b32.xlu0 %v2440, 126
        %v2446 = vpop.permute.xlu0 %2445
        %2447 = vrot.lane.b32.xlu0 %v2442, 126
        %v2448 = vpop.permute.xlu0 %2447
        %v2452 = vadd.f32 %v2348, %v2444
        %v2453 = vadd.f32 %v2349, %v2446
        %v2454 = vadd.f32 %v2350, %v2448
        %s2455 = sadd.s32 %s979, 3
        %s2456 = smul.u32 %s2455, 9
        %s2457 = sld [smem:[#allocation2 + %s2456]]
        %v2458 = vstv %s2457
        %v2459 = vmul.f32 %v2458, 0.0
        %v2460 = vmul.f32 %v2458, %v239
        %v2461 = vmul.f32 %v2458, %v240
        %v2462 = vadd.f32 %v2374, %v2459
        %v2463 = vadd.f32 %v2375, %v2460
        %v2464 = vadd.f32 %v2376, %v2461
        %s2465 = sadd.s32 %s990, 3
        %s2466 = smul.u32 %s2465, 9
        %s2467 = sld [smem:[#allocation2 + %s2466]]
        %v2468 = vstv %s2467
        %v2469 = vmul.f32 %v2468, 0.0
        %v2470 = vmul.f32 %v2468, %v239
        %v2471 = vmul.f32 %v2468, %v240
        %v2472 = vadd.f32 %v2400, %v2469
        %v2473 = vadd.f32 %v2401, %v2470
        %v2474 = vadd.f32 %v2402, %v2471
        %s2475 = sadd.s32 %s1001, 3
        %s2476 = smul.u32 %s2475, 9
        %s2477 = sld [smem:[#allocation2 + %s2476]]
        %v2478 = vstv %s2477
        %v2479 = vmul.f32 %v2478, 0.0
        %v2480 = vmul.f32 %v2478, %v239
        %v2481 = vmul.f32 %v2478, %v240
        %v2482 = vadd.f32 %v2426, %v2479
        %v2483 = vadd.f32 %v2427, %v2480
        %v2484 = vadd.f32 %v2428, %v2481
        %s2485 = sadd.s32 %s1012, 3
        %s2486 = smul.u32 %s2485, 9
        %s2487 = sld [smem:[#allocation2 + %s2486]]
        %v2488 = vstv %s2487
        %v2489 = vmul.f32 %v2488, 0.0
        %v2490 = vmul.f32 %v2488, %v239
        %v2491 = vmul.f32 %v2488, %v240
        %v2492 = vadd.f32 %v2452, %v2489
        %v2493 = vadd.f32 %v2453, %v2490
        %v2494 = vadd.f32 %v2454, %v2491
        %s2495 = sadd.s32 %s2456, 1
        %s2496 = sld [smem:[#allocation2 + %s2495]]
        %v2497 = vstv %s2496
        %v2498 = vmul.f32 %v2497, 0.0
        %v2499 = vmul.f32 %v2497, %v239
        %v2500 = vmul.f32 %v2497, %v240
        %2504 = vrot.lane.b32.xlu0 %v2498, 127
        %v2505 = vpop.permute.xlu0 %2504
        %2506 = vrot.lane.b32.xlu0 %v2499, 127
        %v2507 = vpop.permute.xlu0 %2506
        %2508 = vrot.lane.b32.xlu0 %v2500, 127
        %v2509 = vpop.permute.xlu0 %2508
        %v2513 = vadd.f32 %v2462, %v2505
        %v2514 = vadd.f32 %v2463, %v2507
        %v2515 = vadd.f32 %v2464, %v2509
        %s2516 = sadd.s32 %s2466, 1
        %s2517 = sld [smem:[#allocation2 + %s2516]]
        %v2518 = vstv %s2517
        %v2519 = vmul.f32 %v2518, 0.0
        %v2520 = vmul.f32 %v2518, %v239
        %v2521 = vmul.f32 %v2518, %v240
        %2525 = vrot.lane.b32.xlu0 %v2519, 127
        %v2526 = vpop.permute.xlu0 %2525
        %2527 = vrot.lane.b32.xlu0 %v2520, 127
        %v2528 = vpop.permute.xlu0 %2527
        %2529 = vrot.lane.b32.xlu0 %v2521, 127
        %v2530 = vpop.permute.xlu0 %2529
        %v2534 = vadd.f32 %v2472, %v2526
        %v2535 = vadd.f32 %v2473, %v2528
        %v2536 = vadd.f32 %v2474, %v2530
        %s2537 = sadd.s32 %s2476, 1
        %s2538 = sld [smem:[#allocation2 + %s2537]]
        %v2539 = vstv %s2538
        %v2540 = vmul.f32 %v2539, 0.0
        %v2541 = vmul.f32 %v2539, %v239
        %v2542 = vmul.f32 %v2539, %v240
        %2546 = vrot.lane.b32.xlu0 %v2540, 127
        %v2547 = vpop.permute.xlu0 %2546
        %2548 = vrot.lane.b32.xlu0 %v2541, 127
        %v2549 = vpop.permute.xlu0 %2548
        %2550 = vrot.lane.b32.xlu0 %v2542, 127
        %v2551 = vpop.permute.xlu0 %2550
        %v2555 = vadd.f32 %v2482, %v2547
        %v2556 = vadd.f32 %v2483, %v2549
        %v2557 = vadd.f32 %v2484, %v2551
        %s2558 = sadd.s32 %s2486, 1
        %s2559 = sld [smem:[#allocation2 + %s2558]]
        %v2560 = vstv %s2559
        %v2561 = vmul.f32 %v2560, 0.0
        %v2562 = vmul.f32 %v2560, %v239
        %v2563 = vmul.f32 %v2560, %v240
        %2567 = vrot.lane.b32.xlu0 %v2561, 127
        %v2568 = vpop.permute.xlu0 %2567
        %2569 = vrot.lane.b32.xlu0 %v2562, 127
        %v2570 = vpop.permute.xlu0 %2569
        %2571 = vrot.lane.b32.xlu0 %v2563, 127
        %v2572 = vpop.permute.xlu0 %2571
        %v2576 = vadd.f32 %v2492, %v2568
        %v2577 = vadd.f32 %v2493, %v2570
        %v2578 = vadd.f32 %v2494, %v2572
        %s2579 = sadd.s32 %s2456, 2
        %s2580 = sld [smem:[#allocation2 + %s2579]]
        %v2581 = vstv %s2580
        %v2582 = vmul.f32 %v2581, 0.0
        %v2583 = vmul.f32 %v2581, %v239
        %v2584 = vmul.f32 %v2581, %v240
        %2588 = vrot.lane.b32.xlu0 %v2582, 126
        %v2589 = vpop.permute.xlu0 %2588
        %2590 = vrot.lane.b32.xlu0 %v2583, 126
        %v2591 = vpop.permute.xlu0 %2590
        %2592 = vrot.lane.b32.xlu0 %v2584, 126
        %v2593 = vpop.permute.xlu0 %2592
        %v2597 = vadd.f32 %v2513, %v2589
        %v2598 = vadd.f32 %v2514, %v2591
        %v2599 = vadd.f32 %v2515, %v2593
        %s2600 = sadd.s32 %s2466, 2
        %s2601 = sld [smem:[#allocation2 + %s2600]]
        %v2602 = vstv %s2601
        %v2603 = vmul.f32 %v2602, 0.0
        %v2604 = vmul.f32 %v2602, %v239
        %v2605 = vmul.f32 %v2602, %v240
        %2609 = vrot.lane.b32.xlu0 %v2603, 126
        %v2610 = vpop.permute.xlu0 %2609
        %2611 = vrot.lane.b32.xlu0 %v2604, 126
        %v2612 = vpop.permute.xlu0 %2611
        %2613 = vrot.lane.b32.xlu0 %v2605, 126
        %v2614 = vpop.permute.xlu0 %2613
        %v2618 = vadd.f32 %v2534, %v2610
        %v2619 = vadd.f32 %v2535, %v2612
        %v2620 = vadd.f32 %v2536, %v2614
        %s2621 = sadd.s32 %s2476, 2
        %s2622 = sld [smem:[#allocation2 + %s2621]]
        %v2623 = vstv %s2622
        %v2624 = vmul.f32 %v2623, 0.0
        %v2625 = vmul.f32 %v2623, %v239
        %v2626 = vmul.f32 %v2623, %v240
        %2630 = vrot.lane.b32.xlu0 %v2624, 126
        %v2631 = vpop.permute.xlu0 %2630
        %2632 = vrot.lane.b32.xlu0 %v2625, 126
        %v2633 = vpop.permute.xlu0 %2632
        %2634 = vrot.lane.b32.xlu0 %v2626, 126
        %v2635 = vpop.permute.xlu0 %2634
        %v2639 = vadd.f32 %v2555, %v2631
        %v2640 = vadd.f32 %v2556, %v2633
        %v2641 = vadd.f32 %v2557, %v2635
        %s2642 = sadd.s32 %s2486, 2
        %s2643 = sld [smem:[#allocation2 + %s2642]]
        %v2644 = vstv %s2643
        %v2645 = vmul.f32 %v2644, 0.0
        %v2646 = vmul.f32 %v2644, %v239
        %v2647 = vmul.f32 %v2644, %v240
        %2651 = vrot.lane.b32.xlu0 %v2645, 126
        %v2652 = vpop.permute.xlu0 %2651
        %2653 = vrot.lane.b32.xlu0 %v2646, 126
        %v2654 = vpop.permute.xlu0 %2653
        %2655 = vrot.lane.b32.xlu0 %v2647, 126
        %v2656 = vpop.permute.xlu0 %2655
        %v2660 = vadd.f32 %v2576, %v2652
        %v2661 = vadd.f32 %v2577, %v2654
        %v2662 = vadd.f32 %v2578, %v2656
        %s2663 = sadd.s32 %s2456, 3
        %s2664 = sld [smem:[#allocation2 + %s2663]]
        %v2665 = vstv %s2664
        %v2666 = vmul.f32 %v2665, %v239
        %v2667 = vmul.f32 %v2665, %v240
        %v2670 = vrot.slane %v2666, 1
        %v2671 = vrot.slane %v2667, 1
        %v2672 = vsel %vm456, %v2670, %v2671
        %v2676 = vadd.f32 %v2597, %v2670
        %v2677 = vadd.f32 %v2598, %v2672
        %v2678 = vadd.f32 %v2599, %v2671
        %s2679 = sadd.s32 %s2466, 3
        %s2680 = sld [smem:[#allocation2 + %s2679]]
        %v2681 = vstv %s2680
        %v2682 = vmul.f32 %v2681, %v239
        %v2683 = vmul.f32 %v2681, %v240
        %v2686 = vrot.slane %v2682, 1
        %v2687 = vrot.slane %v2683, 1
        %v2688 = vsel %vm456, %v2686, %v2687
        %v2692 = vadd.f32 %v2618, %v2686
        %v2693 = vadd.f32 %v2619, %v2688
        %v2694 = vadd.f32 %v2620, %v2687
        %s2695 = sadd.s32 %s2476, 3
        %s2696 = sld [smem:[#allocation2 + %s2695]]
        %v2697 = vstv %s2696
        %v2698 = vmul.f32 %v2697, %v239
        %v2699 = vmul.f32 %v2697, %v240
        %v2702 = vrot.slane %v2698, 1
        %v2703 = vrot.slane %v2699, 1
        %v2704 = vsel %vm456, %v2702, %v2703
        %v2708 = vadd.f32 %v2639, %v2702
        %v2709 = vadd.f32 %v2640, %v2704
        %v2710 = vadd.f32 %v2641, %v2703
        %s2711 = sadd.s32 %s2486, 3
        %s2712 = sld [smem:[#allocation2 + %s2711]]
        %v2713 = vstv %s2712
        %v2714 = vmul.f32 %v2713, %v239
        %v2715 = vmul.f32 %v2713, %v240
        %v2718 = vrot.slane %v2714, 1
        %v2719 = vrot.slane %v2715, 1
        %v2720 = vsel %vm456, %v2718, %v2719
        %v2724 = vadd.f32 %v2660, %v2718
        %v2725 = vadd.f32 %v2661, %v2720
        %v2726 = vadd.f32 %v2662, %v2719
        %s2727 = sadd.s32 %s2456, 4
        %s2728 = sld [smem:[#allocation2 + %s2727]]
        %v2729 = vstv %s2728
        %v2730 = vmul.f32 %v2729, %v239
        %v2731 = vmul.f32 %v2729, %v240
        %v2734 = vrot.slane %v2730, 1
        %v2735 = vrot.slane %v2731, 1
        %v2736 = vsel %vm456, %v2734, %v2735
        %2737 = vrot.lane.b32.xlu0 %v2734, 127
        %v2738 = vpop.permute.xlu0 %2737
        %2739 = vrot.lane.b32.xlu0 %v2736, 127
        %v2740 = vpop.permute.xlu0 %2739
        %2741 = vrot.lane.b32.xlu0 %v2735, 127
        %v2742 = vpop.permute.xlu0 %2741
        %v2746 = vadd.f32 %v2676, %v2738
        %v2747 = vadd.f32 %v2677, %v2740
        %v2748 = vadd.f32 %v2678, %v2742
        %s2749 = sadd.s32 %s2466, 4
        %s2750 = sld [smem:[#allocation2 + %s2749]]
        %v2751 = vstv %s2750
        %v2752 = vmul.f32 %v2751, %v239
        %v2753 = vmul.f32 %v2751, %v240
        %v2756 = vrot.slane %v2752, 1
        %v2757 = vrot.slane %v2753, 1
        %v2758 = vsel %vm456, %v2756, %v2757
        %2759 = vrot.lane.b32.xlu0 %v2756, 127
        %v2760 = vpop.permute.xlu0 %2759
        %2761 = vrot.lane.b32.xlu0 %v2758, 127
        %v2762 = vpop.permute.xlu0 %2761
        %2763 = vrot.lane.b32.xlu0 %v2757, 127
        %v2764 = vpop.permute.xlu0 %2763
        %v2768 = vadd.f32 %v2692, %v2760
        %v2769 = vadd.f32 %v2693, %v2762
        %v2770 = vadd.f32 %v2694, %v2764
        %s2771 = sadd.s32 %s2476, 4
        %s2772 = sld [smem:[#allocation2 + %s2771]]
        %v2773 = vstv %s2772
        %v2774 = vmul.f32 %v2773, %v239
        %v2775 = vmul.f32 %v2773, %v240
        %v2778 = vrot.slane %v2774, 1
        %v2779 = vrot.slane %v2775, 1
        %v2780 = vsel %vm456, %v2778, %v2779
        %2781 = vrot.lane.b32.xlu0 %v2778, 127
        %v2782 = vpop.permute.xlu0 %2781
        %2783 = vrot.lane.b32.xlu0 %v2780, 127
        %v2784 = vpop.permute.xlu0 %2783
        %2785 = vrot.lane.b32.xlu0 %v2779, 127
        %v2786 = vpop.permute.xlu0 %2785
        %v2790 = vadd.f32 %v2708, %v2782
        %v2791 = vadd.f32 %v2709, %v2784
        %v2792 = vadd.f32 %v2710, %v2786
        %s2793 = sadd.s32 %s2486, 4
        %s2794 = sld [smem:[#allocation2 + %s2793]]
        %v2795 = vstv %s2794
        %v2796 = vmul.f32 %v2795, %v239
        %v2797 = vmul.f32 %v2795, %v240
        %v2800 = vrot.slane %v2796, 1
        %v2801 = vrot.slane %v2797, 1
        %v2802 = vsel %vm456, %v2800, %v2801
        %2803 = vrot.lane.b32.xlu0 %v2800, 127
        %v2804 = vpop.permute.xlu0 %2803
        %2805 = vrot.lane.b32.xlu0 %v2802, 127
        %v2806 = vpop.permute.xlu0 %2805
        %2807 = vrot.lane.b32.xlu0 %v2801, 127
        %v2808 = vpop.permute.xlu0 %2807
        %v2812 = vadd.f32 %v2724, %v2804
        %v2813 = vadd.f32 %v2725, %v2806
        %v2814 = vadd.f32 %v2726, %v2808
        %s2815 = sadd.s32 %s2456, 5
        %s2816 = sld [smem:[#allocation2 + %s2815]]
        %v2817 = vstv %s2816
        %v2818 = vmul.f32 %v2817, %v239
        %v2819 = vmul.f32 %v2817, %v240
        %v2822 = vrot.slane %v2818, 1
        %v2823 = vrot.slane %v2819, 1
        %v2824 = vsel %vm456, %v2822, %v2823
        %2825 = vrot.lane.b32.xlu0 %v2822, 126
        %v2826 = vpop.permute.xlu0 %2825
        %2827 = vrot.lane.b32.xlu0 %v2824, 126
        %v2828 = vpop.permute.xlu0 %2827
        %2829 = vrot.lane.b32.xlu0 %v2823, 126
        %v2830 = vpop.permute.xlu0 %2829
        %v2834 = vadd.f32 %v2746, %v2826
        %v2835 = vadd.f32 %v2747, %v2828
        %v2836 = vadd.f32 %v2748, %v2830
        %s2837 = sadd.s32 %s2466, 5
        %s2838 = sld [smem:[#allocation2 + %s2837]]
        %v2839 = vstv %s2838
        %v2840 = vmul.f32 %v2839, %v239
        %v2841 = vmul.f32 %v2839, %v240
        %v2844 = vrot.slane %v2840, 1
        %v2845 = vrot.slane %v2841, 1
        %v2846 = vsel %vm456, %v2844, %v2845
        %2847 = vrot.lane.b32.xlu0 %v2844, 126
        %v2848 = vpop.permute.xlu0 %2847
        %2849 = vrot.lane.b32.xlu0 %v2846, 126
        %v2850 = vpop.permute.xlu0 %2849
        %2851 = vrot.lane.b32.xlu0 %v2845, 126
        %v2852 = vpop.permute.xlu0 %2851
        %v2856 = vadd.f32 %v2768, %v2848
        %v2857 = vadd.f32 %v2769, %v2850
        %v2858 = vadd.f32 %v2770, %v2852
        %s2859 = sadd.s32 %s2476, 5
        %s2860 = sld [smem:[#allocation2 + %s2859]]
        %v2861 = vstv %s2860
        %v2862 = vmul.f32 %v2861, %v239
        %v2863 = vmul.f32 %v2861, %v240
        %v2866 = vrot.slane %v2862, 1
        %v2867 = vrot.slane %v2863, 1
        %v2868 = vsel %vm456, %v2866, %v2867
        %2869 = vrot.lane.b32.xlu0 %v2866, 126
        %v2870 = vpop.permute.xlu0 %2869
        %2871 = vrot.lane.b32.xlu0 %v2868, 126
        %v2872 = vpop.permute.xlu0 %2871
        %2873 = vrot.lane.b32.xlu0 %v2867, 126
        %v2874 = vpop.permute.xlu0 %2873
        %v2878 = vadd.f32 %v2790, %v2870
        %v2879 = vadd.f32 %v2791, %v2872
        %v2880 = vadd.f32 %v2792, %v2874
        %s2881 = sadd.s32 %s2486, 5
        %s2882 = sld [smem:[#allocation2 + %s2881]]
        %v2883 = vstv %s2882
        %v2884 = vmul.f32 %v2883, %v239
        %v2885 = vmul.f32 %v2883, %v240
        %v2888 = vrot.slane %v2884, 1
        %v2889 = vrot.slane %v2885, 1
        %v2890 = vsel %vm456, %v2888, %v2889
        %2891 = vrot.lane.b32.xlu0 %v2888, 126
        %v2892 = vpop.permute.xlu0 %2891
        %2893 = vrot.lane.b32.xlu0 %v2890, 126
        %v2894 = vpop.permute.xlu0 %2893
        %2895 = vrot.lane.b32.xlu0 %v2889, 126
        %v2896 = vpop.permute.xlu0 %2895
        %v2900 = vadd.f32 %v2812, %v2892
        %v2901 = vadd.f32 %v2813, %v2894
        %v2902 = vadd.f32 %v2814, %v2896
        %s2903 = sadd.s32 %s2456, 6
        %s2904 = sld [smem:[#allocation2 + %s2903]]
        %v2905 = vstv %s2904
        %v2906 = vmul.f32 %v2905, %v239
        %v2907 = vmul.f32 %v2905, %v240
        %v2908 = vmul.f32 %v2905, 0.0
        %v2912 = vrot.slane %v2906, 2
        %v2913 = vrot.slane %v2907, 2
        %v2914 = vsel %vm699, %v2912, %v2913
        %v2915 = vrot.slane %v2908, 2
        %v2916 = vsel %vm699, %v2913, %v2915
        %v2920 = vadd.f32 %v2834, %v2912
        %v2921 = vadd.f32 %v2835, %v2914
        %v2922 = vadd.f32 %v2836, %v2916
        %s2923 = sadd.s32 %s2466, 6
        %s2924 = sld [smem:[#allocation2 + %s2923]]
        %v2925 = vstv %s2924
        %v2926 = vmul.f32 %v2925, %v239
        %v2927 = vmul.f32 %v2925, %v240
        %v2928 = vmul.f32 %v2925, 0.0
        %v2932 = vrot.slane %v2926, 2
        %v2933 = vrot.slane %v2927, 2
        %v2934 = vsel %vm699, %v2932, %v2933
        %v2935 = vrot.slane %v2928, 2
        %v2936 = vsel %vm699, %v2933, %v2935
        %v2940 = vadd.f32 %v2856, %v2932
        %v2941 = vadd.f32 %v2857, %v2934
        %v2942 = vadd.f32 %v2858, %v2936
        %s2943 = sadd.s32 %s2476, 6
        %s2944 = sld [smem:[#allocation2 + %s2943]]
        %v2945 = vstv %s2944
        %v2946 = vmul.f32 %v2945, %v239
        %v2947 = vmul.f32 %v2945, %v240
        %v2948 = vmul.f32 %v2945, 0.0
        %v2952 = vrot.slane %v2946, 2
        %v2953 = vrot.slane %v2947, 2
        %v2954 = vsel %vm699, %v2952, %v2953
        %v2955 = vrot.slane %v2948, 2
        %v2956 = vsel %vm699, %v2953, %v2955
        %v2960 = vadd.f32 %v2878, %v2952
        %v2961 = vadd.f32 %v2879, %v2954
        %v2962 = vadd.f32 %v2880, %v2956
        %s2963 = sadd.s32 %s2486, 6
        %s2964 = sld [smem:[#allocation2 + %s2963]]
        %v2965 = vstv %s2964
        %v2966 = vmul.f32 %v2965, %v239
        %v2967 = vmul.f32 %v2965, %v240
        %v2968 = vmul.f32 %v2965, 0.0
        %v2972 = vrot.slane %v2966, 2
        %v2973 = vrot.slane %v2967, 2
        %v2974 = vsel %vm699, %v2972, %v2973
        %v2975 = vrot.slane %v2968, 2
        %v2976 = vsel %vm699, %v2973, %v2975
        %v2980 = vadd.f32 %v2900, %v2972
        %v2981 = vadd.f32 %v2901, %v2974
        %v2982 = vadd.f32 %v2902, %v2976
        %s2983 = sadd.s32 %s2456, 7
        %s2984 = sld [smem:[#allocation2 + %s2983]]
        %v2985 = vstv %s2984
        %v2986 = vmul.f32 %v2985, %v239
        %v2987 = vmul.f32 %v2985, %v240
        %v2988 = vmul.f32 %v2985, 0.0
        %v2992 = vrot.slane %v2986, 2
        %v2993 = vrot.slane %v2987, 2
        %v2994 = vsel %vm699, %v2992, %v2993
        %v2995 = vrot.slane %v2988, 2
        %v2996 = vsel %vm699, %v2993, %v2995
        %2997 = vrot.lane.b32.xlu0 %v2992, 127
        %v2998 = vpop.permute.xlu0 %2997
        %2999 = vrot.lane.b32.xlu0 %v2994, 127
        %v3000 = vpop.permute.xlu0 %2999
        %3001 = vrot.lane.b32.xlu0 %v2996, 127
        %v3002 = vpop.permute.xlu0 %3001
        %v3006 = vadd.f32 %v2920, %v2998
        %v3007 = vadd.f32 %v2921, %v3000
        %v3008 = vadd.f32 %v2922, %v3002
        %s3009 = sadd.s32 %s2466, 7
        %s3010 = sld [smem:[#allocation2 + %s3009]]
        %v3011 = vstv %s3010
        %v3012 = vmul.f32 %v3011, %v239
        %v3013 = vmul.f32 %v3011, %v240
        %v3014 = vmul.f32 %v3011, 0.0
        %v3018 = vrot.slane %v3012, 2
        %v3019 = vrot.slane %v3013, 2
        %v3020 = vsel %vm699, %v3018, %v3019
        %v3021 = vrot.slane %v3014, 2
        %v3022 = vsel %vm699, %v3019, %v3021
        %3023 = vrot.lane.b32.xlu0 %v3018, 127
        %v3024 = vpop.permute.xlu0 %3023
        %3025 = vrot.lane.b32.xlu0 %v3020, 127
        %v3026 = vpop.permute.xlu0 %3025
        %3027 = vrot.lane.b32.xlu0 %v3022, 127
        %v3028 = vpop.permute.xlu0 %3027
        %v3032 = vadd.f32 %v2940, %v3024
        %v3033 = vadd.f32 %v2941, %v3026
        %v3034 = vadd.f32 %v2942, %v3028
        %s3035 = sadd.s32 %s2476, 7
        %s3036 = sld [smem:[#allocation2 + %s3035]]
        %v3037 = vstv %s3036
        %v3038 = vmul.f32 %v3037, %v239
        %v3039 = vmul.f32 %v3037, %v240
        %v3040 = vmul.f32 %v3037, 0.0
        %v3044 = vrot.slane %v3038, 2
        %v3045 = vrot.slane %v3039, 2
        %v3046 = vsel %vm699, %v3044, %v3045
        %v3047 = vrot.slane %v3040, 2
        %v3048 = vsel %vm699, %v3045, %v3047
        %3049 = vrot.lane.b32.xlu0 %v3044, 127
        %v3050 = vpop.permute.xlu0 %3049
        %3051 = vrot.lane.b32.xlu0 %v3046, 127
        %v3052 = vpop.permute.xlu0 %3051
        %3053 = vrot.lane.b32.xlu0 %v3048, 127
        %v3054 = vpop.permute.xlu0 %3053
        %v3058 = vadd.f32 %v2960, %v3050
        %v3059 = vadd.f32 %v2961, %v3052
        %v3060 = vadd.f32 %v2962, %v3054
        %s3061 = sadd.s32 %s2486, 7
        %s3062 = sld [smem:[#allocation2 + %s3061]]
        %v3063 = vstv %s3062
        %v3064 = vmul.f32 %v3063, %v239
        %v3065 = vmul.f32 %v3063, %v240
        %v3066 = vmul.f32 %v3063, 0.0
        %v3070 = vrot.slane %v3064, 2
        %v3071 = vrot.slane %v3065, 2
        %v3072 = vsel %vm699, %v3070, %v3071
        %v3073 = vrot.slane %v3066, 2
        %v3074 = vsel %vm699, %v3071, %v3073
        %3075 = vrot.lane.b32.xlu0 %v3070, 127
        %v3076 = vpop.permute.xlu0 %3075
        %3077 = vrot.lane.b32.xlu0 %v3072, 127
        %v3078 = vpop.permute.xlu0 %3077
        %3079 = vrot.lane.b32.xlu0 %v3074, 127
        %v3080 = vpop.permute.xlu0 %3079
        %v3084 = vadd.f32 %v2980, %v3076
        %v3085 = vadd.f32 %v2981, %v3078
        %v3086 = vadd.f32 %v2982, %v3080
        %s3087 = sadd.s32 %s2456, 8
        %s3088 = sld [smem:[#allocation2 + %s3087]]
        %v3089 = vstv %s3088
        %v3090 = vmul.f32 %v3089, %v239
        %v3091 = vmul.f32 %v3089, %v240
        %v3092 = vmul.f32 %v3089, 0.0
        %v3096 = vrot.slane %v3090, 2
        %v3097 = vrot.slane %v3091, 2
        %v3098 = vsel %vm699, %v3096, %v3097
        %v3099 = vrot.slane %v3092, 2
        %v3100 = vsel %vm699, %v3097, %v3099
        %3101 = vrot.lane.b32.xlu0 %v3096, 126
        %v3102 = vpop.permute.xlu0 %3101
        %3103 = vrot.lane.b32.xlu0 %v3098, 126
        %v3104 = vpop.permute.xlu0 %3103
        %3105 = vrot.lane.b32.xlu0 %v3100, 126
        %v3106 = vpop.permute.xlu0 %3105
        %v3110 = vadd.f32 %v3006, %v3102
        %v3111 = vadd.f32 %v3007, %v3104
        %v3112 = vadd.f32 %v3008, %v3106
        %s3113 = sadd.s32 %s2466, 8
        %s3114 = sld [smem:[#allocation2 + %s3113]]
        %v3115 = vstv %s3114
        %v3116 = vmul.f32 %v3115, %v239
        %v3117 = vmul.f32 %v3115, %v240
        %v3118 = vmul.f32 %v3115, 0.0
        %v3122 = vrot.slane %v3116, 2
        %v3123 = vrot.slane %v3117, 2
        %v3124 = vsel %vm699, %v3122, %v3123
        %v3125 = vrot.slane %v3118, 2
        %v3126 = vsel %vm699, %v3123, %v3125
        %3127 = vrot.lane.b32.xlu0 %v3122, 126
        %v3128 = vpop.permute.xlu0 %3127
        %3129 = vrot.lane.b32.xlu0 %v3124, 126
        %v3130 = vpop.permute.xlu0 %3129
        %3131 = vrot.lane.b32.xlu0 %v3126, 126
        %v3132 = vpop.permute.xlu0 %3131
        %v3136 = vadd.f32 %v3032, %v3128
        %v3137 = vadd.f32 %v3033, %v3130
        %v3138 = vadd.f32 %v3034, %v3132
        %s3139 = sadd.s32 %s2476, 8
        %s3140 = sld [smem:[#allocation2 + %s3139]]
        %v3141 = vstv %s3140
        %v3142 = vmul.f32 %v3141, %v239
        %v3143 = vmul.f32 %v3141, %v240
        %v3144 = vmul.f32 %v3141, 0.0
        %v3148 = vrot.slane %v3142, 2
        %v3149 = vrot.slane %v3143, 2
        %v3150 = vsel %vm699, %v3148, %v3149
        %v3151 = vrot.slane %v3144, 2
        %v3152 = vsel %vm699, %v3149, %v3151
        %3153 = vrot.lane.b32.xlu0 %v3148, 126
        %v3154 = vpop.permute.xlu0 %3153
        %3155 = vrot.lane.b32.xlu0 %v3150, 126
        %v3156 = vpop.permute.xlu0 %3155
        %3157 = vrot.lane.b32.xlu0 %v3152, 126
        %v3158 = vpop.permute.xlu0 %3157
        %v3162 = vadd.f32 %v3058, %v3154
        %v3163 = vadd.f32 %v3059, %v3156
        %v3164 = vadd.f32 %v3060, %v3158
        %s3165 = sadd.s32 %s2486, 8
        %s3166 = sld [smem:[#allocation2 + %s3165]]
        %v3167 = vstv %s3166
        %v3168 = vmul.f32 %v3167, %v239
        %v3169 = vmul.f32 %v3167, %v240
        %v3170 = vmul.f32 %v3167, 0.0
        %v3174 = vrot.slane %v3168, 2
        %v3175 = vrot.slane %v3169, 2
        %v3176 = vsel %vm699, %v3174, %v3175
        %v3177 = vrot.slane %v3170, 2
        %v3178 = vsel %vm699, %v3175, %v3177
        %3179 = vrot.lane.b32.xlu0 %v3174, 126
        %v3180 = vpop.permute.xlu0 %3179
        %3181 = vrot.lane.b32.xlu0 %v3176, 126
        %v3182 = vpop.permute.xlu0 %3181
        %3183 = vrot.lane.b32.xlu0 %v3178, 126
        %v3184 = vpop.permute.xlu0 %3183
        %v3188 = vadd.f32 %v3084, %v3180
        %v3189 = vadd.f32 %v3085, %v3182
        %v3190 = vadd.f32 %v3086, %v3184
        %vm3191 = vcmask 130055
        %3192 = vst.msk [vmem:[%s181 - $0x7] sm:$0x80] %vm3191, %v3110
        %vm3193 = vcmask 130048
        %3194 = vst.msk [vmem:[%s181 + $0x1] sm:$0xff] %vm3193, %v3111
        %vm3195 = vcmask 129024
        %3196 = vst.msk [vmem:[%s181 + $0x9] sm:$0x7f] %vm3195, %v3112
        %s3197 = scalar_lea.vmem %s181, 16
        %3198 = vst.msk [vmem:[%s3197 - $0x7] sm:$0x80] %vm3191, %v3136
        %3199 = vst.msk [vmem:[%s3197 + $0x1] sm:$0xff] %vm3193, %v3137
        %3200 = vst.msk [vmem:[%s3197 + $0x9] sm:$0x7f] %vm3195, %v3138
        %s3201 = scalar_lea.vmem %s181, 32
        %3202 = vst.msk [vmem:[%s3201 - $0x7] sm:$0x80] %vm3191, %v3162
        %3203 = vst.msk [vmem:[%s3201 + $0x1] sm:$0xff] %vm3193, %v3163
        %3204 = vst.msk [vmem:[%s3201 + $0x9] sm:$0x7f] %vm3195, %v3164
        %s3205 = scalar_lea.vmem %s181, 48
        %3206 = vst.msk [vmem:[%s3205 - $0x7] sm:$0x80] %vm3191, %v3188
        %3207 = vst.msk [vmem:[%s3205 + $0x1] sm:$0xff] %vm3193, %v3189
        %3208 = vst.msk [vmem:[%s3205 + $0x9] sm:$0x7f] %vm3195, %v3190
        %s3209 = smul.u32 4, %s19
        %p3210 = scmp.lt.s32.totalorder %s18, 1
        %s3211 = scalar_select %p3210, %s18, 1
        %p3212 = scmp.lt.s32.totalorder %s3209, 7
        %s3213 = scalar_select %p3212, %s3209, 7
        %s3214 = smul.addr %s3213, 2
        %s3215 = smul.addr %s3211, 16
        %s3216 = sadd.s32 %s3214, %s3215
        %s3217 = smul.addr %s3216, 8
        %s3218 = scalar_lea.vmem %s2, %s3217
        // Predicated region
        $region33: #{upsample_forward.1} parent=27 // pred_check
          %p3219 = pneg %p93
        $region34: #{upsample_forward.1} parent=27 // pred_check_branch
          %3221 = sbr.rel (%p3219) target = $region36
        $region35: #{upsample_forward.1} parent=27 // pred_region
          %s3222 = smul.u32 4, %s19
        $region36: #{upsample_forward.1} parent=27 // pred_fallthru
          _
      $region28: #{upsample_forward.1} parent=5 // pred_fallthru
        _
      %p3223 = scmp.le.s32.totalorder 2, %s9
      // Predicated region
      $region37: #{upsample_forward.1} parent=5 // pred_check
        %p3224 = pneg %p3223
      $region38: #{upsample_forward.1} parent=5 // pred_check_branch
        %3226 = sbr.rel (%p3224) target = $region40
      $region39: #{upsample_forward.1} parent=5 // pred_region
        %s3227 = ssub.s32 %s9, 2
        // Predicated region
        $region41: #{upsample_forward.1} parent=39 // pred_check
          %p3228 = pneg %p99
        $region42: #{upsample_forward.1} parent=39 // pred_check_branch
          %3230 = sbr.rel (%p3228) target = $region44
        $region43: #{upsample_forward.1} parent=39 // pred_region
          %s3231 = smul.u32 4, %s21
          %p3232 = scmp.lt.s32.totalorder %s20, 1
          %s3233 = scalar_select %p3232, %s20, 1
          %p3234 = scmp.lt.s32.totalorder %s3231, 7
          %s3235 = scalar_select %p3234, %s3231, 7
          %s3236 = smul.addr %s3235, 2
          %s3237 = smul.addr %s3233, 16
          %s3238 = sadd.s32 %s3236, %s3237
          %s3239 = smul.addr %s3238, 8
          %s3240 = scalar_lea.vmem %s2, %s3239
        $region44: #{upsample_forward.1} parent=39 // pred_fallthru
          _
      $region40: #{upsample_forward.1} parent=5 // pred_fallthru
        _
    $region6: #{upsample_forward.1} parent=1 // loop_footer
      %s13 = sadd.s32 1, %s9
    $region7: #{upsample_forward.1} parent=1 // loop_footer_branch
      %8 = sbr.rel target = $region3
    $region8: #{upsample_forward.1} parent=1 // loop_exit
      _
    %3241 = vsyncpa [#allocation3], 1
    %s3242 = scalar_lea.sflag [#allocation3], 1
    %3243 = vsyncpa %s3242, 1

</llo_original>
